<compile_context>
chip_gen: v6e
topology: v6e:2x2x1
jax: 0.10.0
libtpu: 0.0.40
codegen_flags: <defaults>
</compile_context>

<pallas_src>
import math
from functools import partial

import jax
import jax.numpy as jnp
from jax.experimental import pallas as pl
from jax.experimental.pallas import tpu as pltpu


# ----------------------------- Fused kernel ----------------------------------
def _cross_attention_kernel(q_ref, k_ref, v_ref, bias_ref,
                            wq_ref, wk_ref, wv_ref, wm_ref,
                            bq_ref, bk_ref, bv_ref, bm_ref,
                            o_ref, atted_ref, *,
                            num_heads, compute_dtype, approx_softmax):
    cd = compute_dtype
    Bt, Sq, H = q_ref.shape
    Skv = k_ref.shape[1]
    nh = num_heads
    Dh = H // nh
    scale = jnp.float32(1.0 / math.sqrt(Dh))

    # ---- q/k/v projections over the whole (Bt*S, H) slab: big-M MXU matmuls.
    # Weights arrive pre-transposed and pre-cast to the compute dtype.
    q2 = q_ref[...].reshape(Bt * Sq, H).astype(cd)
    k2 = k_ref[...].reshape(Bt * Skv, H).astype(cd)
    v2 = v_ref[...].reshape(Bt * Skv, H).astype(cd)

    q_p = jnp.dot(q2, wq_ref[...], preferred_element_type=jnp.float32) + bq_ref[...]
    k_p = jnp.dot(k2, wk_ref[...], preferred_element_type=jnp.float32) + bk_ref[...]
    v_p = jnp.dot(v2, wv_ref[...], preferred_element_type=jnp.float32) + bv_ref[...]

    # Fold 1/sqrt(Dh) into q (the smallest tensor), split heads along columns.
    q_h = (q_p * scale).astype(cd).reshape(Bt * Sq, nh, Dh)
    k_h = k_p.astype(cd).reshape(Bt * Skv, nh, Dh)
    v_h = v_p.astype(cd).reshape(Bt * Skv, nh, Dh)

    # ---- attention, head-batched, one batch row at a time.  Bt is kept small
    # by the wrapper so this static unroll stays cheap; each iteration ends in
    # a scratch store which bounds the live range of its intermediates.
    for b in range(Bt):
        # Single head-major relayout per operand (replaces 3*nh lane slices).
        qb = pltpu.einshape("qhd->hqd", q_h[b * Sq:(b + 1) * Sq])     # (nh, Sq,  Dh)
        kb = pltpu.einshape("khd->hkd", k_h[b * Skv:(b + 1) * Skv])   # (nh, Skv, Dh)
        vb = pltpu.einshape("khd->hkd", v_h[b * Skv:(b + 1) * Skv])   # (nh, Skv, Dh)

        # scores = q @ k^T for all heads at once (contract Dh, no k transpose).
        s = jnp.einsum("hqd,hkd->hqk", qb, kb,
                       preferred_element_type=jnp.float32)            # (nh, Sq, Skv)

        # Additive key-padding bias: -1e9 at masked keys.  torch masked_fill
        # replaces the score; adding -1e9 is numerically equivalent for normal
        # score magnitudes.  Softmax math stays in f32 (no bf16 VPU/EUP on v5e).
        s = s + bias_ref[b]                                           # (1, Skv) bcast
        s = s - jnp.max(s, axis=-1, keepdims=True)
        p = jnp.exp(s)
        denom = jnp.sum(p, axis=-1, keepdims=True)
        if approx_softmax:
            p = p * pl.reciprocal(denom, approx=True)                 # EUP slot
        else:
            p = p / denom
        # (dropout = identity in eval mode)

        oh = jnp.einsum("hqk,hkd->hqd", p.astype(cd), vb,
                        preferred_element_type=jnp.float32)           # (nh, Sq, Dh)

        # Back to row-major (Sq, H) and stash into the VMEM 'atted' scratch.
        atted_ref[b * Sq:(b + 1) * Sq, :] = (
            pltpu.einshape("hqd->qhd", oh.astype(cd)).reshape(Sq, H))

    # ---- single full-K (K = H) merge projection over all Bt*Sq rows.
    merged = jnp.dot(atted_ref[...], wm_ref[...],
                     preferred_element_type=jnp.float32) + bm_ref[...]
    o_ref[...] = merged.reshape(Bt, Sq, H).astype(o_ref.dtype)


# ------------------------------ Module wrapper --------------------------------
def _pick_batch_block(B, Sq, Skv, max_rows=512, max_bt=8):
    """Largest divisor of B (<= max_bt) keeping per-step rows modest; prefer
    >= 2 grid steps so both v7x TensorCores stay busy."""
    divs = [d for d in range(1, min(B, max_bt) + 1)
            if B % d == 0 and d * max(Sq, Skv) <= max_rows]
    if not divs:
        return 1
    multi_step = [d for d in divs if B // d >= 2]
    return max(multi_step) if multi_step else max(divs)


def cross_attention_forward(v, k, q, mask, params, num_heads,
                            compute_dtype=jnp.bfloat16,
                            approx_softmax=True,
                            out_dtype=None,
                            batch_block=None,
                            vmem_limit_bytes=None):
    """Matches Cross_Attention.forward (eval mode, dropout = identity)."""
    B, Sq, H = q.shape
    Skv = k.shape[1]
    assert H % num_heads == 0
    if out_dtype is None:
        out_dtype = q.dtype
    cd = compute_dtype

    # torch.nn.Linear stores W as (out, in); pre-transpose AND pre-cast ONCE so
    # the kernel computes y = x @ W_t + b with no in-kernel transpose or cast.
    # (Under jit with frozen params these fold away; ideally store the params
    #  pre-transposed so even the first call skips the relayout.)
    wq_t = params["wq"].T.astype(cd)
    wk_t = params["wk"].T.astype(cd)
    wv_t = params["wv"].T.astype(cd)
    wm_t = params["wm"].T.astype(cd)
    bq = params["bq"].reshape(1, H).astype(jnp.float32)
    bk = params["bk"].reshape(1, H).astype(jnp.float32)
    bv = params["bv"].reshape(1, H).astype(jnp.float32)
    bm = params["bm"].reshape(1, H).astype(jnp.float32)

    # Key-padding mask -> ONE additive bias row per batch element (B, 1, Skv);
    # no (B, nh, Sq, Skv) float mask ever touches HBM.
    if mask is None:
        bias = jnp.zeros((B, 1, Skv), jnp.float32)
    else:
        mask_b = jnp.broadcast_to(mask, (B, 1, 1, Skv)).reshape(B, 1, Skv)
        bias = jnp.where(mask_b, jnp.float32(-1e9), jnp.float32(0.0))

    Bt = batch_block if batch_block is not None else _pick_batch_block(B, Sq, Skv)
    assert B % Bt == 0, "batch_block must divide the batch size"
    grid = (B // Bt,)

    kernel = partial(_cross_attention_kernel,
                     num_heads=num_heads,
                     compute_dtype=cd,
                     approx_softmax=approx_softmax)

    const2d = lambda b: (0, 0)          # weights / biases: resident across grid
    row_map = lambda b: (b, 0, 0)       # batch-blocked activations / output

    cp_kwargs = dict(dimension_semantics=("parallel",))
    if vmem_limit_bytes is not None:
        cp_kwargs["vmem_limit_bytes"] = vmem_limit_bytes

    return pl.pallas_call(
        kernel,
        out_shape=jax.ShapeDtypeStruct((B, Sq, H), out_dtype),
        grid=grid,
        in_specs=[
            pl.BlockSpec((Bt, Sq, H), row_map),     # q
            pl.BlockSpec((Bt, Skv, H), row_map),    # k
            pl.BlockSpec((Bt, Skv, H), row_map),    # v
            pl.BlockSpec((Bt, 1, Skv), row_map),    # additive mask bias
            pl.BlockSpec((H, H), const2d),          # Wq^T (compute dtype)
            pl.BlockSpec((H, H), const2d),          # Wk^T
            pl.BlockSpec((H, H), const2d),          # Wv^T
            pl.BlockSpec((H, H), const2d),          # Wm^T
            pl.BlockSpec((1, H), const2d),          # bq (f32)
            pl.BlockSpec((1, H), const2d),          # bk
            pl.BlockSpec((1, H), const2d),          # bv
            pl.BlockSpec((1, H), const2d),          # bm
        ],
        out_specs=pl.BlockSpec((Bt, Sq, H), row_map),
        scratch_shapes=[pltpu.VMEM((Bt * Sq, H), cd)],   # per-step 'atted'
        compiler_params=pltpu.CompilerParams(**cp_kwargs),
    )(q, k, v, bias, wq_t, wk_t, wv_t, wm_t, bq, bk, bv, bm)


# ------------------------------ Pure-JAX reference ----------------------------
def _reference(v, k, q, mask, params, num_heads):
    B, Sq, H = q.shape
    Skv = k.shape[1]
    Dh = H // num_heads

    def lin(x, w, b):
        return x @ w.T + b

    v_p = lin(v, params["wv"], params["bv"]).reshape(B, Skv, num_heads, Dh).transpose(0, 2, 1, 3)
    k_p = lin(k, params["wk"], params["bk"]).reshape(B, Skv, num_heads, Dh).transpose(0, 2, 1, 3)
    q_p = lin(q, params["wq"], params["bq"]).reshape(B, Sq, num_heads, Dh).transpose(0, 2, 1, 3)

    scores = jnp.einsum("bhqd,bhkd->bhqk", q_p, k_p) / math.sqrt(Dh)
    if mask is not None:
        scores = jnp.where(jnp.broadcast_to(mask, scores.shape), -1e9, scores)
    att = jax.nn.softmax(scores, axis=-1)
    out = jnp.einsum("bhqk,bhkd->bhqd", att, v_p)
    out = out.transpose(0, 2, 1, 3).reshape(B, Sq, H)
    return lin(out, params["wm"], params["bm"])


if __name__ == "__main__":
    B, Sq, Skv = 4, 8, 16
    hidden_size, num_heads = 32, 4

    key = jax.random.PRNGKey(0)
    keys = jax.random.split(key, 12)
    scale = 1.0 / math.sqrt(hidden_size)
    params = {
        "wv": jax.random.uniform(keys[0], (hidden_size, hidden_size), jnp.float32, -scale, scale),
        "bv": jax.random.uniform(keys[1], (hidden_size,), jnp.float32, -scale, scale),
        "wk": jax.random.uniform(keys[2], (hidden_size, hidden_size), jnp.float32, -scale, scale),
        "bk": jax.random.uniform(keys[3], (hidden_size,), jnp.float32, -scale, scale),
        "wq": jax.random.uniform(keys[4], (hidden_size, hidden_size), jnp.float32, -scale, scale),
        "bq": jax.random.uniform(keys[5], (hidden_size,), jnp.float32, -scale, scale),
        "wm": jax.random.uniform(keys[6], (hidden_size, hidden_size), jnp.float32, -scale, scale),
        "bm": jax.random.uniform(keys[7], (hidden_size,), jnp.float32, -scale, scale),
    }

    v_in = jax.random.normal(keys[8], (B, Skv, hidden_size), jnp.float32)
    k_in = jax.random.normal(keys[9], (B, Skv, hidden_size), jnp.float32)
    q_in = jax.random.normal(keys[10], (B, Sq, hidden_size), jnp.float32)
    # Boolean key-padding mask, broadcastable to (B, nh, Sq, Skv).
    # True == masked, as in torch masked_fill.
    mask = jnp.zeros((B, 1, 1, Skv), dtype=bool)
    mask = mask.at[1, 0, 0, -3:].set(True).at[3, 0, 0, -5:].set(True)

    ref = _reference(v_in, k_in, q_in, mask, params, num_heads)

    # Precise path (f32 MXU operands, exact softmax divide, f32 output).
    out_f32 = cross_attention_forward(v_in, k_in, q_in, mask, params, num_heads,
                                      compute_dtype=jnp.float32,
                                      approx_softmax=False)
    out_f32 = jax.block_until_ready(out_f32)
    assert out_f32.shape == (B, Sq, hidden_size)
    assert jnp.allclose(out_f32, ref, atol=2e-4, rtol=2e-4), "f32 path mismatch vs reference"

    # Fast path (bf16 weights/MXU operands, f32 accumulate, EUP approx
    # reciprocal, bf16 output writeback).
    out_bf16 = cross_attention_forward(v_in, k_in, q_in, mask, params, num_heads,
                                       compute_dtype=jnp.bfloat16,
                                       approx_softmax=True,
                                       out_dtype=jnp.bfloat16)
    out_bf16 = jax.block_until_ready(out_bf16)
    assert out_bf16.shape == (B, Sq, hidden_size)
    assert out_bf16.dtype == jnp.bfloat16
    assert jnp.allclose(out_bf16.astype(jnp.float32), ref, atol=5e-2, rtol=5e-2), \
        "bf16 path mismatch vs reference"

    print("KERNEL_OK")
</pallas_src>

<mosaic_0001>
module attributes {stable_mosaic.version = 11 : i64} {
  func.func @_cross_attention_kernel(%arg0: i32, %arg1: memref<2x8x32xf32, #tpu.memory_space<vmem>>, %arg2: memref<2x16x32xf32, #tpu.memory_space<vmem>>, %arg3: memref<2x16x32xf32, #tpu.memory_space<vmem>>, %arg4: memref<2x1x16xf32, #tpu.memory_space<vmem>>, %arg5: memref<32x32xf32, #tpu.memory_space<vmem>>, %arg6: memref<32x32xf32, #tpu.memory_space<vmem>>, %arg7: memref<32x32xf32, #tpu.memory_space<vmem>>, %arg8: memref<32x32xf32, #tpu.memory_space<vmem>>, %arg9: memref<1x32xf32, #tpu.memory_space<vmem>>, %arg10: memref<1x32xf32, #tpu.memory_space<vmem>>, %arg11: memref<1x32xf32, #tpu.memory_space<vmem>>, %arg12: memref<1x32xf32, #tpu.memory_space<vmem>>, %arg13: memref<2x8x32xf32, #tpu.memory_space<vmem>>, %arg14: memref<16x32xf32, #tpu.memory_space<vmem>>) attributes {dimension_semantics = [#tpu.dimension_semantics<parallel>], iteration_bounds = array<i64: 2>, scalar_prefetch = 0 : i64, scratch_operands = 1 : i64, tpu.core_type = #tpu.core_type<tc>, window_params = [{transform_indices = @transform_0, window_bounds = array<i64: 2, 8, 32>}, {transform_indices = @transform_1, window_bounds = array<i64: 2, 16, 32>}, {transform_indices = @transform_2, window_bounds = array<i64: 2, 16, 32>}, {transform_indices = @transform_3, window_bounds = array<i64: 2, 1, 16>}, {pipeline_mode = #tpu.pipeline_mode<synchronous>, transform_indices = @transform_4, window_bounds = array<i64: 32, 32>}, {pipeline_mode = #tpu.pipeline_mode<synchronous>, transform_indices = @transform_5, window_bounds = array<i64: 32, 32>}, {pipeline_mode = #tpu.pipeline_mode<synchronous>, transform_indices = @transform_6, window_bounds = array<i64: 32, 32>}, {pipeline_mode = #tpu.pipeline_mode<synchronous>, transform_indices = @transform_7, window_bounds = array<i64: 32, 32>}, {pipeline_mode = #tpu.pipeline_mode<synchronous>, transform_indices = @transform_8, window_bounds = array<i64: 1, 32>}, {pipeline_mode = #tpu.pipeline_mode<synchronous>, transform_indices = @transform_9, window_bounds = array<i64: 1, 32>}, {pipeline_mode = #tpu.pipeline_mode<synchronous>, transform_indices = @transform_10, window_bounds = array<i64: 1, 32>}, {pipeline_mode = #tpu.pipeline_mode<synchronous>, transform_indices = @transform_11, window_bounds = array<i64: 1, 32>}, {transform_indices = @transform_12, window_bounds = array<i64: 2, 8, 32>}]} {
    %c0 = arith.constant 0 : index
    %c0_0 = arith.constant 0 : index
    %c0_1 = arith.constant 0 : index
    %0 = vector.load %arg1[%c0, %c0_0, %c0_1] : memref<2x8x32xf32, #tpu.memory_space<vmem>>, vector<2x8x32xf32>
    %1 = vector.shape_cast %0 : vector<2x8x32xf32> to vector<16x32xf32>
    %c0_2 = arith.constant 0 : index
    %c0_3 = arith.constant 0 : index
    %c0_4 = arith.constant 0 : index
    %2 = vector.load %arg2[%c0_2, %c0_3, %c0_4] : memref<2x16x32xf32, #tpu.memory_space<vmem>>, vector<2x16x32xf32>
    %3 = vector.shape_cast %2 : vector<2x16x32xf32> to vector<32x32xf32>
    %c0_5 = arith.constant 0 : index
    %c0_6 = arith.constant 0 : index
    %c0_7 = arith.constant 0 : index
    %4 = vector.load %arg3[%c0_5, %c0_6, %c0_7] : memref<2x16x32xf32, #tpu.memory_space<vmem>>, vector<2x16x32xf32>
    %5 = vector.shape_cast %4 : vector<2x16x32xf32> to vector<32x32xf32>
    %c0_8 = arith.constant 0 : index
    %c0_9 = arith.constant 0 : index
    %6 = vector.load %arg5[%c0_8, %c0_9] : memref<32x32xf32, #tpu.memory_space<vmem>>, vector<32x32xf32>
    %cst = arith.constant dense<0.000000e+00> : vector<16x32xf32>
    %7 = tpu.matmul %1, %6, %cst {dimension_numbers = #tpu.dot_dimension_numbers<[1], [0], [0], [1], [0, 0, 1, 1], [], []>} : vector<16x32xf32>, vector<32x32xf32>, vector<16x32xf32> -> vector<16x32xf32>
    %c0_10 = arith.constant 0 : index
    %c0_11 = arith.constant 0 : index
    %8 = vector.load %arg9[%c0_10, %c0_11] : memref<1x32xf32, #tpu.memory_space<vmem>>, vector<1x32xf32>
    %9 = vector.broadcast %8 : vector<1x32xf32> to vector<16x32xf32>
    %10 = arith.addf %7, %9 : vector<16x32xf32>
    %c0_12 = arith.constant 0 : index
    %c0_13 = arith.constant 0 : index
    %11 = vector.load %arg6[%c0_12, %c0_13] : memref<32x32xf32, #tpu.memory_space<vmem>>, vector<32x32xf32>
    %cst_14 = arith.constant dense<0.000000e+00> : vector<32x32xf32>
    %12 = tpu.matmul %3, %11, %cst_14 {dimension_numbers = #tpu.dot_dimension_numbers<[1], [0], [0], [1], [0, 0, 1, 1], [], []>} : vector<32x32xf32>, vector<32x32xf32>, vector<32x32xf32> -> vector<32x32xf32>
    %c0_15 = arith.constant 0 : index
    %c0_16 = arith.constant 0 : index
    %13 = vector.load %arg10[%c0_15, %c0_16] : memref<1x32xf32, #tpu.memory_space<vmem>>, vector<1x32xf32>
    %14 = vector.broadcast %13 : vector<1x32xf32> to vector<32x32xf32>
    %15 = arith.addf %12, %14 : vector<32x32xf32>
    %c0_17 = arith.constant 0 : index
    %c0_18 = arith.constant 0 : index
    %16 = vector.load %arg7[%c0_17, %c0_18] : memref<32x32xf32, #tpu.memory_space<vmem>>, vector<32x32xf32>
    %cst_19 = arith.constant dense<0.000000e+00> : vector<32x32xf32>
    %17 = tpu.matmul %5, %16, %cst_19 {dimension_numbers = #tpu.dot_dimension_numbers<[1], [0], [0], [1], [0, 0, 1, 1], [], []>} : vector<32x32xf32>, vector<32x32xf32>, vector<32x32xf32> -> vector<32x32xf32>
    %c0_20 = arith.constant 0 : index
    %c0_21 = arith.constant 0 : index
    %18 = vector.load %arg11[%c0_20, %c0_21] : memref<1x32xf32, #tpu.memory_space<vmem>>, vector<1x32xf32>
    %19 = vector.broadcast %18 : vector<1x32xf32> to vector<32x32xf32>
    %20 = arith.addf %17, %19 : vector<32x32xf32>
    %cst_22 = arith.constant 0.353553385 : f32
    %21 = vector.broadcast %cst_22 : f32 to vector<16x32xf32>
    %22 = arith.mulf %10, %21 : vector<16x32xf32>
    %23 = vector.shape_cast %22 : vector<16x32xf32> to vector<16x4x8xf32>
    %24 = vector.shape_cast %15 : vector<32x32xf32> to vector<32x4x8xf32>
    %25 = vector.shape_cast %20 : vector<32x32xf32> to vector<32x4x8xf32>
    %26 = vector.extract_strided_slice %23 {offsets = [0, 0, 0], sizes = [8, 4, 8], strides = [1, 1, 1]} : vector<16x4x8xf32> to vector<8x4x8xf32>
    %27 = tpu.transpose %26, [1, 0, 2] : vector<8x4x8xf32> -> vector<4x8x8xf32>
    %28 = vector.extract_strided_slice %24 {offsets = [0, 0, 0], sizes = [16, 4, 8], strides = [1, 1, 1]} : vector<32x4x8xf32> to vector<16x4x8xf32>
    %29 = tpu.transpose %28, [1, 0, 2] : vector<16x4x8xf32> -> vector<4x16x8xf32>
    %30 = vector.extract_strided_slice %25 {offsets = [0, 0, 0], sizes = [16, 4, 8], strides = [1, 1, 1]} : vector<32x4x8xf32> to vector<16x4x8xf32>
    %31 = tpu.transpose %30, [1, 0, 2] : vector<16x4x8xf32> -> vector<4x16x8xf32>
    "tpu.trace_start"() <{level = 10 : i32, message = "hqd,hkd->hqk"}> : () -> ()
    %cst_23 = arith.constant dense<0.000000e+00> : vector<4x8x16xf32>
    %32 = tpu.matmul %27, %29, %cst_23 {dimension_numbers = #tpu.dot_dimension_numbers<[2], [2], [1], [1], [0, 0, 0, 1, 1, 1], [0], [0]>} : vector<4x8x8xf32>, vector<4x16x8xf32>, vector<4x8x16xf32> -> vector<4x8x16xf32>
    "tpu.trace_stop"() : () -> ()
    %c0_24 = arith.constant 0 : index
    %c0_25 = arith.constant 0 : index
    %c0_26 = arith.constant 0 : index
    %33 = vector.load %arg4[%c0_24, %c0_25, %c0_26] : memref<2x1x16xf32, #tpu.memory_space<vmem>>, vector<1x1x16xf32>
    %34 = vector.shape_cast %33 : vector<1x1x16xf32> to vector<1x16xf32>
    %35 = vector.shape_cast %34 : vector<1x16xf32> to vector<1x1x16xf32>
    %36 = vector.broadcast %35 : vector<1x1x16xf32> to vector<4x8x16xf32>
    %37 = arith.addf %32, %36 : vector<4x8x16xf32>
    %cst_27 = arith.constant dense<0xFF800000> : vector<4x8xf32>
    %38 = vector.multi_reduction <maximumf>, %37, %cst_27 [2] : vector<4x8x16xf32> to vector<4x8xf32>
    %39 = vector.shape_cast %38 : vector<4x8xf32> to vector<4x8x1xf32>
    %40 = vector.broadcast %39 : vector<4x8x1xf32> to vector<4x8x16xf32>
    %41 = arith.subf %37, %40 : vector<4x8x16xf32>
    %42 = math.exp %41 : vector<4x8x16xf32>
    %cst_28 = arith.constant dense<0.000000e+00> : vector<4x8xf32>
    %43 = vector.multi_reduction <add>, %42, %cst_28 [2] : vector<4x8x16xf32> to vector<4x8xf32>
    %44 = vector.shape_cast %43 : vector<4x8xf32> to vector<4x8x1xf32>
    %45 = vector.broadcast %44 : vector<4x8x1xf32> to vector<4x8x16xf32>
    %46 = arith.divf %42, %45 : vector<4x8x16xf32>
    "tpu.trace_start"() <{level = 10 : i32, message = "hqk,hkd->hqd"}> : () -> ()
    %cst_29 = arith.constant dense<0.000000e+00> : vector<4x8x8xf32>
    %47 = tpu.matmul %46, %31, %cst_29 {dimension_numbers = #tpu.dot_dimension_numbers<[2], [1], [1], [2], [0, 0, 0, 1, 1, 2], [0], [0]>} : vector<4x8x16xf32>, vector<4x16x8xf32>, vector<4x8x8xf32> -> vector<4x8x8xf32>
    "tpu.trace_stop"() : () -> ()
    %48 = tpu.transpose %47, [1, 0, 2] : vector<4x8x8xf32> -> vector<8x4x8xf32>
    %49 = vector.shape_cast %48 : vector<8x4x8xf32> to vector<8x32xf32>
    %c0_30 = arith.constant 0 : index
    %c0_31 = arith.constant 0 : index
    %50 = vector.load %arg14[%c0_30, %c0_31] : memref<16x32xf32, #tpu.memory_space<vmem>>, vector<8x32xf32>
    tpu.vector_store %arg14[%c0_30, %c0_31], %49 {strides = array<i32>} : memref<16x32xf32, #tpu.memory_space<vmem>>, vector<8x32xf32>,
    %51 = vector.extract_strided_slice %23 {offsets = [8, 0, 0], sizes = [8, 4, 8], strides = [1, 1, 1]} : vector<16x4x8xf32> to vector<8x4x8xf32>
    %52 = tpu.transpose %51, [1, 0, 2] : vector<8x4x8xf32> -> vector<4x8x8xf32>
    %53 = vector.extract_strided_slice %24 {offsets = [16, 0, 0], sizes = [16, 4, 8], strides = [1, 1, 1]} : vector<32x4x8xf32> to vector<16x4x8xf32>
    %54 = tpu.transpose %53, [1, 0, 2] : vector<16x4x8xf32> -> vector<4x16x8xf32>
    %55 = vector.extract_strided_slice %25 {offsets = [16, 0, 0], sizes = [16, 4, 8], strides = [1, 1, 1]} : vector<32x4x8xf32> to vector<16x4x8xf32>
    %56 = tpu.transpose %55, [1, 0, 2] : vector<16x4x8xf32> -> vector<4x16x8xf32>
    "tpu.trace_start"() <{level = 10 : i32, message = "hqd,hkd->hqk"}> : () -> ()
    %cst_32 = arith.constant dense<0.000000e+00> : vector<4x8x16xf32>
    %57 = tpu.matmul %52, %54, %cst_32 {dimension_numbers = #tpu.dot_dimension_numbers<[2], [2], [1], [1], [0, 0, 0, 1, 1, 1], [0], [0]>} : vector<4x8x8xf32>, vector<4x16x8xf32>, vector<4x8x16xf32> -> vector<4x8x16xf32>
    "tpu.trace_stop"() : () -> ()
    %c1 = arith.constant 1 : index
    %c0_33 = arith.constant 0 : index
    %c0_34 = arith.constant 0 : index
    %58 = vector.load %arg4[%c1, %c0_33, %c0_34] : memref<2x1x16xf32, #tpu.memory_space<vmem>>, vector<1x1x16xf32>
    %59 = vector.shape_cast %58 : vector<1x1x16xf32> to vector<1x16xf32>
    %60 = vector.shape_cast %59 : vector<1x16xf32> to vector<1x1x16xf32>
    %61 = vector.broadcast %60 : vector<1x1x16xf32> to vector<4x8x16xf32>
    %62 = arith.addf %57, %61 : vector<4x8x16xf32>
    %cst_35 = arith.constant dense<0xFF800000> : vector<4x8xf32>
    %63 = vector.multi_reduction <maximumf>, %62, %cst_35 [2] : vector<4x8x16xf32> to vector<4x8xf32>
    %64 = vector.shape_cast %63 : vector<4x8xf32> to vector<4x8x1xf32>
    %65 = vector.broadcast %64 : vector<4x8x1xf32> to vector<4x8x16xf32>
    %66 = arith.subf %62, %65 : vector<4x8x16xf32>
    %67 = math.exp %66 : vector<4x8x16xf32>
    %cst_36 = arith.constant dense<0.000000e+00> : vector<4x8xf32>
    %68 = vector.multi_reduction <add>, %67, %cst_36 [2] : vector<4x8x16xf32> to vector<4x8xf32>
    %69 = vector.shape_cast %68 : vector<4x8xf32> to vector<4x8x1xf32>
    %70 = vector.broadcast %69 : vector<4x8x1xf32> to vector<4x8x16xf32>
    %71 = arith.divf %67, %70 : vector<4x8x16xf32>
    "tpu.trace_start"() <{level = 10 : i32, message = "hqk,hkd->hqd"}> : () -> ()
    %cst_37 = arith.constant dense<0.000000e+00> : vector<4x8x8xf32>
    %72 = tpu.matmul %71, %56, %cst_37 {dimension_numbers = #tpu.dot_dimension_numbers<[2], [1], [1], [2], [0, 0, 0, 1, 1, 2], [0], [0]>} : vector<4x8x16xf32>, vector<4x16x8xf32>, vector<4x8x8xf32> -> vector<4x8x8xf32>
    "tpu.trace_stop"() : () -> ()
    %73 = tpu.transpose %72, [1, 0, 2] : vector<4x8x8xf32> -> vector<8x4x8xf32>
    %74 = vector.shape_cast %73 : vector<8x4x8xf32> to vector<8x32xf32>
    %c8 = arith.constant 8 : index
    %c0_38 = arith.constant 0 : index
    %75 = vector.load %arg14[%c8, %c0_38] : memref<16x32xf32, #tpu.memory_space<vmem>>, vector<8x32xf32>
    tpu.vector_store %arg14[%c8, %c0_38], %74 {strides = array<i32>} : memref<16x32xf32, #tpu.memory_space<vmem>>, vector<8x32xf32>,
    %c0_39 = arith.constant 0 : index
    %c0_40 = arith.constant 0 : index
    %76 = vector.load %arg14[%c0_39, %c0_40] : memref<16x32xf32, #tpu.memory_space<vmem>>, vector<16x32xf32>
    %c0_41 = arith.constant 0 : index
    %c0_42 = arith.constant 0 : index
    %77 = vector.load %arg8[%c0_41, %c0_42] : memref<32x32xf32, #tpu.memory_space<vmem>>, vector<32x32xf32>
    %cst_43 = arith.constant dense<0.000000e+00> : vector<16x32xf32>
    %78 = tpu.matmul %76, %77, %cst_43 {dimension_numbers = #tpu.dot_dimension_numbers<[1], [0], [0], [1], [0, 0, 1, 1], [], []>} : vector<16x32xf32>, vector<32x32xf32>, vector<16x32xf32> -> vector<16x32xf32>
    %c0_44 = arith.constant 0 : index
    %c0_45 = arith.constant 0 : index
    %79 = vector.load %arg12[%c0_44, %c0_45] : memref<1x32xf32, #tpu.memory_space<vmem>>, vector<1x32xf32>
    %80 = vector.broadcast %79 : vector<1x32xf32> to vector<16x32xf32>
    %81 = arith.addf %78, %80 : vector<16x32xf32>
    %82 = vector.shape_cast %81 : vector<16x32xf32> to vector<2x8x32xf32>
    %c0_46 = arith.constant 0 : index
    %c0_47 = arith.constant 0 : index
    %c0_48 = arith.constant 0 : index
    %83 = vector.load %arg13[%c0_46, %c0_47, %c0_48] : memref<2x8x32xf32, #tpu.memory_space<vmem>>, vector<2x8x32xf32>
    tpu.vector_store %arg13[%c0_46, %c0_47, %c0_48], %82 {strides = array<i32>} : memref<2x8x32xf32, #tpu.memory_space<vmem>>, vector<2x8x32xf32>,
    return
  }
  func.func @transform_0(%arg0: i32) -> (i32, i32, i32) {
    %c0_i32 = arith.constant 0 : i32
    %c0_i32_0 = arith.constant 0 : i32
    %c0_i32_1 = arith.constant 0 : i32
    return %arg0, %c0_i32, %c0_i32_0 : i32, i32, i32
  }
  func.func @transform_1(%arg0: i32) -> (i32, i32, i32) {
    %c0_i32 = arith.constant 0 : i32
    %c0_i32_0 = arith.constant 0 : i32
    %c0_i32_1 = arith.constant 0 : i32
    return %arg0, %c0_i32, %c0_i32_0 : i32, i32, i32
  }
  func.func @transform_2(%arg0: i32) -> (i32, i32, i32) {
    %c0_i32 = arith.constant 0 : i32
    %c0_i32_0 = arith.constant 0 : i32
    %c0_i32_1 = arith.constant 0 : i32
    return %arg0, %c0_i32, %c0_i32_0 : i32, i32, i32
  }
  func.func @transform_3(%arg0: i32) -> (i32, i32, i32) {
    %c0_i32 = arith.constant 0 : i32
    %c0_i32_0 = arith.constant 0 : i32
    %c0_i32_1 = arith.constant 0 : i32
    return %arg0, %c0_i32, %c0_i32_0 : i32, i32, i32
  }
  func.func @transform_4(%arg0: i32) -> (i32, i32) {
    %c0_i32 = arith.constant 0 : i32
    %c0_i32_0 = arith.constant 0 : i32
    %c0_i32_1 = arith.constant 0 : i32
    return %c0_i32, %c0_i32_0 : i32, i32
  }
  func.func @transform_5(%arg0: i32) -> (i32, i32) {
    %c0_i32 = arith.constant 0 : i32
    %c0_i32_0 = arith.constant 0 : i32
    %c0_i32_1 = arith.constant 0 : i32
    return %c0_i32, %c0_i32_0 : i32, i32
  }
  func.func @transform_6(%arg0: i32) -> (i32, i32) {
    %c0_i32 = arith.constant 0 : i32
    %c0_i32_0 = arith.constant 0 : i32
    %c0_i32_1 = arith.constant 0 : i32
    return %c0_i32, %c0_i32_0 : i32, i32
  }
  func.func @transform_7(%arg0: i32) -> (i32, i32) {
    %c0_i32 = arith.constant 0 : i32
    %c0_i32_0 = arith.constant 0 : i32
    %c0_i32_1 = arith.constant 0 : i32
    return %c0_i32, %c0_i32_0 : i32, i32
  }
  func.func @transform_8(%arg0: i32) -> (i32, i32) {
    %c0_i32 = arith.constant 0 : i32
    %c0_i32_0 = arith.constant 0 : i32
    %c0_i32_1 = arith.constant 0 : i32
    return %c0_i32, %c0_i32_0 : i32, i32
  }
  func.func @transform_9(%arg0: i32) -> (i32, i32) {
    %c0_i32 = arith.constant 0 : i32
    %c0_i32_0 = arith.constant 0 : i32
    %c0_i32_1 = arith.constant 0 : i32
    return %c0_i32, %c0_i32_0 : i32, i32
  }
  func.func @transform_10(%arg0: i32) -> (i32, i32) {
    %c0_i32 = arith.constant 0 : i32
    %c0_i32_0 = arith.constant 0 : i32
    %c0_i32_1 = arith.constant 0 : i32
    return %c0_i32, %c0_i32_0 : i32, i32
  }
  func.func @transform_11(%arg0: i32) -> (i32, i32) {
    %c0_i32 = arith.constant 0 : i32
    %c0_i32_0 = arith.constant 0 : i32
    %c0_i32_1 = arith.constant 0 : i32
    return %c0_i32, %c0_i32_0 : i32, i32
  }
  func.func @transform_12(%arg0: i32) -> (i32, i32, i32) {
    %c0_i32 = arith.constant 0 : i32
    %c0_i32_0 = arith.constant 0 : i32
    %c0_i32_1 = arith.constant 0 : i32
    return %arg0, %c0_i32, %c0_i32_0 : i32, i32, i32
  }
}

</mosaic_0001>

<llo_original>
// kernel: tpu_custom_call.1
$region0: #{tpu_custom_call.1}
  #allocation0 [shape = 'u32[]', space=smem, size = 0x4, offset = 0x4, fixed_abs, tag = 'smem constant byte address 0x4 - core index']
  #allocation1 [shape = 'u32[144,128]{1,0:T(1,128)}', space=vmem, size = 0x12000, scoped, tag = 'internal scratch']
  #allocation2 [shape = 'f32[16,32]{1,0:T(8,128)}', space=vmem, size = 0x2000, scoped, tag = 'scratch operand']
  %s0 = inlined_call_operand.hbm [shape: f32[4,8,32], index: 0, kind: input, shape index: {}]
  %s1 = inlined_call_operand.hbm [shape: f32[4,16,32], index: 1, kind: input, shape index: {}]
  %s2 = inlined_call_operand.hbm [shape: f32[4,16,32], index: 2, kind: input, shape index: {}]
  %s3 = inlined_call_operand.vmem [shape: f32[4,1,16], index: 3, kind: input, shape index: {}]
  %s4 = inlined_call_operand.hbm [shape: f32[32,32], index: 4, kind: input, shape index: {}]
  %s5 = inlined_call_operand.hbm [shape: f32[32,32], index: 5, kind: input, shape index: {}]
  %s6 = inlined_call_operand.hbm [shape: f32[32,32], index: 6, kind: input, shape index: {}]
  %s7 = inlined_call_operand.hbm [shape: f32[32,32], index: 7, kind: input, shape index: {}]
  %s8 = inlined_call_operand.vmem [shape: f32[1,32], index: 8, kind: input, shape index: {}]
  %s9 = inlined_call_operand.vmem [shape: f32[1,32], index: 9, kind: input, shape index: {}]
  %s10 = inlined_call_operand.vmem [shape: f32[1,32], index: 10, kind: input, shape index: {}]
  %s11 = inlined_call_operand.vmem [shape: f32[1,32], index: 11, kind: input, shape index: {}]
  %s12 = inlined_call_operand.hbm [shape: f32[4,8,32], index: 12, kind: output, shape index: {}]
  %s13 = sld [smem:[#allocation0]]
  $region109: #{tpu_custom_call.1} parent=0
    _
  %s15 = ssub.s32 1, %s13
  %s16 = scalar_select 0, %s15, %s13
  $region1: #{tpu_custom_call.1} parent=0
    #allocation3 [shape = 'u8[16384]{0}', space=vmem, size = 0x4000, scoped, tag = 'input window, operand 0']
    #allocation4 [shape = 's32[2]{0}', space=sflag, size = 0x8, scoped, tag = 'scoped memory for tpu_custom_call.1']
    #allocation5 [shape = 's32[2]{0}', space=sflag, size = 0x8, scoped, tag = 'scoped memory for tpu_custom_call.1']
    #allocation6 [shape = 'u8[32768]{0}', space=vmem, size = 0x8000, scoped, tag = 'input window, operand 1']
    #allocation7 [shape = 's32[2]{0}', space=sflag, size = 0x8, scoped, tag = 'scoped memory for tpu_custom_call.1']
    #allocation8 [shape = 'u8[32768]{0}', space=vmem, size = 0x8000, scoped, tag = 'input window, operand 2']
    #allocation9 [shape = 'u8[16384]{0}', space=vmem, size = 0x4000, scoped, tag = 'input window, operand 4, single buffered']
    #allocation10 [shape = 's32[1]{0}', space=sflag, size = 0x4, scoped, tag = 'scoped memory for tpu_custom_call.1']
    #allocation11 [shape = 'u8[16384]{0}', space=vmem, size = 0x4000, scoped, tag = 'input window, operand 5, single buffered']
    #allocation12 [shape = 'u8[16384]{0}', space=vmem, size = 0x4000, scoped, tag = 'input window, operand 6, single buffered']
    #allocation13 [shape = 's32[1]{0}', space=sflag, size = 0x4, scoped, tag = 'scoped memory for tpu_custom_call.1']
    #allocation14 [shape = 'u8[16384]{0}', space=vmem, size = 0x4000, scoped, tag = 'input window, operand 7, single buffered']
    #allocation15 [shape = 'u8[16384]{0}', space=vmem, size = 0x4000, scoped, tag = 'output window, operand 0']
    %17 = vsyncpa [#allocation4], 0
    %s18 = scalar_lea.sflag [#allocation4], 1
    %19 = vsyncpa %s18, 0
    %20 = vsyncpa [#allocation7], 0
    %s21 = scalar_lea.sflag [#allocation7], 1
    %22 = vsyncpa %s21, 0
    %23 = vsyncpa [#allocation10], 0
    %24 = vsyncpa [#allocation13], 0
    %25 = vsyncpa [#allocation5], 0
    %s26 = scalar_lea.sflag [#allocation5], 1
    %27 = vsyncpa %s26, 0
    loop: start=0, step=1, limit=4
    $region2: #{tpu_custom_call.1} parent=1 // loop_pre_header
      _
    $region3: #{tpu_custom_call.1} parent=1 // loop_header
      %s29 = sphi 0, %s33
      %p30 = scmp.ge.s32.totalorder %s29, 4
      %s39 = sphi 0, %s41
      %s42 = sphi 0, %s39
      %s43 = sphi 0, %s42
      %s59 = sphi 0, %s43
      %s65 = sphi 0, %s67
      %s68 = sphi 0, %s65
      %s69 = sphi 0, %s68
      %s85 = sphi 0, %s69
      %s91 = sphi 0, %s93
      %s94 = sphi 0, %s91
      %s95 = sphi 0, %s94
      %s111 = sphi 0, %s95
      %s117 = sphi 0, %s119
      %s120 = sphi 0, %s117
      %s121 = sphi 0, %s120
      %s137 = sphi 0, %s121
      %s141 = sphi 0, %s141
      %s143 = sphi 0, %s141
      %s144 = sphi 0, %s143
      %s158 = sphi 0, %s144
      %s162 = sphi 0, %s162
      %s164 = sphi 0, %s162
      %s165 = sphi 0, %s164
      %s179 = sphi 0, %s165
      %s183 = sphi 0, %s183
      %s185 = sphi 0, %s183
      %s186 = sphi 0, %s185
      %s200 = sphi 0, %s186
      %s204 = sphi 0, %s204
      %s206 = sphi 0, %s204
      %s207 = sphi 0, %s206
      %s221 = sphi 0, %s207
      %s225 = sphi 0, %s225
      %s227 = sphi 0, %s225
      %s228 = sphi 0, %s227
      %s242 = sphi 0, %s228
      %s246 = sphi 0, %s246
      %s248 = sphi 0, %s246
      %s249 = sphi 0, %s248
      %s263 = sphi 0, %s249
      %s267 = sphi 0, %s267
      %s269 = sphi 0, %s267
      %s270 = sphi 0, %s269
      %s284 = sphi 0, %s270
      %s288 = sphi 0, %s288
      %s290 = sphi 0, %s288
      %s291 = sphi 0, %s290
      %s305 = sphi 0, %s291
      %s311 = sphi 0, %s313
      %s314 = sphi 0, %s311
      %s315 = sphi 0, %s314
      %s331 = sphi 0, %s315
    $region4: #{tpu_custom_call.1} parent=1 // loop_header_branch
      %32 = sbr.rel (%p30) target = $region8
    $region5: #{tpu_custom_call.1} parent=1 // loop_body
      %s34 = ssub.s32 %s29, 1
      %s35 = ssub.s32 %s29, 2
      %s36 = sadd.s32 %s29, 1
      %s37 = ssub.s32 %s29, %s36
      %p38 = scmp.eq.s32.totalorder %s37, 0
      %s40 = sadd.s32 %s39, 1
      %s41 = scalar_select %p38, %s39, %s40
      %p44 = pneg %p38
      %p45 = scmp.eq.s32.totalorder %s29, 1
      %p46 = por %p44, %p45
      %p47 = scmp.ne.s32.totalorder %s39, %s42
      %p48 = scmp.eq.s32.totalorder %s29, 0
      %p49 = por %p47, %p48
      %p50 = scmp.ne.s32.totalorder %s39, %s42
      %p51 = scmp.eq.s32.totalorder %s34, 1
      %p52 = por %p50, %p51
      %p53 = scmp.ne.s32.totalorder %s42, %s43
      %p54 = scmp.eq.s32.totalorder %s34, 0
      %p55 = por %p53, %p54
      %p56 = scmp.ne.s32.totalorder %s42, %s43
      %p57 = scmp.eq.s32.totalorder %s35, 1
      %p58 = por %p56, %p57
      %p60 = scmp.ne.s32.totalorder %s43, %s59
      %p61 = scmp.eq.s32.totalorder %s35, 0
      %p62 = por %p60, %p61
      %s63 = ssub.s32 %s29, %s36
      %p64 = scmp.eq.s32.totalorder %s63, 0
      %s66 = sadd.s32 %s65, 1
      %s67 = scalar_select %p64, %s65, %s66
      %p70 = pneg %p64
      %p71 = scmp.eq.s32.totalorder %s29, 1
      %p72 = por %p70, %p71
      %p73 = scmp.ne.s32.totalorder %s65, %s68
      %p74 = scmp.eq.s32.totalorder %s29, 0
      %p75 = por %p73, %p74
      %p76 = scmp.ne.s32.totalorder %s65, %s68
      %p77 = scmp.eq.s32.totalorder %s34, 1
      %p78 = por %p76, %p77
      %p79 = scmp.ne.s32.totalorder %s68, %s69
      %p80 = scmp.eq.s32.totalorder %s34, 0
      %p81 = por %p79, %p80
      %p82 = scmp.ne.s32.totalorder %s68, %s69
      %p83 = scmp.eq.s32.totalorder %s35, 1
      %p84 = por %p82, %p83
      %p86 = scmp.ne.s32.totalorder %s69, %s85
      %p87 = scmp.eq.s32.totalorder %s35, 0
      %p88 = por %p86, %p87
      %s89 = ssub.s32 %s29, %s36
      %p90 = scmp.eq.s32.totalorder %s89, 0
      %s92 = sadd.s32 %s91, 1
      %s93 = scalar_select %p90, %s91, %s92
      %p96 = pneg %p90
      %p97 = scmp.eq.s32.totalorder %s29, 1
      %p98 = por %p96, %p97
      %p99 = scmp.ne.s32.totalorder %s91, %s94
      %p100 = scmp.eq.s32.totalorder %s29, 0
      %p101 = por %p99, %p100
      %p102 = scmp.ne.s32.totalorder %s91, %s94
      %p103 = scmp.eq.s32.totalorder %s34, 1
      %p104 = por %p102, %p103
      %p105 = scmp.ne.s32.totalorder %s94, %s95
      %p106 = scmp.eq.s32.totalorder %s34, 0
      %p107 = por %p105, %p106
      %p108 = scmp.ne.s32.totalorder %s94, %s95
      %p109 = scmp.eq.s32.totalorder %s35, 1
      %p110 = por %p108, %p109
      %p112 = scmp.ne.s32.totalorder %s95, %s111
      %p113 = scmp.eq.s32.totalorder %s35, 0
      %p114 = por %p112, %p113
      %s115 = ssub.s32 %s29, %s36
      %p116 = scmp.eq.s32.totalorder %s115, 0
      %s118 = sadd.s32 %s117, 1
      %s119 = scalar_select %p116, %s117, %s118
      %p122 = pneg %p116
      %p123 = scmp.eq.s32.totalorder %s29, 1
      %p124 = por %p122, %p123
      %p125 = scmp.ne.s32.totalorder %s117, %s120
      %p126 = scmp.eq.s32.totalorder %s29, 0
      %p127 = por %p125, %p126
      %p128 = scmp.ne.s32.totalorder %s117, %s120
      %p129 = scmp.eq.s32.totalorder %s34, 1
      %p130 = por %p128, %p129
      %p131 = scmp.ne.s32.totalorder %s120, %s121
      %p132 = scmp.eq.s32.totalorder %s34, 0
      %p133 = por %p131, %p132
      %p134 = scmp.ne.s32.totalorder %s120, %s121
      %p135 = scmp.eq.s32.totalorder %s35, 1
      %p136 = por %p134, %p135
      %p138 = scmp.ne.s32.totalorder %s121, %s137
      %p139 = scmp.eq.s32.totalorder %s35, 0
      %p140 = por %p138, %p139
      %s142 = sadd.s32 %s141, 1
      %p145 = scmp.eq.s32.totalorder %s29, 1
      %p146 = scmp.ne.s32.totalorder %s141, %s143
      %p147 = scmp.eq.s32.totalorder %s29, 0
      %p148 = por %p146, %p147
      %p149 = scmp.ne.s32.totalorder %s141, %s143
      %p150 = scmp.eq.s32.totalorder %s34, 1
      %p151 = por %p149, %p150
      %p152 = scmp.ne.s32.totalorder %s143, %s144
      %p153 = scmp.eq.s32.totalorder %s34, 0
      %p154 = por %p152, %p153
      %p155 = scmp.ne.s32.totalorder %s143, %s144
      %p156 = scmp.eq.s32.totalorder %s35, 1
      %p157 = por %p155, %p156
      %p159 = scmp.ne.s32.totalorder %s144, %s158
      %p160 = scmp.eq.s32.totalorder %s35, 0
      %p161 = por %p159, %p160
      %s163 = sadd.s32 %s162, 1
      %p166 = scmp.eq.s32.totalorder %s29, 1
      %p167 = scmp.ne.s32.totalorder %s162, %s164
      %p168 = scmp.eq.s32.totalorder %s29, 0
      %p169 = por %p167, %p168
      %p170 = scmp.ne.s32.totalorder %s162, %s164
      %p171 = scmp.eq.s32.totalorder %s34, 1
      %p172 = por %p170, %p171
      %p173 = scmp.ne.s32.totalorder %s164, %s165
      %p174 = scmp.eq.s32.totalorder %s34, 0
      %p175 = por %p173, %p174
      %p176 = scmp.ne.s32.totalorder %s164, %s165
      %p177 = scmp.eq.s32.totalorder %s35, 1
      %p178 = por %p176, %p177
      %p180 = scmp.ne.s32.totalorder %s165, %s179
      %p181 = scmp.eq.s32.totalorder %s35, 0
      %p182 = por %p180, %p181
      %s184 = sadd.s32 %s183, 1
      %p187 = scmp.eq.s32.totalorder %s29, 1
      %p188 = scmp.ne.s32.totalorder %s183, %s185
      %p189 = scmp.eq.s32.totalorder %s29, 0
      %p190 = por %p188, %p189
      %p191 = scmp.ne.s32.totalorder %s183, %s185
      %p192 = scmp.eq.s32.totalorder %s34, 1
      %p193 = por %p191, %p192
      %p194 = scmp.ne.s32.totalorder %s185, %s186
      %p195 = scmp.eq.s32.totalorder %s34, 0
      %p196 = por %p194, %p195
      %p197 = scmp.ne.s32.totalorder %s185, %s186
      %p198 = scmp.eq.s32.totalorder %s35, 1
      %p199 = por %p197, %p198
      %p201 = scmp.ne.s32.totalorder %s186, %s200
      %p202 = scmp.eq.s32.totalorder %s35, 0
      %p203 = por %p201, %p202
      %s205 = sadd.s32 %s204, 1
      %p208 = scmp.eq.s32.totalorder %s29, 1
      %p209 = scmp.ne.s32.totalorder %s204, %s206
      %p210 = scmp.eq.s32.totalorder %s29, 0
      %p211 = por %p209, %p210
      %p212 = scmp.ne.s32.totalorder %s204, %s206
      %p213 = scmp.eq.s32.totalorder %s34, 1
      %p214 = por %p212, %p213
      %p215 = scmp.ne.s32.totalorder %s206, %s207
      %p216 = scmp.eq.s32.totalorder %s34, 0
      %p217 = por %p215, %p216
      %p218 = scmp.ne.s32.totalorder %s206, %s207
      %p219 = scmp.eq.s32.totalorder %s35, 1
      %p220 = por %p218, %p219
      %p222 = scmp.ne.s32.totalorder %s207, %s221
      %p223 = scmp.eq.s32.totalorder %s35, 0
      %p224 = por %p222, %p223
      %s226 = sadd.s32 %s225, 1
      %p229 = scmp.eq.s32.totalorder %s29, 1
      %p230 = scmp.ne.s32.totalorder %s225, %s227
      %p231 = scmp.eq.s32.totalorder %s29, 0
      %p232 = por %p230, %p231
      %p233 = scmp.ne.s32.totalorder %s225, %s227
      %p234 = scmp.eq.s32.totalorder %s34, 1
      %p235 = por %p233, %p234
      %p236 = scmp.ne.s32.totalorder %s227, %s228
      %p237 = scmp.eq.s32.totalorder %s34, 0
      %p238 = por %p236, %p237
      %p239 = scmp.ne.s32.totalorder %s227, %s228
      %p240 = scmp.eq.s32.totalorder %s35, 1
      %p241 = por %p239, %p240
      %p243 = scmp.ne.s32.totalorder %s228, %s242
      %p244 = scmp.eq.s32.totalorder %s35, 0
      %p245 = por %p243, %p244
      %s247 = sadd.s32 %s246, 1
      %p250 = scmp.eq.s32.totalorder %s29, 1
      %p251 = scmp.ne.s32.totalorder %s246, %s248
      %p252 = scmp.eq.s32.totalorder %s29, 0
      %p253 = por %p251, %p252
      %p254 = scmp.ne.s32.totalorder %s246, %s248
      %p255 = scmp.eq.s32.totalorder %s34, 1
      %p256 = por %p254, %p255
      %p257 = scmp.ne.s32.totalorder %s248, %s249
      %p258 = scmp.eq.s32.totalorder %s34, 0
      %p259 = por %p257, %p258
      %p260 = scmp.ne.s32.totalorder %s248, %s249
      %p261 = scmp.eq.s32.totalorder %s35, 1
      %p262 = por %p260, %p261
      %p264 = scmp.ne.s32.totalorder %s249, %s263
      %p265 = scmp.eq.s32.totalorder %s35, 0
      %p266 = por %p264, %p265
      %s268 = sadd.s32 %s267, 1
      %p271 = scmp.eq.s32.totalorder %s29, 1
      %p272 = scmp.ne.s32.totalorder %s267, %s269
      %p273 = scmp.eq.s32.totalorder %s29, 0
      %p274 = por %p272, %p273
      %p275 = scmp.ne.s32.totalorder %s267, %s269
      %p276 = scmp.eq.s32.totalorder %s34, 1
      %p277 = por %p275, %p276
      %p278 = scmp.ne.s32.totalorder %s269, %s270
      %p279 = scmp.eq.s32.totalorder %s34, 0
      %p280 = por %p278, %p279
      %p281 = scmp.ne.s32.totalorder %s269, %s270
      %p282 = scmp.eq.s32.totalorder %s35, 1
      %p283 = por %p281, %p282
      %p285 = scmp.ne.s32.totalorder %s270, %s284
      %p286 = scmp.eq.s32.totalorder %s35, 0
      %p287 = por %p285, %p286
      %s289 = sadd.s32 %s288, 1
      %p292 = scmp.eq.s32.totalorder %s29, 1
      %p293 = scmp.ne.s32.totalorder %s288, %s290
      %p294 = scmp.eq.s32.totalorder %s29, 0
      %p295 = por %p293, %p294
      %p296 = scmp.ne.s32.totalorder %s288, %s290
      %p297 = scmp.eq.s32.totalorder %s34, 1
      %p298 = por %p296, %p297
      %p299 = scmp.ne.s32.totalorder %s290, %s291
      %p300 = scmp.eq.s32.totalorder %s34, 0
      %p301 = por %p299, %p300
      %p302 = scmp.ne.s32.totalorder %s290, %s291
      %p303 = scmp.eq.s32.totalorder %s35, 1
      %p304 = por %p302, %p303
      %p306 = scmp.ne.s32.totalorder %s291, %s305
      %p307 = scmp.eq.s32.totalorder %s35, 0
      %p308 = por %p306, %p307
      %s309 = ssub.s32 %s29, %s36
      %p310 = scmp.eq.s32.totalorder %s309, 0
      %s312 = sadd.s32 %s311, 1
      %s313 = scalar_select %p310, %s311, %s312
      %p316 = pneg %p310
      %p317 = scmp.eq.s32.totalorder %s29, 1
      %p318 = por %p316, %p317
      %p319 = scmp.ne.s32.totalorder %s311, %s314
      %p320 = scmp.eq.s32.totalorder %s29, 0
      %p321 = por %p319, %p320
      %p322 = scmp.ne.s32.totalorder %s311, %s314
      %p323 = scmp.eq.s32.totalorder %s34, 1
      %p324 = por %p322, %p323
      %p325 = scmp.ne.s32.totalorder %s314, %s315
      %p326 = scmp.eq.s32.totalorder %s34, 0
      %p327 = por %p325, %p326
      %p328 = scmp.ne.s32.totalorder %s314, %s315
      %p329 = scmp.eq.s32.totalorder %s35, 1
      %p330 = por %p328, %p329
      %p332 = scmp.ne.s32.totalorder %s315, %s331
      %p333 = scmp.eq.s32.totalorder %s35, 0
      %p334 = por %p332, %p333
      %p335 = scmp.le.s32.totalorder 1, %s29
      %p336 = scmp.lt.s32.totalorder %s29, 3
      %p337 = pnand %p335, %p336
      %p338 = pneg %p337
      // Predicated region
      $region9: #{tpu_custom_call.1} parent=5 // pred_check
        _
      $region10: #{tpu_custom_call.1} parent=5 // pred_check_branch
        %340 = sbr.rel (%p337) target = $region12
      $region11: #{tpu_custom_call.1} parent=5 // pred_region
        %s341 = ssub.s32 %s29, 1
        // Predicated region
        $region13: #{tpu_custom_call.1} parent=11 // pred_check
          %p342 = pneg %p154
        $region14: #{tpu_custom_call.1} parent=11 // pred_check_branch
          %344 = sbr.rel (%p342) target = $region16
        $region15: #{tpu_custom_call.1} parent=11 // pred_region
          %s346 = ssub.s32 512, 512
          %347 = vsyncadd [#allocation10], %s346
          %s348 = sshll.u32 [#allocation9], 4
          %s349 = int_to_ptr.vmem [resolvable:$true] %s348
          %354 = dma.hbm_to_vmem [thread:$0]  %s4, 512, %s349, [#allocation10], 128, 128, 8
        $region16: #{tpu_custom_call.1} parent=11 // pred_fallthru
          _
        // Predicated region
        $region17: #{tpu_custom_call.1} parent=11 // pred_check
          %p355 = pneg %p175
        $region18: #{tpu_custom_call.1} parent=11 // pred_check_branch
          %357 = sbr.rel (%p355) target = $region20
        $region19: #{tpu_custom_call.1} parent=11 // pred_region
          %s359 = ssub.s32 512, 512
          %360 = vsyncadd [#allocation10], %s359
          %s361 = sshll.u32 [#allocation11], 4
          %s362 = int_to_ptr.vmem [resolvable:$true] %s361
          %367 = dma.hbm_to_vmem [thread:$0]  %s5, 512, %s362, [#allocation10], 128, 128, 8
        $region20: #{tpu_custom_call.1} parent=11 // pred_fallthru
          _
        // Predicated region
        $region21: #{tpu_custom_call.1} parent=11 // pred_check
          %p368 = pneg %p196
        $region22: #{tpu_custom_call.1} parent=11 // pred_check_branch
          %370 = sbr.rel (%p368) target = $region24
        $region23: #{tpu_custom_call.1} parent=11 // pred_region
          %s372 = ssub.s32 512, 512
          %373 = vsyncadd [#allocation13], %s372
          %s374 = sshll.u32 [#allocation12], 4
          %s375 = int_to_ptr.vmem [resolvable:$true] %s374
          %380 = dma.hbm_to_vmem [thread:$0]  %s6, 512, %s375, [#allocation13], 128, 128, 8
        $region24: #{tpu_custom_call.1} parent=11 // pred_fallthru
          _
        // Predicated region
        $region25: #{tpu_custom_call.1} parent=11 // pred_check
          %p381 = pneg %p217
        $region26: #{tpu_custom_call.1} parent=11 // pred_check_branch
          %383 = sbr.rel (%p381) target = $region28
        $region27: #{tpu_custom_call.1} parent=11 // pred_region
          %s385 = ssub.s32 512, 512
          %386 = vsyncadd [#allocation13], %s385
          %s387 = sshll.u32 [#allocation14], 4
          %s388 = int_to_ptr.vmem [resolvable:$true] %s387
          %393 = dma.hbm_to_vmem [thread:$0]  %s7, 512, %s388, [#allocation13], 128, 128, 8
        $region28: #{tpu_custom_call.1} parent=11 // pred_fallthru
          _
        // Predicated region
        $region29: #{tpu_custom_call.1} parent=11 // pred_check
          %p394 = pneg %p238
        $region30: #{tpu_custom_call.1} parent=11 // pred_check_branch
          %396 = sbr.rel (%p394) target = $region32
        $region31: #{tpu_custom_call.1} parent=11 // pred_region
          _
        $region32: #{tpu_custom_call.1} parent=11 // pred_fallthru
          _
        // Predicated region
        $region33: #{tpu_custom_call.1} parent=11 // pred_check
          %p397 = pneg %p259
        $region34: #{tpu_custom_call.1} parent=11 // pred_check_branch
          %399 = sbr.rel (%p397) target = $region36
        $region35: #{tpu_custom_call.1} parent=11 // pred_region
          _
        $region36: #{tpu_custom_call.1} parent=11 // pred_fallthru
          _
        // Predicated region
        $region37: #{tpu_custom_call.1} parent=11 // pred_check
          %p400 = pneg %p280
        $region38: #{tpu_custom_call.1} parent=11 // pred_check_branch
          %402 = sbr.rel (%p400) target = $region40
        $region39: #{tpu_custom_call.1} parent=11 // pred_region
          _
        $region40: #{tpu_custom_call.1} parent=11 // pred_fallthru
          _
        // Predicated region
        $region41: #{tpu_custom_call.1} parent=11 // pred_check
          %p403 = pneg %p301
        $region42: #{tpu_custom_call.1} parent=11 // pred_check_branch
          %405 = sbr.rel (%p403) target = $region44
        $region43: #{tpu_custom_call.1} parent=11 // pred_region
          _
        $region44: #{tpu_custom_call.1} parent=11 // pred_fallthru
          _
      $region12: #{tpu_custom_call.1} parent=5 // pred_fallthru
        _
      %p406 = scmp.lt.s32.totalorder %s29, 2
      // Predicated region
      $region45: #{tpu_custom_call.1} parent=5 // pred_check
        %p407 = pneg %p406
      $region46: #{tpu_custom_call.1} parent=5 // pred_check_branch
        %409 = sbr.rel (%p407) target = $region48
      $region47: #{tpu_custom_call.1} parent=5 // pred_region
        // Predicated region
        $region49: #{tpu_custom_call.1} parent=47 // pred_check
          %p410 = pneg %p49
        $region50: #{tpu_custom_call.1} parent=47 // pred_check_branch
          %412 = sbr.rel (%p410) target = $region52
        $region51: #{tpu_custom_call.1} parent=47 // pred_region
          %s413 = sand.u32 %s39, 1
          %s414 = scalar_lea.sflag [#allocation4], %s413
          %s415 = sand.u32 %s39, 1
          %s416 = smul.addr %s415, 16
          %s417 = scalar_lea.vmem [#allocation3], %s416
          %s418 = smul.u32 2, %s29
          %s420 = ssub.s32 256, 256
          %421 = vsyncadd %s414, %s420
          %s422 = smul.addr %s418, 128
          %s423 = scalar_lea.hbm %s0, %s422
          %s424 = sshll.u32 %s417, 4
          %s425 = int_to_ptr.vmem [resolvable:$true] %s424
          %430 = dma.hbm_to_vmem [thread:$0]  %s423, 256, %s425, %s414, 128, 128, 8
        $region52: #{tpu_custom_call.1} parent=47 // pred_fallthru
          _
        // Predicated region
        $region53: #{tpu_custom_call.1} parent=47 // pred_check
          %p431 = pneg %p75
        $region54: #{tpu_custom_call.1} parent=47 // pred_check_branch
          %433 = sbr.rel (%p431) target = $region56
        $region55: #{tpu_custom_call.1} parent=47 // pred_region
          %s434 = sand.u32 %s29, 1
          %s435 = scalar_lea.sflag [#allocation7], %s434
          %s436 = sand.u32 %s65, 1
          %s437 = smul.addr %s436, 32
          %s438 = scalar_lea.vmem [#allocation6], %s437
          %s439 = smul.u32 2, %s29
          %s441 = ssub.s32 512, 512
          %442 = vsyncadd %s435, %s441
          %s443 = smul.addr %s439, 2
          %s444 = smul.addr %s443, 128
          %s445 = scalar_lea.hbm %s1, %s444
          %s446 = sshll.u32 %s438, 4
          %s447 = int_to_ptr.vmem [resolvable:$true] %s446
          %452 = dma.hbm_to_vmem [thread:$0]  %s445, 512, %s447, %s435, 128, 128, 8
        $region56: #{tpu_custom_call.1} parent=47 // pred_fallthru
          _
        // Predicated region
        $region57: #{tpu_custom_call.1} parent=47 // pred_check
          %p453 = pneg %p101
        $region58: #{tpu_custom_call.1} parent=47 // pred_check_branch
          %455 = sbr.rel (%p453) target = $region60
        $region59: #{tpu_custom_call.1} parent=47 // pred_region
          %s456 = sand.u32 %s29, 1
          %s457 = scalar_lea.sflag [#allocation7], %s456
          %s458 = sand.u32 %s91, 1
          %s459 = smul.addr %s458, 32
          %s460 = scalar_lea.vmem [#allocation8], %s459
          %s461 = smul.u32 2, %s29
          %s463 = ssub.s32 512, 512
          %464 = vsyncadd %s457, %s463
          %s465 = smul.addr %s461, 2
          %s466 = smul.addr %s465, 128
          %s467 = scalar_lea.hbm %s2, %s466
          %s468 = sshll.u32 %s460, 4
          %s469 = int_to_ptr.vmem [resolvable:$true] %s468
          %474 = dma.hbm_to_vmem [thread:$0]  %s467, 512, %s469, %s457, 128, 128, 8
        $region60: #{tpu_custom_call.1} parent=47 // pred_fallthru
          _
        // Predicated region
        $region61: #{tpu_custom_call.1} parent=47 // pred_check
          %p475 = pneg %p127
        $region62: #{tpu_custom_call.1} parent=47 // pred_check_branch
          %477 = sbr.rel (%p475) target = $region64
        $region63: #{tpu_custom_call.1} parent=47 // pred_region
          %s478 = smul.u32 2, %s29
          %p479 = scmp.lt.s32.totalorder %s478, 3
          %s480 = scalar_select %p479, %s478, 3
          %s481 = scalar_lea.vmem %s3, %s480
          %s482 = smul.u32 2, %s29
        $region64: #{tpu_custom_call.1} parent=47 // pred_fallthru
          _
      $region48: #{tpu_custom_call.1} parent=5 // pred_fallthru
        _
      %p483 = scmp.le.s32.totalorder 1, %s29
      %p484 = scmp.lt.s32.totalorder %s29, 3
      %p485 = pnand %p483, %p484
      %p486 = pneg %p485
      // Predicated region
      $region65: #{tpu_custom_call.1} parent=5 // pred_check
        _
      $region66: #{tpu_custom_call.1} parent=5 // pred_check_branch
        %488 = sbr.rel (%p485) target = $region68
      $region67: #{tpu_custom_call.1} parent=5 // pred_region
        %s489 = ssub.s32 %s29, 1
        %s490 = sand.u32 %s42, 1
        %s491 = scalar_lea.sflag [#allocation4], %s490
        %s492 = sand.u32 %s42, 1
        %s493 = smul.addr %s492, 16
        %s494 = scalar_lea.vmem [#allocation3], %s493
        // Predicated region
        $region69: #{tpu_custom_call.1} parent=67 // pred_check
          %p495 = pneg %p55
        $region70: #{tpu_custom_call.1} parent=67 // pred_check_branch
          %497 = sbr.rel (%p495) target = $region72
        $region71: #{tpu_custom_call.1} parent=67 // pred_region
          %498 = dma.done %s491, 256
        $region72: #{tpu_custom_call.1} parent=67 // pred_fallthru
          _
        %s499 = sand.u32 %s34, 1
        %s500 = scalar_lea.sflag [#allocation7], %s499
        %s501 = sand.u32 %s68, 1
        %s502 = smul.addr %s501, 32
        %s503 = scalar_lea.vmem [#allocation6], %s502
        // Predicated region
        $region73: #{tpu_custom_call.1} parent=67 // pred_check
          %p504 = pneg %p81
        $region74: #{tpu_custom_call.1} parent=67 // pred_check_branch
          %506 = sbr.rel (%p504) target = $region76
        $region75: #{tpu_custom_call.1} parent=67 // pred_region
          %507 = dma.done %s500, 512
        $region76: #{tpu_custom_call.1} parent=67 // pred_fallthru
          _
        %s508 = sand.u32 %s34, 1
        %s509 = scalar_lea.sflag [#allocation7], %s508
        %s510 = sand.u32 %s94, 1
        %s511 = smul.addr %s510, 32
        %s512 = scalar_lea.vmem [#allocation8], %s511
        // Predicated region
        $region77: #{tpu_custom_call.1} parent=67 // pred_check
          %p513 = pneg %p107
        $region78: #{tpu_custom_call.1} parent=67 // pred_check_branch
          %515 = sbr.rel (%p513) target = $region80
        $region79: #{tpu_custom_call.1} parent=67 // pred_region
          %516 = dma.done %s509, 512
        $region80: #{tpu_custom_call.1} parent=67 // pred_fallthru
          _
        // Predicated region
        $region81: #{tpu_custom_call.1} parent=67 // pred_check
          %p517 = pneg %p154
        $region82: #{tpu_custom_call.1} parent=67 // pred_check_branch
          %519 = sbr.rel (%p517) target = $region84
        $region83: #{tpu_custom_call.1} parent=67 // pred_region
          %520 = dma.done [#allocation10], 512
        $region84: #{tpu_custom_call.1} parent=67 // pred_fallthru
          _
        // Predicated region
        $region85: #{tpu_custom_call.1} parent=67 // pred_check
          %p521 = pneg %p175
        $region86: #{tpu_custom_call.1} parent=67 // pred_check_branch
          %523 = sbr.rel (%p521) target = $region88
        $region87: #{tpu_custom_call.1} parent=67 // pred_region
          %524 = dma.done [#allocation10], 512
        $region88: #{tpu_custom_call.1} parent=67 // pred_fallthru
          _
        // Predicated region
        $region89: #{tpu_custom_call.1} parent=67 // pred_check
          %p525 = pneg %p196
        $region90: #{tpu_custom_call.1} parent=67 // pred_check_branch
          %527 = sbr.rel (%p525) target = $region92
        $region91: #{tpu_custom_call.1} parent=67 // pred_region
          %528 = dma.done [#allocation13], 512
        $region92: #{tpu_custom_call.1} parent=67 // pred_fallthru
          _
        // Predicated region
        $region93: #{tpu_custom_call.1} parent=67 // pred_check
          %p529 = pneg %p217
        $region94: #{tpu_custom_call.1} parent=67 // pred_check_branch
          %531 = sbr.rel (%p529) target = $region96
        $region95: #{tpu_custom_call.1} parent=67 // pred_region
          %532 = dma.done [#allocation13], 512
        $region96: #{tpu_custom_call.1} parent=67 // pred_fallthru
          _
        %s533 = sand.u32 %s42, 1
        %s534 = scalar_lea.sflag [#allocation4], %s533
        %s535 = sand.u32 %s42, 1
        %s536 = smul.addr %s535, 16
        %s537 = scalar_lea.vmem [#allocation3], %s536
        %p538 = pneg %p55
        %p539 = pneg %p52
        %s540 = sand.u32 %s34, 1
        %s541 = scalar_lea.sflag [#allocation7], %s540
        %s542 = sand.u32 %s68, 1
        %s543 = smul.addr %s542, 32
        %s544 = scalar_lea.vmem [#allocation6], %s543
        %p545 = pneg %p81
        %p546 = pneg %p78
        %s547 = sand.u32 %s34, 1
        %s548 = scalar_lea.sflag [#allocation7], %s547
        %s549 = sand.u32 %s94, 1
        %s550 = smul.addr %s549, 32
        %s551 = scalar_lea.vmem [#allocation8], %s550
        %p552 = pneg %p107
        %p553 = pneg %p104
        %s554 = smul.u32 2, %s34
        %p555 = scmp.lt.s32.totalorder %s554, 3
        %s556 = scalar_select %p555, %s554, 3
        %s557 = scalar_lea.vmem %s3, %s556
        %p558 = pneg %p133
        %p559 = pneg %p130
        %p560 = pneg %p154
        %p561 = pneg %p151
        %p562 = pneg %p175
        %p563 = pneg %p172
        %p564 = pneg %p196
        %p565 = pneg %p193
        %p566 = pneg %p217
        %p567 = pneg %p214
        %p568 = pneg %p238
        %p569 = pneg %p235
        %p570 = pneg %p259
        %p571 = pneg %p256
        %p572 = pneg %p280
        %p573 = pneg %p277
        %p574 = pneg %p301
        %p575 = pneg %p298
        %p576 = pneg %p327
        %p577 = pneg %p324
        %s578 = sand.u32 %s314, 1
        %s579 = scalar_lea.sflag [#allocation5], %s578
        %s580 = sand.u32 %s314, 1
        %s581 = smul.addr %s580, 16
        %s582 = scalar_lea.vmem [#allocation15], %s581
        %s583 = smul.u32 2, %s34
        %s584 = smul.u32 2, %s34
        %s585 = smul.u32 2, %s34
        %s586 = smul.u32 2, %s34
        %p587 = scmp.lt.s32.totalorder %s586, 3
        %s588 = scalar_select %p587, %s586, 3
        %s589 = scalar_lea.vmem %s3, %s588
        %s590 = smul.u32 2, %s34
        %s591 = smul.u32 2, %s34
        %v592 = vld [vmem:[%s494] sm:$0xff]
        %v593 = vld [vmem:[%s494 + $0x8] sm:$0xff]
        %v594 = vld [vmem:[%s503] sm:$0xff]
        %v595 = vld [vmem:[%s503 + $0x8] sm:$0xff]
        %v596 = vld [vmem:[%s503 + $0x10] sm:$0xff]
        %v597 = vld [vmem:[%s503 + $0x18] sm:$0xff]
        %v598 = vld [vmem:[%s512] sm:$0xff]
        %v599 = vld [vmem:[%s512 + $0x8] sm:$0xff]
        %v600 = vld [vmem:[%s512 + $0x10] sm:$0xff]
        %v601 = vld [vmem:[%s512 + $0x18] sm:$0xff]
        %v602 = vld [vmem:[#allocation9] sm:$0xff]
        %v603 = vld [vmem:[#allocation9 + $0x8] sm:$0xff]
        %v604 = vld [vmem:[#allocation9 + $0x10] sm:$0xff]
        %v605 = vld [vmem:[#allocation9 + $0x18] sm:$0xff]
        %v606 = vld [vmem:[%s8] sm:$0x1]
        %v608 = vlaneseq
        %v609 = vshrl.u32 %v608, 7
        %v610 = vsub.s32 0, %v609
        %v611 = vrot.slane %v606, %v610
        %vm613 = vcmask 261120
        %v615 = vsel %vm613, %v592, 0
        %v618 = vsel %vm613, %v593, 0
        %620 = vmatprep.subr.mxu0 0.0
        %621 = vmatpush1.msra.mxu0 0.0
        %622 = vmatprep.subr.mxu0 0.0
        %623 = vmatpush1.msra.mxu0 0.0
        %624 = vmatprep.subr.mxu0 0.0
        %625 = vmatpush1.msra.mxu0 0.0
        %626 = vmatprep.subr.mxu0 0.0
        %627 = vmatpush1.msra.mxu0 0.0
        %628 = vmatprep.subr.mxu0 0.0
        %629 = vmatpush1.msra.mxu0 0.0
        %630 = vmatprep.subr.mxu0 0.0
        %631 = vmatpush1.msra.mxu0 0.0
        %632 = vmatprep.subr.mxu0 0.0
        %633 = vmatpush1.msra.mxu0 0.0
        %634 = vmatprep.subr.mxu0 0.0
        %635 = vmatpush1.msra.mxu0 0.0
        %636 = vmatprep.subr.mxu0 0.0
        %637 = vmatpush1.msra.mxu0 0.0
        %638 = vmatprep.subr.mxu0 0.0
        %639 = vmatpush1.msra.mxu0 0.0
        %640 = vmatprep.subr.mxu0 0.0
        %641 = vmatpush1.msra.mxu0 0.0
        %642 = vmatprep.subr.mxu0 0.0
        %643 = vmatpush1.msra.mxu0 0.0
        %644 = vmatprep.subr.mxu0 0.0
        %645 = vmatpush1.msra.mxu0 %v605
        %646 = vmatprep.subr.mxu0 0.0
        %647 = vmatpush1.msra.mxu0 %v604
        %648 = vmatprep.subr.mxu0 0.0
        %649 = vmatpush1.msra.mxu0 %v603
        %650 = vmatprep.subr.mxu0 0.0
        %651 = vmatpush1.msra.mxu0 %v602
        %652 = vmatprep.subr.mxu0 0.0
        %653 = vmatpush2.msra.mxu0 0.0
        %654 = vmatprep.subr.mxu0 0.0
        %655 = vmatpush2.msra.mxu0 0.0
        %656 = vmatprep.subr.mxu0 0.0
        %657 = vmatpush2.msra.mxu0 0.0
        %658 = vmatprep.subr.mxu0 0.0
        %659 = vmatpush2.msra.mxu0 0.0
        %660 = vmatprep.subr.mxu0 0.0
        %661 = vmatpush2.msra.mxu0 0.0
        %662 = vmatprep.subr.mxu0 0.0
        %663 = vmatpush2.msra.mxu0 0.0
        %664 = vmatprep.subr.mxu0 0.0
        %665 = vmatpush2.msra.mxu0 0.0
        %666 = vmatprep.subr.mxu0 0.0
        %667 = vmatpush2.msra.mxu0 0.0
        %668 = vmatprep.subr.mxu0 0.0
        %669 = vmatpush2.msra.mxu0 0.0
        %670 = vmatprep.subr.mxu0 0.0
        %671 = vmatpush2.msra.mxu0 0.0
        %672 = vmatprep.subr.mxu0 0.0
        %673 = vmatpush2.msra.mxu0 0.0
        %674 = vmatprep.subr.mxu0 0.0
        %675 = vmatpush2.msra.mxu0 0.0
        %676 = vmatprep.subr.mxu0 0.0
        %677 = vmatpush2.msra.mxu0 0.0
        %678 = vmatprep.subr.mxu0 0.0
        %679 = vmatpush2.msra.mxu0 0.0
        %680 = vmatprep.subr.mxu0 0.0
        %681 = vmatpush2.msra.mxu0 0.0
        %682 = vmatprep.subr.mxu0 0.0
        %683 = vmatpush2.msra.mxu0 0.0
        %684 = vmatprep.mubr.f32.mxu0 0.0
        %685 = vmatmul.mubr.f32.gmra.mxu0 %v615
        %v686 = vpop.f32.mrf.mxu0
        %v687 = vadd.f32 %v611, %v686
        %v688 = vpop.f32.mrf.mxu0
        %689 = vmatprep.mubr.f32.mxu0 0.0
        %690 = vmatmul.mubr.f32.gmra.mxu0 %v618
        %v691 = vpop.f32.mrf.mxu0
        %v692 = vadd.f32 %v611, %v691
        %v693 = vpop.f32.mrf.mxu0
        %694 = vdwg.mxu0
        %v695 = vld [vmem:[#allocation11] sm:$0xff]
        %v696 = vld [vmem:[#allocation11 + $0x8] sm:$0xff]
        %v697 = vld [vmem:[#allocation11 + $0x10] sm:$0xff]
        %v698 = vld [vmem:[#allocation11 + $0x18] sm:$0xff]
        %v699 = vld [vmem:[%s9] sm:$0x1]
        %v701 = vlaneseq
        %v702 = vshrl.u32 %v701, 7
        %v703 = vsub.s32 0, %v702
        %v704 = vrot.slane %v699, %v703
        %v707 = vsel %vm613, %v594, 0
        %v710 = vsel %vm613, %v595, 0
        %v713 = vsel %vm613, %v596, 0
        %v716 = vsel %vm613, %v597, 0
        %718 = vmatprep.subr.mxu0 0.0
        %719 = vmatpush1.msra.mxu0 0.0
        %720 = vmatprep.subr.mxu0 0.0
        %721 = vmatpush1.msra.mxu0 0.0
        %722 = vmatprep.subr.mxu0 0.0
        %723 = vmatpush1.msra.mxu0 0.0
        %724 = vmatprep.subr.mxu0 0.0
        %725 = vmatpush1.msra.mxu0 0.0
        %726 = vmatprep.subr.mxu0 0.0
        %727 = vmatpush1.msra.mxu0 0.0
        %728 = vmatprep.subr.mxu0 0.0
        %729 = vmatpush1.msra.mxu0 0.0
        %730 = vmatprep.subr.mxu0 0.0
        %731 = vmatpush1.msra.mxu0 0.0
        %732 = vmatprep.subr.mxu0 0.0
        %733 = vmatpush1.msra.mxu0 0.0
        %734 = vmatprep.subr.mxu0 0.0
        %735 = vmatpush1.msra.mxu0 0.0
        %736 = vmatprep.subr.mxu0 0.0
        %737 = vmatpush1.msra.mxu0 0.0
        %738 = vmatprep.subr.mxu0 0.0
        %739 = vmatpush1.msra.mxu0 0.0
        %740 = vmatprep.subr.mxu0 0.0
        %741 = vmatpush1.msra.mxu0 0.0
        %742 = vmatprep.subr.mxu0 0.0
        %743 = vmatpush1.msra.mxu0 %v698
        %744 = vmatprep.subr.mxu0 0.0
        %745 = vmatpush1.msra.mxu0 %v697
        %746 = vmatprep.subr.mxu0 0.0
        %747 = vmatpush1.msra.mxu0 %v696
        %748 = vmatprep.subr.mxu0 0.0
        %749 = vmatpush1.msra.mxu0 %v695
        %750 = vmatprep.subr.mxu0 0.0
        %751 = vmatpush2.msra.mxu0 0.0
        %752 = vmatprep.subr.mxu0 0.0
        %753 = vmatpush2.msra.mxu0 0.0
        %754 = vmatprep.subr.mxu0 0.0
        %755 = vmatpush2.msra.mxu0 0.0
        %756 = vmatprep.subr.mxu0 0.0
        %757 = vmatpush2.msra.mxu0 0.0
        %758 = vmatprep.subr.mxu0 0.0
        %759 = vmatpush2.msra.mxu0 0.0
        %760 = vmatprep.subr.mxu0 0.0
        %761 = vmatpush2.msra.mxu0 0.0
        %762 = vmatprep.subr.mxu0 0.0
        %763 = vmatpush2.msra.mxu0 0.0
        %764 = vmatprep.subr.mxu0 0.0
        %765 = vmatpush2.msra.mxu0 0.0
        %766 = vmatprep.subr.mxu0 0.0
        %767 = vmatpush2.msra.mxu0 0.0
        %768 = vmatprep.subr.mxu0 0.0
        %769 = vmatpush2.msra.mxu0 0.0
        %770 = vmatprep.subr.mxu0 0.0
        %771 = vmatpush2.msra.mxu0 0.0
        %772 = vmatprep.subr.mxu0 0.0
        %773 = vmatpush2.msra.mxu0 0.0
        %774 = vmatprep.subr.mxu0 0.0
        %775 = vmatpush2.msra.mxu0 0.0
        %776 = vmatprep.subr.mxu0 0.0
        %777 = vmatpush2.msra.mxu0 0.0
        %778 = vmatprep.subr.mxu0 0.0
        %779 = vmatpush2.msra.mxu0 0.0
        %780 = vmatprep.subr.mxu0 0.0
        %781 = vmatpush2.msra.mxu0 0.0
        %782 = vmatprep.mubr.f32.mxu0 0.0
        %783 = vmatmul.mubr.f32.gmra.mxu0 %v707
        %v784 = vpop.f32.mrf.mxu0
        %v785 = vadd.f32 %v704, %v784
        %v786 = vpop.f32.mrf.mxu0
        %787 = vmatprep.mubr.f32.mxu0 0.0
        %788 = vmatmul.mubr.f32.gmra.mxu0 %v710
        %v789 = vpop.f32.mrf.mxu0
        %v790 = vadd.f32 %v704, %v789
        %v791 = vpop.f32.mrf.mxu0
        %792 = vmatprep.mubr.f32.mxu0 0.0
        %793 = vmatmul.mubr.f32.gmra.mxu0 %v713
        %v794 = vpop.f32.mrf.mxu0
        %v795 = vadd.f32 %v704, %v794
        %v796 = vpop.f32.mrf.mxu0
        %797 = vmatprep.mubr.f32.mxu0 0.0
        %798 = vmatmul.mubr.f32.gmra.mxu0 %v716
        %v799 = vpop.f32.mrf.mxu0
        %v800 = vadd.f32 %v704, %v799
        %v801 = vpop.f32.mrf.mxu0
        %802 = vdwg.mxu0
        %v803 = vld [vmem:[#allocation12] sm:$0xff]
        %v804 = vld [vmem:[#allocation12 + $0x8] sm:$0xff]
        %v805 = vld [vmem:[#allocation12 + $0x10] sm:$0xff]
        %v806 = vld [vmem:[#allocation12 + $0x18] sm:$0xff]
        %v807 = vld [vmem:[%s10] sm:$0x1]
        %v809 = vlaneseq
        %v810 = vshrl.u32 %v809, 7
        %v811 = vsub.s32 0, %v810
        %v812 = vrot.slane %v807, %v811
        %v815 = vsel %vm613, %v598, 0
        %v818 = vsel %vm613, %v599, 0
        %v821 = vsel %vm613, %v600, 0
        %v824 = vsel %vm613, %v601, 0
        %826 = vmatprep.subr.mxu0 0.0
        %827 = vmatpush1.msra.mxu0 0.0
        %828 = vmatprep.subr.mxu0 0.0
        %829 = vmatpush1.msra.mxu0 0.0
        %830 = vmatprep.subr.mxu0 0.0
        %831 = vmatpush1.msra.mxu0 0.0
        %832 = vmatprep.subr.mxu0 0.0
        %833 = vmatpush1.msra.mxu0 0.0
        %834 = vmatprep.subr.mxu0 0.0
        %835 = vmatpush1.msra.mxu0 0.0
        %836 = vmatprep.subr.mxu0 0.0
        %837 = vmatpush1.msra.mxu0 0.0
        %838 = vmatprep.subr.mxu0 0.0
        %839 = vmatpush1.msra.mxu0 0.0
        %840 = vmatprep.subr.mxu0 0.0
        %841 = vmatpush1.msra.mxu0 0.0
        %842 = vmatprep.subr.mxu0 0.0
        %843 = vmatpush1.msra.mxu0 0.0
        %844 = vmatprep.subr.mxu0 0.0
        %845 = vmatpush1.msra.mxu0 0.0
        %846 = vmatprep.subr.mxu0 0.0
        %847 = vmatpush1.msra.mxu0 0.0
        %848 = vmatprep.subr.mxu0 0.0
        %849 = vmatpush1.msra.mxu0 0.0
        %850 = vmatprep.subr.mxu0 0.0
        %851 = vmatpush1.msra.mxu0 %v806
        %852 = vmatprep.subr.mxu0 0.0
        %853 = vmatpush1.msra.mxu0 %v805
        %854 = vmatprep.subr.mxu0 0.0
        %855 = vmatpush1.msra.mxu0 %v804
        %856 = vmatprep.subr.mxu0 0.0
        %857 = vmatpush1.msra.mxu0 %v803
        %858 = vmatprep.subr.mxu0 0.0
        %859 = vmatpush2.msra.mxu0 0.0
        %860 = vmatprep.subr.mxu0 0.0
        %861 = vmatpush2.msra.mxu0 0.0
        %862 = vmatprep.subr.mxu0 0.0
        %863 = vmatpush2.msra.mxu0 0.0
        %864 = vmatprep.subr.mxu0 0.0
        %865 = vmatpush2.msra.mxu0 0.0
        %866 = vmatprep.subr.mxu0 0.0
        %867 = vmatpush2.msra.mxu0 0.0
        %868 = vmatprep.subr.mxu0 0.0
        %869 = vmatpush2.msra.mxu0 0.0
        %870 = vmatprep.subr.mxu0 0.0
        %871 = vmatpush2.msra.mxu0 0.0
        %872 = vmatprep.subr.mxu0 0.0
        %873 = vmatpush2.msra.mxu0 0.0
        %874 = vmatprep.subr.mxu0 0.0
        %875 = vmatpush2.msra.mxu0 0.0
        %876 = vmatprep.subr.mxu0 0.0
        %877 = vmatpush2.msra.mxu0 0.0
        %878 = vmatprep.subr.mxu0 0.0
        %879 = vmatpush2.msra.mxu0 0.0
        %880 = vmatprep.subr.mxu0 0.0
        %881 = vmatpush2.msra.mxu0 0.0
        %882 = vmatprep.subr.mxu0 0.0
        %883 = vmatpush2.msra.mxu0 0.0
        %884 = vmatprep.subr.mxu0 0.0
        %885 = vmatpush2.msra.mxu0 0.0
        %886 = vmatprep.subr.mxu0 0.0
        %887 = vmatpush2.msra.mxu0 0.0
        %888 = vmatprep.subr.mxu0 0.0
        %889 = vmatpush2.msra.mxu0 0.0
        %890 = vmatprep.mubr.f32.mxu0 0.0
        %891 = vmatmul.mubr.f32.gmra.mxu0 %v815
        %v892 = vpop.f32.mrf.mxu0
        %v893 = vadd.f32 %v812, %v892
        %v894 = vpop.f32.mrf.mxu0
        %895 = vmatprep.mubr.f32.mxu0 0.0
        %896 = vmatmul.mubr.f32.gmra.mxu0 %v818
        %v897 = vpop.f32.mrf.mxu0
        %v898 = vadd.f32 %v812, %v897
        %v899 = vpop.f32.mrf.mxu0
        %900 = vmatprep.mubr.f32.mxu0 0.0
        %901 = vmatmul.mubr.f32.gmra.mxu0 %v821
        %v902 = vpop.f32.mrf.mxu0
        %v903 = vadd.f32 %v812, %v902
        %v904 = vpop.f32.mrf.mxu0
        %905 = vmatprep.mubr.f32.mxu0 0.0
        %906 = vmatmul.mubr.f32.gmra.mxu0 %v824
        %v907 = vpop.f32.mrf.mxu0
        %v908 = vadd.f32 %v812, %v907
        %v909 = vpop.f32.mrf.mxu0
        %910 = vdwg.mxu0
        %v911 = vmul.f32 %v687, 0.35355338
        %v912 = vmul.f32 %v692, 0.35355338
        %915 = vrot.lane.b32.xlu0 %v911, 120
        %v916 = vpop.permute.xlu0 %915
        %917 = vrot.lane.b32.xlu0 %v912, 120
        %v918 = vpop.permute.xlu0 %917
        %921 = vrot.lane.b32.xlu0 %v911, 112
        %v922 = vpop.permute.xlu0 %921
        %923 = vrot.lane.b32.xlu0 %v912, 112
        %v924 = vpop.permute.xlu0 %923
        %927 = vrot.lane.b32.xlu0 %v911, 104
        %v928 = vpop.permute.xlu0 %927
        %929 = vrot.lane.b32.xlu0 %v912, 104
        %v930 = vpop.permute.xlu0 %929
        %v933 = vcombine.low %v911, %v922
        %v934 = vcombine.high %v911, %v922
        %v936 = vunpack.c.l.s4 1983009808
        %v937 = vunpack.c.0.s8 %v936
        %v938 = vlaneseq
        %v939 = vshrl.u32 %v938, 7
        %v940 = vsub.s32 %v937, %v939
        %v941 = vrot.slane %v933, %v940
        %v943 = vunpack.c.l.s4 1983009808
        %v944 = vunpack.c.0.s8 %v943
        %v945 = vlaneseq
        %v946 = vshrl.u32 %v945, 7
        %v947 = vsub.s32 %v944, %v946
        %v948 = vrot.slane %v934, %v947
        %v949 = vcombine.low %v916, %v928
        %v950 = vcombine.high %v916, %v928
        %v952 = vunpack.c.l.s4 1983009808
        %v953 = vunpack.c.0.s8 %v952
        %v954 = vlaneseq
        %v955 = vshrl.u32 %v954, 7
        %v956 = vsub.s32 %v953, %v955
        %v957 = vrot.slane %v949, %v956
        %v959 = vunpack.c.l.s4 1983009808
        %v960 = vunpack.c.0.s8 %v959
        %v961 = vlaneseq
        %v962 = vshrl.u32 %v961, 7
        %v963 = vsub.s32 %v960, %v962
        %v964 = vrot.slane %v950, %v963
        %v965 = vcombine.low %v941, %v957
        %v966 = vcombine.high %v941, %v957
        %v968 = vunpack.c.l.s4 1934713408
        %v969 = vunpack.c.0.s8 %v968
        %v970 = vlaneseq
        %v971 = vshrl.u32 %v970, 7
        %v972 = vsub.s32 %v969, %v971
        %v973 = vrot.slane %v965, %v972
        %v975 = vunpack.c.l.s4 1934713408
        %v976 = vunpack.c.0.s8 %v975
        %v977 = vlaneseq
        %v978 = vshrl.u32 %v977, 7
        %v979 = vsub.s32 %v976, %v978
        %v980 = vrot.slane %v966, %v979
        %v981 = vcombine.low %v948, %v964
        %v982 = vcombine.high %v948, %v964
        %v984 = vunpack.c.l.s4 1934713408
        %v985 = vunpack.c.0.s8 %v984
        %v986 = vlaneseq
        %v987 = vshrl.u32 %v986, 7
        %v988 = vsub.s32 %v985, %v987
        %v989 = vrot.slane %v981, %v988
        %v991 = vunpack.c.l.s4 1934713408
        %v992 = vunpack.c.0.s8 %v991
        %v993 = vlaneseq
        %v994 = vshrl.u32 %v993, 7
        %v995 = vsub.s32 %v992, %v994
        %v996 = vrot.slane %v982, %v995
        %v997 = vcombine.high %v973, 0.0
        %v998 = vcombine.high %v980, 0.0
        %v999 = vcombine.high %v989, 0.0
        %v1000 = vcombine.high %v996, 0.0
        %v1001 = vcombine.low %v912, %v924
        %v1002 = vcombine.high %v912, %v924
        %v1004 = vunpack.c.l.s4 1983009808
        %v1005 = vunpack.c.0.s8 %v1004
        %v1006 = vlaneseq
        %v1007 = vshrl.u32 %v1006, 7
        %v1008 = vsub.s32 %v1005, %v1007
        %v1009 = vrot.slane %v1001, %v1008
        %v1011 = vunpack.c.l.s4 1983009808
        %v1012 = vunpack.c.0.s8 %v1011
        %v1013 = vlaneseq
        %v1014 = vshrl.u32 %v1013, 7
        %v1015 = vsub.s32 %v1012, %v1014
        %v1016 = vrot.slane %v1002, %v1015
        %v1017 = vcombine.low %v918, %v930
        %v1018 = vcombine.high %v918, %v930
        %v1020 = vunpack.c.l.s4 1983009808
        %v1021 = vunpack.c.0.s8 %v1020
        %v1022 = vlaneseq
        %v1023 = vshrl.u32 %v1022, 7
        %v1024 = vsub.s32 %v1021, %v1023
        %v1025 = vrot.slane %v1017, %v1024
        %v1027 = vunpack.c.l.s4 1983009808
        %v1028 = vunpack.c.0.s8 %v1027
        %v1029 = vlaneseq
        %v1030 = vshrl.u32 %v1029, 7
        %v1031 = vsub.s32 %v1028, %v1030
        %v1032 = vrot.slane %v1018, %v1031
        %v1033 = vcombine.low %v1009, %v1025
        %v1034 = vcombine.high %v1009, %v1025
        %v1036 = vunpack.c.l.s4 1934713408
        %v1037 = vunpack.c.0.s8 %v1036
        %v1038 = vlaneseq
        %v1039 = vshrl.u32 %v1038, 7
        %v1040 = vsub.s32 %v1037, %v1039
        %v1041 = vrot.slane %v1033, %v1040
        %v1043 = vunpack.c.l.s4 1934713408
        %v1044 = vunpack.c.0.s8 %v1043
        %v1045 = vlaneseq
        %v1046 = vshrl.u32 %v1045, 7
        %v1047 = vsub.s32 %v1044, %v1046
        %v1048 = vrot.slane %v1034, %v1047
        %v1049 = vcombine.low %v1016, %v1032
        %v1050 = vcombine.high %v1016, %v1032
        %v1052 = vunpack.c.l.s4 1934713408
        %v1053 = vunpack.c.0.s8 %v1052
        %v1054 = vlaneseq
        %v1055 = vshrl.u32 %v1054, 7
        %v1056 = vsub.s32 %v1053, %v1055
        %v1057 = vrot.slane %v1049, %v1056
        %v1059 = vunpack.c.l.s4 1934713408
        %v1060 = vunpack.c.0.s8 %v1059
        %v1061 = vlaneseq
        %v1062 = vshrl.u32 %v1061, 7
        %v1063 = vsub.s32 %v1060, %v1062
        %v1064 = vrot.slane %v1050, %v1063
        %v1065 = vcombine.high %v1041, 0.0
        %v1066 = vcombine.high %v1048, 0.0
        %v1067 = vcombine.high %v1057, 0.0
        %v1068 = vcombine.high %v1064, 0.0
        %1073 = vrot.lane.b32.xlu0 %v785, 120
        %v1074 = vpop.permute.xlu0 %1073
        %1075 = vrot.lane.b32.xlu0 %v790, 120
        %v1076 = vpop.permute.xlu0 %1075
        %1077 = vrot.lane.b32.xlu0 %v795, 120
        %v1078 = vpop.permute.xlu0 %1077
        %1079 = vrot.lane.b32.xlu0 %v800, 120
        %v1080 = vpop.permute.xlu0 %1079
        %1085 = vrot.lane.b32.xlu0 %v785, 112
        %v1086 = vpop.permute.xlu0 %1085
        %1087 = vrot.lane.b32.xlu0 %v790, 112
        %v1088 = vpop.permute.xlu0 %1087
        %1089 = vrot.lane.b32.xlu0 %v795, 112
        %v1090 = vpop.permute.xlu0 %1089
        %1091 = vrot.lane.b32.xlu0 %v800, 112
        %v1092 = vpop.permute.xlu0 %1091
        %1097 = vrot.lane.b32.xlu0 %v785, 104
        %v1098 = vpop.permute.xlu0 %1097
        %1099 = vrot.lane.b32.xlu0 %v790, 104
        %v1100 = vpop.permute.xlu0 %1099
        %1101 = vrot.lane.b32.xlu0 %v795, 104
        %v1102 = vpop.permute.xlu0 %1101
        %1103 = vrot.lane.b32.xlu0 %v800, 104
        %v1104 = vpop.permute.xlu0 %1103
        %v1109 = vcombine.low %v785, %v1086
        %v1110 = vcombine.high %v785, %v1086
        %v1112 = vunpack.c.l.s4 1983009808
        %v1113 = vunpack.c.0.s8 %v1112
        %v1114 = vlaneseq
        %v1115 = vshrl.u32 %v1114, 7
        %v1116 = vsub.s32 %v1113, %v1115
        %v1117 = vrot.slane %v1109, %v1116
        %v1119 = vunpack.c.l.s4 1983009808
        %v1120 = vunpack.c.0.s8 %v1119
        %v1121 = vlaneseq
        %v1122 = vshrl.u32 %v1121, 7
        %v1123 = vsub.s32 %v1120, %v1122
        %v1124 = vrot.slane %v1110, %v1123
        %v1125 = vcombine.low %v1074, %v1098
        %v1126 = vcombine.high %v1074, %v1098
        %v1128 = vunpack.c.l.s4 1983009808
        %v1129 = vunpack.c.0.s8 %v1128
        %v1130 = vlaneseq
        %v1131 = vshrl.u32 %v1130, 7
        %v1132 = vsub.s32 %v1129, %v1131
        %v1133 = vrot.slane %v1125, %v1132
        %v1135 = vunpack.c.l.s4 1983009808
        %v1136 = vunpack.c.0.s8 %v1135
        %v1137 = vlaneseq
        %v1138 = vshrl.u32 %v1137, 7
        %v1139 = vsub.s32 %v1136, %v1138
        %v1140 = vrot.slane %v1126, %v1139
        %v1141 = vcombine.low %v1117, %v1133
        %v1142 = vcombine.high %v1117, %v1133
        %v1144 = vunpack.c.l.s4 1934713408
        %v1145 = vunpack.c.0.s8 %v1144
        %v1146 = vlaneseq
        %v1147 = vshrl.u32 %v1146, 7
        %v1148 = vsub.s32 %v1145, %v1147
        %v1149 = vrot.slane %v1141, %v1148
        %v1151 = vunpack.c.l.s4 1934713408
        %v1152 = vunpack.c.0.s8 %v1151
        %v1153 = vlaneseq
        %v1154 = vshrl.u32 %v1153, 7
        %v1155 = vsub.s32 %v1152, %v1154
        %v1156 = vrot.slane %v1142, %v1155
        %v1157 = vcombine.low %v1124, %v1140
        %v1158 = vcombine.high %v1124, %v1140
        %v1160 = vunpack.c.l.s4 1934713408
        %v1161 = vunpack.c.0.s8 %v1160
        %v1162 = vlaneseq
        %v1163 = vshrl.u32 %v1162, 7
        %v1164 = vsub.s32 %v1161, %v1163
        %v1165 = vrot.slane %v1157, %v1164
        %v1167 = vunpack.c.l.s4 1934713408
        %v1168 = vunpack.c.0.s8 %v1167
        %v1169 = vlaneseq
        %v1170 = vshrl.u32 %v1169, 7
        %v1171 = vsub.s32 %v1168, %v1170
        %v1172 = vrot.slane %v1158, %v1171
        %v1173 = vcombine.high %v1149, 0.0
        %v1174 = vcombine.high %v1156, 0.0
        %v1175 = vcombine.high %v1165, 0.0
        %v1176 = vcombine.high %v1172, 0.0
        %v1177 = vcombine.low %v790, %v1088
        %v1178 = vcombine.high %v790, %v1088
        %v1180 = vunpack.c.l.s4 1983009808
        %v1181 = vunpack.c.0.s8 %v1180
        %v1182 = vlaneseq
        %v1183 = vshrl.u32 %v1182, 7
        %v1184 = vsub.s32 %v1181, %v1183
        %v1185 = vrot.slane %v1177, %v1184
        %v1187 = vunpack.c.l.s4 1983009808
        %v1188 = vunpack.c.0.s8 %v1187
        %v1189 = vlaneseq
        %v1190 = vshrl.u32 %v1189, 7
        %v1191 = vsub.s32 %v1188, %v1190
        %v1192 = vrot.slane %v1178, %v1191
        %v1193 = vcombine.low %v1076, %v1100
        %v1194 = vcombine.high %v1076, %v1100
        %v1196 = vunpack.c.l.s4 1983009808
        %v1197 = vunpack.c.0.s8 %v1196
        %v1198 = vlaneseq
        %v1199 = vshrl.u32 %v1198, 7
        %v1200 = vsub.s32 %v1197, %v1199
        %v1201 = vrot.slane %v1193, %v1200
        %v1203 = vunpack.c.l.s4 1983009808
        %v1204 = vunpack.c.0.s8 %v1203
        %v1205 = vlaneseq
        %v1206 = vshrl.u32 %v1205, 7
        %v1207 = vsub.s32 %v1204, %v1206
        %v1208 = vrot.slane %v1194, %v1207
        %v1209 = vcombine.low %v1185, %v1201
        %v1210 = vcombine.high %v1185, %v1201
        %v1212 = vunpack.c.l.s4 1934713408
        %v1213 = vunpack.c.0.s8 %v1212
        %v1214 = vlaneseq
        %v1215 = vshrl.u32 %v1214, 7
        %v1216 = vsub.s32 %v1213, %v1215
        %v1217 = vrot.slane %v1209, %v1216
        %v1219 = vunpack.c.l.s4 1934713408
        %v1220 = vunpack.c.0.s8 %v1219
        %v1221 = vlaneseq
        %v1222 = vshrl.u32 %v1221, 7
        %v1223 = vsub.s32 %v1220, %v1222
        %v1224 = vrot.slane %v1210, %v1223
        %v1225 = vcombine.low %v1192, %v1208
        %v1226 = vcombine.high %v1192, %v1208
        %v1228 = vunpack.c.l.s4 1934713408
        %v1229 = vunpack.c.0.s8 %v1228
        %v1230 = vlaneseq
        %v1231 = vshrl.u32 %v1230, 7
        %v1232 = vsub.s32 %v1229, %v1231
        %v1233 = vrot.slane %v1225, %v1232
        %v1235 = vunpack.c.l.s4 1934713408
        %v1236 = vunpack.c.0.s8 %v1235
        %v1237 = vlaneseq
        %v1238 = vshrl.u32 %v1237, 7
        %v1239 = vsub.s32 %v1236, %v1238
        %v1240 = vrot.slane %v1226, %v1239
        %v1241 = vcombine.high %v1217, 0.0
        %v1242 = vcombine.high %v1224, 0.0
        %v1243 = vcombine.high %v1233, 0.0
        %v1244 = vcombine.high %v1240, 0.0
        %v1245 = vcombine.low %v795, %v1090
        %v1246 = vcombine.high %v795, %v1090
        %v1248 = vunpack.c.l.s4 1983009808
        %v1249 = vunpack.c.0.s8 %v1248
        %v1250 = vlaneseq
        %v1251 = vshrl.u32 %v1250, 7
        %v1252 = vsub.s32 %v1249, %v1251
        %v1253 = vrot.slane %v1245, %v1252
        %v1255 = vunpack.c.l.s4 1983009808
        %v1256 = vunpack.c.0.s8 %v1255
        %v1257 = vlaneseq
        %v1258 = vshrl.u32 %v1257, 7
        %v1259 = vsub.s32 %v1256, %v1258
        %v1260 = vrot.slane %v1246, %v1259
        %v1261 = vcombine.low %v1078, %v1102
        %v1262 = vcombine.high %v1078, %v1102
        %v1264 = vunpack.c.l.s4 1983009808
        %v1265 = vunpack.c.0.s8 %v1264
        %v1266 = vlaneseq
        %v1267 = vshrl.u32 %v1266, 7
        %v1268 = vsub.s32 %v1265, %v1267
        %v1269 = vrot.slane %v1261, %v1268
        %v1271 = vunpack.c.l.s4 1983009808
        %v1272 = vunpack.c.0.s8 %v1271
        %v1273 = vlaneseq
        %v1274 = vshrl.u32 %v1273, 7
        %v1275 = vsub.s32 %v1272, %v1274
        %v1276 = vrot.slane %v1262, %v1275
        %v1277 = vcombine.low %v1253, %v1269
        %v1278 = vcombine.high %v1253, %v1269
        %v1280 = vunpack.c.l.s4 1934713408
        %v1281 = vunpack.c.0.s8 %v1280
        %v1282 = vlaneseq
        %v1283 = vshrl.u32 %v1282, 7
        %v1284 = vsub.s32 %v1281, %v1283
        %v1285 = vrot.slane %v1277, %v1284
        %v1287 = vunpack.c.l.s4 1934713408
        %v1288 = vunpack.c.0.s8 %v1287
        %v1289 = vlaneseq
        %v1290 = vshrl.u32 %v1289, 7
        %v1291 = vsub.s32 %v1288, %v1290
        %v1292 = vrot.slane %v1278, %v1291
        %v1293 = vcombine.low %v1260, %v1276
        %v1294 = vcombine.high %v1260, %v1276
        %v1296 = vunpack.c.l.s4 1934713408
        %v1297 = vunpack.c.0.s8 %v1296
        %v1298 = vlaneseq
        %v1299 = vshrl.u32 %v1298, 7
        %v1300 = vsub.s32 %v1297, %v1299
        %v1301 = vrot.slane %v1293, %v1300
        %v1303 = vunpack.c.l.s4 1934713408
        %v1304 = vunpack.c.0.s8 %v1303
        %v1305 = vlaneseq
        %v1306 = vshrl.u32 %v1305, 7
        %v1307 = vsub.s32 %v1304, %v1306
        %v1308 = vrot.slane %v1294, %v1307
        %v1309 = vcombine.high %v1285, 0.0
        %v1310 = vcombine.high %v1292, 0.0
        %v1311 = vcombine.high %v1301, 0.0
        %v1312 = vcombine.high %v1308, 0.0
        %v1313 = vcombine.low %v800, %v1092
        %v1314 = vcombine.high %v800, %v1092
        %v1316 = vunpack.c.l.s4 1983009808
        %v1317 = vunpack.c.0.s8 %v1316
        %v1318 = vlaneseq
        %v1319 = vshrl.u32 %v1318, 7
        %v1320 = vsub.s32 %v1317, %v1319
        %v1321 = vrot.slane %v1313, %v1320
        %v1323 = vunpack.c.l.s4 1983009808
        %v1324 = vunpack.c.0.s8 %v1323
        %v1325 = vlaneseq
        %v1326 = vshrl.u32 %v1325, 7
        %v1327 = vsub.s32 %v1324, %v1326
        %v1328 = vrot.slane %v1314, %v1327
        %v1329 = vcombine.low %v1080, %v1104
        %v1330 = vcombine.high %v1080, %v1104
        %v1332 = vunpack.c.l.s4 1983009808
        %v1333 = vunpack.c.0.s8 %v1332
        %v1334 = vlaneseq
        %v1335 = vshrl.u32 %v1334, 7
        %v1336 = vsub.s32 %v1333, %v1335
        %v1337 = vrot.slane %v1329, %v1336
        %v1339 = vunpack.c.l.s4 1983009808
        %v1340 = vunpack.c.0.s8 %v1339
        %v1341 = vlaneseq
        %v1342 = vshrl.u32 %v1341, 7
        %v1343 = vsub.s32 %v1340, %v1342
        %v1344 = vrot.slane %v1330, %v1343
        %v1345 = vcombine.low %v1321, %v1337
        %v1346 = vcombine.high %v1321, %v1337
        %v1348 = vunpack.c.l.s4 1934713408
        %v1349 = vunpack.c.0.s8 %v1348
        %v1350 = vlaneseq
        %v1351 = vshrl.u32 %v1350, 7
        %v1352 = vsub.s32 %v1349, %v1351
        %v1353 = vrot.slane %v1345, %v1352
        %v1355 = vunpack.c.l.s4 1934713408
        %v1356 = vunpack.c.0.s8 %v1355
        %v1357 = vlaneseq
        %v1358 = vshrl.u32 %v1357, 7
        %v1359 = vsub.s32 %v1356, %v1358
        %v1360 = vrot.slane %v1346, %v1359
        %v1361 = vcombine.low %v1328, %v1344
        %v1362 = vcombine.high %v1328, %v1344
        %v1364 = vunpack.c.l.s4 1934713408
        %v1365 = vunpack.c.0.s8 %v1364
        %v1366 = vlaneseq
        %v1367 = vshrl.u32 %v1366, 7
        %v1368 = vsub.s32 %v1365, %v1367
        %v1369 = vrot.slane %v1361, %v1368
        %v1371 = vunpack.c.l.s4 1934713408
        %v1372 = vunpack.c.0.s8 %v1371
        %v1373 = vlaneseq
        %v1374 = vshrl.u32 %v1373, 7
        %v1375 = vsub.s32 %v1372, %v1374
        %v1376 = vrot.slane %v1362, %v1375
        %v1377 = vcombine.high %v1353, 0.0
        %v1378 = vcombine.high %v1360, 0.0
        %v1379 = vcombine.high %v1369, 0.0
        %v1380 = vcombine.high %v1376, 0.0
        %1385 = vrot.lane.b32.xlu0 %v893, 120
        %v1386 = vpop.permute.xlu0 %1385
        %1387 = vrot.lane.b32.xlu0 %v898, 120
        %v1388 = vpop.permute.xlu0 %1387
        %1389 = vrot.lane.b32.xlu0 %v903, 120
        %v1390 = vpop.permute.xlu0 %1389
        %1391 = vrot.lane.b32.xlu0 %v908, 120
        %v1392 = vpop.permute.xlu0 %1391
        %1397 = vrot.lane.b32.xlu0 %v893, 112
        %v1398 = vpop.permute.xlu0 %1397
        %1399 = vrot.lane.b32.xlu0 %v898, 112
        %v1400 = vpop.permute.xlu0 %1399
        %1401 = vrot.lane.b32.xlu0 %v903, 112
        %v1402 = vpop.permute.xlu0 %1401
        %1403 = vrot.lane.b32.xlu0 %v908, 112
        %v1404 = vpop.permute.xlu0 %1403
        %1409 = vrot.lane.b32.xlu0 %v893, 104
        %v1410 = vpop.permute.xlu0 %1409
        %1411 = vrot.lane.b32.xlu0 %v898, 104
        %v1412 = vpop.permute.xlu0 %1411
        %1413 = vrot.lane.b32.xlu0 %v903, 104
        %v1414 = vpop.permute.xlu0 %1413
        %1415 = vrot.lane.b32.xlu0 %v908, 104
        %v1416 = vpop.permute.xlu0 %1415
        %v1421 = vcombine.low %v893, %v1398
        %v1422 = vcombine.high %v893, %v1398
        %v1424 = vunpack.c.l.s4 1983009808
        %v1425 = vunpack.c.0.s8 %v1424
        %v1426 = vlaneseq
        %v1427 = vshrl.u32 %v1426, 7
        %v1428 = vsub.s32 %v1425, %v1427
        %v1429 = vrot.slane %v1421, %v1428
        %v1431 = vunpack.c.l.s4 1983009808
        %v1432 = vunpack.c.0.s8 %v1431
        %v1433 = vlaneseq
        %v1434 = vshrl.u32 %v1433, 7
        %v1435 = vsub.s32 %v1432, %v1434
        %v1436 = vrot.slane %v1422, %v1435
        %v1437 = vcombine.low %v1386, %v1410
        %v1438 = vcombine.high %v1386, %v1410
        %v1440 = vunpack.c.l.s4 1983009808
        %v1441 = vunpack.c.0.s8 %v1440
        %v1442 = vlaneseq
        %v1443 = vshrl.u32 %v1442, 7
        %v1444 = vsub.s32 %v1441, %v1443
        %v1445 = vrot.slane %v1437, %v1444
        %v1447 = vunpack.c.l.s4 1983009808
        %v1448 = vunpack.c.0.s8 %v1447
        %v1449 = vlaneseq
        %v1450 = vshrl.u32 %v1449, 7
        %v1451 = vsub.s32 %v1448, %v1450
        %v1452 = vrot.slane %v1438, %v1451
        %v1453 = vcombine.low %v1429, %v1445
        %v1454 = vcombine.high %v1429, %v1445
        %v1456 = vunpack.c.l.s4 1934713408
        %v1457 = vunpack.c.0.s8 %v1456
        %v1458 = vlaneseq
        %v1459 = vshrl.u32 %v1458, 7
        %v1460 = vsub.s32 %v1457, %v1459
        %v1461 = vrot.slane %v1453, %v1460
        %v1463 = vunpack.c.l.s4 1934713408
        %v1464 = vunpack.c.0.s8 %v1463
        %v1465 = vlaneseq
        %v1466 = vshrl.u32 %v1465, 7
        %v1467 = vsub.s32 %v1464, %v1466
        %v1468 = vrot.slane %v1454, %v1467
        %v1469 = vcombine.low %v1436, %v1452
        %v1470 = vcombine.high %v1436, %v1452
        %v1472 = vunpack.c.l.s4 1934713408
        %v1473 = vunpack.c.0.s8 %v1472
        %v1474 = vlaneseq
        %v1475 = vshrl.u32 %v1474, 7
        %v1476 = vsub.s32 %v1473, %v1475
        %v1477 = vrot.slane %v1469, %v1476
        %v1479 = vunpack.c.l.s4 1934713408
        %v1480 = vunpack.c.0.s8 %v1479
        %v1481 = vlaneseq
        %v1482 = vshrl.u32 %v1481, 7
        %v1483 = vsub.s32 %v1480, %v1482
        %v1484 = vrot.slane %v1470, %v1483
        %v1485 = vcombine.high %v1461, 0.0
        %v1486 = vcombine.high %v1468, 0.0
        %v1487 = vcombine.high %v1477, 0.0
        %v1488 = vcombine.high %v1484, 0.0
        %v1489 = vcombine.low %v898, %v1400
        %v1490 = vcombine.high %v898, %v1400
        %v1492 = vunpack.c.l.s4 1983009808
        %v1493 = vunpack.c.0.s8 %v1492
        %v1494 = vlaneseq
        %v1495 = vshrl.u32 %v1494, 7
        %v1496 = vsub.s32 %v1493, %v1495
        %v1497 = vrot.slane %v1489, %v1496
        %v1499 = vunpack.c.l.s4 1983009808
        %v1500 = vunpack.c.0.s8 %v1499
        %v1501 = vlaneseq
        %v1502 = vshrl.u32 %v1501, 7
        %v1503 = vsub.s32 %v1500, %v1502
        %v1504 = vrot.slane %v1490, %v1503
        %v1505 = vcombine.low %v1388, %v1412
        %v1506 = vcombine.high %v1388, %v1412
        %v1508 = vunpack.c.l.s4 1983009808
        %v1509 = vunpack.c.0.s8 %v1508
        %v1510 = vlaneseq
        %v1511 = vshrl.u32 %v1510, 7
        %v1512 = vsub.s32 %v1509, %v1511
        %v1513 = vrot.slane %v1505, %v1512
        %v1515 = vunpack.c.l.s4 1983009808
        %v1516 = vunpack.c.0.s8 %v1515
        %v1517 = vlaneseq
        %v1518 = vshrl.u32 %v1517, 7
        %v1519 = vsub.s32 %v1516, %v1518
        %v1520 = vrot.slane %v1506, %v1519
        %v1521 = vcombine.low %v1497, %v1513
        %v1522 = vcombine.high %v1497, %v1513
        %v1524 = vunpack.c.l.s4 1934713408
        %v1525 = vunpack.c.0.s8 %v1524
        %v1526 = vlaneseq
        %v1527 = vshrl.u32 %v1526, 7
        %v1528 = vsub.s32 %v1525, %v1527
        %v1529 = vrot.slane %v1521, %v1528
        %v1531 = vunpack.c.l.s4 1934713408
        %v1532 = vunpack.c.0.s8 %v1531
        %v1533 = vlaneseq
        %v1534 = vshrl.u32 %v1533, 7
        %v1535 = vsub.s32 %v1532, %v1534
        %v1536 = vrot.slane %v1522, %v1535
        %v1537 = vcombine.low %v1504, %v1520
        %v1538 = vcombine.high %v1504, %v1520
        %v1540 = vunpack.c.l.s4 1934713408
        %v1541 = vunpack.c.0.s8 %v1540
        %v1542 = vlaneseq
        %v1543 = vshrl.u32 %v1542, 7
        %v1544 = vsub.s32 %v1541, %v1543
        %v1545 = vrot.slane %v1537, %v1544
        %v1547 = vunpack.c.l.s4 1934713408
        %v1548 = vunpack.c.0.s8 %v1547
        %v1549 = vlaneseq
        %v1550 = vshrl.u32 %v1549, 7
        %v1551 = vsub.s32 %v1548, %v1550
        %v1552 = vrot.slane %v1538, %v1551
        %v1553 = vcombine.high %v1529, 0.0
        %v1554 = vcombine.high %v1536, 0.0
        %v1555 = vcombine.high %v1545, 0.0
        %v1556 = vcombine.high %v1552, 0.0
        %v1557 = vcombine.low %v903, %v1402
        %v1558 = vcombine.high %v903, %v1402
        %v1560 = vunpack.c.l.s4 1983009808
        %v1561 = vunpack.c.0.s8 %v1560
        %v1562 = vlaneseq
        %v1563 = vshrl.u32 %v1562, 7
        %v1564 = vsub.s32 %v1561, %v1563
        %v1565 = vrot.slane %v1557, %v1564
        %v1567 = vunpack.c.l.s4 1983009808
        %v1568 = vunpack.c.0.s8 %v1567
        %v1569 = vlaneseq
        %v1570 = vshrl.u32 %v1569, 7
        %v1571 = vsub.s32 %v1568, %v1570
        %v1572 = vrot.slane %v1558, %v1571
        %v1573 = vcombine.low %v1390, %v1414
        %v1574 = vcombine.high %v1390, %v1414
        %v1576 = vunpack.c.l.s4 1983009808
        %v1577 = vunpack.c.0.s8 %v1576
        %v1578 = vlaneseq
        %v1579 = vshrl.u32 %v1578, 7
        %v1580 = vsub.s32 %v1577, %v1579
        %v1581 = vrot.slane %v1573, %v1580
        %v1583 = vunpack.c.l.s4 1983009808
        %v1584 = vunpack.c.0.s8 %v1583
        %v1585 = vlaneseq
        %v1586 = vshrl.u32 %v1585, 7
        %v1587 = vsub.s32 %v1584, %v1586
        %v1588 = vrot.slane %v1574, %v1587
        %v1589 = vcombine.low %v1565, %v1581
        %v1590 = vcombine.high %v1565, %v1581
        %v1592 = vunpack.c.l.s4 1934713408
        %v1593 = vunpack.c.0.s8 %v1592
        %v1594 = vlaneseq
        %v1595 = vshrl.u32 %v1594, 7
        %v1596 = vsub.s32 %v1593, %v1595
        %v1597 = vrot.slane %v1589, %v1596
        %v1599 = vunpack.c.l.s4 1934713408
        %v1600 = vunpack.c.0.s8 %v1599
        %v1601 = vlaneseq
        %v1602 = vshrl.u32 %v1601, 7
        %v1603 = vsub.s32 %v1600, %v1602
        %v1604 = vrot.slane %v1590, %v1603
        %v1605 = vcombine.low %v1572, %v1588
        %v1606 = vcombine.high %v1572, %v1588
        %v1608 = vunpack.c.l.s4 1934713408
        %v1609 = vunpack.c.0.s8 %v1608
        %v1610 = vlaneseq
        %v1611 = vshrl.u32 %v1610, 7
        %v1612 = vsub.s32 %v1609, %v1611
        %v1613 = vrot.slane %v1605, %v1612
        %v1615 = vunpack.c.l.s4 1934713408
        %v1616 = vunpack.c.0.s8 %v1615
        %v1617 = vlaneseq
        %v1618 = vshrl.u32 %v1617, 7
        %v1619 = vsub.s32 %v1616, %v1618
        %v1620 = vrot.slane %v1606, %v1619
        %v1621 = vcombine.high %v1597, 0.0
        %v1622 = vcombine.high %v1604, 0.0
        %v1623 = vcombine.high %v1613, 0.0
        %v1624 = vcombine.high %v1620, 0.0
        %v1625 = vcombine.low %v908, %v1404
        %v1626 = vcombine.high %v908, %v1404
        %v1628 = vunpack.c.l.s4 1983009808
        %v1629 = vunpack.c.0.s8 %v1628
        %v1630 = vlaneseq
        %v1631 = vshrl.u32 %v1630, 7
        %v1632 = vsub.s32 %v1629, %v1631
        %v1633 = vrot.slane %v1625, %v1632
        %v1635 = vunpack.c.l.s4 1983009808
        %v1636 = vunpack.c.0.s8 %v1635
        %v1637 = vlaneseq
        %v1638 = vshrl.u32 %v1637, 7
        %v1639 = vsub.s32 %v1636, %v1638
        %v1640 = vrot.slane %v1626, %v1639
        %v1641 = vcombine.low %v1392, %v1416
        %v1642 = vcombine.high %v1392, %v1416
        %v1644 = vunpack.c.l.s4 1983009808
        %v1645 = vunpack.c.0.s8 %v1644
        %v1646 = vlaneseq
        %v1647 = vshrl.u32 %v1646, 7
        %v1648 = vsub.s32 %v1645, %v1647
        %v1649 = vrot.slane %v1641, %v1648
        %v1651 = vunpack.c.l.s4 1983009808
        %v1652 = vunpack.c.0.s8 %v1651
        %v1653 = vlaneseq
        %v1654 = vshrl.u32 %v1653, 7
        %v1655 = vsub.s32 %v1652, %v1654
        %v1656 = vrot.slane %v1642, %v1655
        %v1657 = vcombine.low %v1633, %v1649
        %v1658 = vcombine.high %v1633, %v1649
        %v1660 = vunpack.c.l.s4 1934713408
        %v1661 = vunpack.c.0.s8 %v1660
        %v1662 = vlaneseq
        %v1663 = vshrl.u32 %v1662, 7
        %v1664 = vsub.s32 %v1661, %v1663
        %v1665 = vrot.slane %v1657, %v1664
        %v1667 = vunpack.c.l.s4 1934713408
        %v1668 = vunpack.c.0.s8 %v1667
        %v1669 = vlaneseq
        %v1670 = vshrl.u32 %v1669, 7
        %v1671 = vsub.s32 %v1668, %v1670
        %v1672 = vrot.slane %v1658, %v1671
        %v1673 = vcombine.low %v1640, %v1656
        %v1674 = vcombine.high %v1640, %v1656
        %v1676 = vunpack.c.l.s4 1934713408
        %v1677 = vunpack.c.0.s8 %v1676
        %v1678 = vlaneseq
        %v1679 = vshrl.u32 %v1678, 7
        %v1680 = vsub.s32 %v1677, %v1679
        %v1681 = vrot.slane %v1673, %v1680
        %v1683 = vunpack.c.l.s4 1934713408
        %v1684 = vunpack.c.0.s8 %v1683
        %v1685 = vlaneseq
        %v1686 = vshrl.u32 %v1685, 7
        %v1687 = vsub.s32 %v1684, %v1686
        %v1688 = vrot.slane %v1674, %v1687
        %v1689 = vcombine.high %v1665, 0.0
        %v1690 = vcombine.high %v1672, 0.0
        %v1691 = vcombine.high %v1681, 0.0
        %v1692 = vcombine.high %v1688, 0.0
        %v1693 = vcombine.low %v973, %v980
        %v1695 = vunpack.c.l.s4 1983009808
        %v1696 = vunpack.c.0.s8 %v1695
        %v1697 = vlaneseq
        %v1698 = vshrl.u32 %v1697, 7
        %v1699 = vsub.s32 %v1696, %v1698
        %v1700 = vrot.slane %v1693, %v1699
        %v1701 = vcombine.low %v997, %v998
        %v1703 = vunpack.c.l.s4 1983009808
        %v1704 = vunpack.c.0.s8 %v1703
        %v1705 = vlaneseq
        %v1706 = vshrl.u32 %v1705, 7
        %v1707 = vsub.s32 %v1704, %v1706
        %v1708 = vrot.slane %v1701, %v1707
        %v1709 = vcombine.low %v989, %v996
        %v1711 = vunpack.c.l.s4 1983009808
        %v1712 = vunpack.c.0.s8 %v1711
        %v1713 = vlaneseq
        %v1714 = vshrl.u32 %v1713, 7
        %v1715 = vsub.s32 %v1712, %v1714
        %v1716 = vrot.slane %v1709, %v1715
        %v1717 = vcombine.low %v999, %v1000
        %v1719 = vunpack.c.l.s4 1983009808
        %v1720 = vunpack.c.0.s8 %v1719
        %v1721 = vlaneseq
        %v1722 = vshrl.u32 %v1721, 7
        %v1723 = vsub.s32 %v1720, %v1722
        %v1724 = vrot.slane %v1717, %v1723
        %v1725 = vcombine.low %v1700, %v1708
        %v1726 = vcombine.high %v1700, %v1708
        %v1728 = vunpack.c.l.s4 1934713408
        %v1729 = vunpack.c.0.s8 %v1728
        %v1730 = vlaneseq
        %v1731 = vshrl.u32 %v1730, 7
        %v1732 = vsub.s32 %v1729, %v1731
        %v1733 = vrot.slane %v1725, %v1732
        %v1735 = vunpack.c.l.s4 1934713408
        %v1736 = vunpack.c.0.s8 %v1735
        %v1737 = vlaneseq
        %v1738 = vshrl.u32 %v1737, 7
        %v1739 = vsub.s32 %v1736, %v1738
        %v1740 = vrot.slane %v1726, %v1739
        %v1741 = vcombine.low %v1716, %v1724
        %v1742 = vcombine.high %v1716, %v1724
        %v1744 = vunpack.c.l.s4 1934713408
        %v1745 = vunpack.c.0.s8 %v1744
        %v1746 = vlaneseq
        %v1747 = vshrl.u32 %v1746, 7
        %v1748 = vsub.s32 %v1745, %v1747
        %v1749 = vrot.slane %v1741, %v1748
        %v1751 = vunpack.c.l.s4 1934713408
        %v1752 = vunpack.c.0.s8 %v1751
        %v1753 = vlaneseq
        %v1754 = vshrl.u32 %v1753, 7
        %v1755 = vsub.s32 %v1752, %v1754
        %v1756 = vrot.slane %v1742, %v1755
        %v1757 = vcombine.low %v1733, %v1749
        %v1758 = vcombine.high %v1733, %v1749
        %v1759 = vcombine.low %v1740, %v1756
        %v1760 = vcombine.high %v1740, %v1756
        %v1761 = vcombine.low %v1149, %v1156
        %v1763 = vunpack.c.l.s4 1983009808
        %v1764 = vunpack.c.0.s8 %v1763
        %v1765 = vlaneseq
        %v1766 = vshrl.u32 %v1765, 7
        %v1767 = vsub.s32 %v1764, %v1766
        %v1768 = vrot.slane %v1761, %v1767
        %v1769 = vcombine.low %v1173, %v1174
        %v1771 = vunpack.c.l.s4 1983009808
        %v1772 = vunpack.c.0.s8 %v1771
        %v1773 = vlaneseq
        %v1774 = vshrl.u32 %v1773, 7
        %v1775 = vsub.s32 %v1772, %v1774
        %v1776 = vrot.slane %v1769, %v1775
        %v1777 = vcombine.low %v1165, %v1172
        %v1779 = vunpack.c.l.s4 1983009808
        %v1780 = vunpack.c.0.s8 %v1779
        %v1781 = vlaneseq
        %v1782 = vshrl.u32 %v1781, 7
        %v1783 = vsub.s32 %v1780, %v1782
        %v1784 = vrot.slane %v1777, %v1783
        %v1785 = vcombine.low %v1175, %v1176
        %v1787 = vunpack.c.l.s4 1983009808
        %v1788 = vunpack.c.0.s8 %v1787
        %v1789 = vlaneseq
        %v1790 = vshrl.u32 %v1789, 7
        %v1791 = vsub.s32 %v1788, %v1790
        %v1792 = vrot.slane %v1785, %v1791
        %v1793 = vcombine.low %v1768, %v1776
        %v1794 = vcombine.high %v1768, %v1776
        %v1796 = vunpack.c.l.s4 1934713408
        %v1797 = vunpack.c.0.s8 %v1796
        %v1798 = vlaneseq
        %v1799 = vshrl.u32 %v1798, 7
        %v1800 = vsub.s32 %v1797, %v1799
        %v1801 = vrot.slane %v1793, %v1800
        %v1803 = vunpack.c.l.s4 1934713408
        %v1804 = vunpack.c.0.s8 %v1803
        %v1805 = vlaneseq
        %v1806 = vshrl.u32 %v1805, 7
        %v1807 = vsub.s32 %v1804, %v1806
        %v1808 = vrot.slane %v1794, %v1807
        %v1809 = vcombine.low %v1784, %v1792
        %v1810 = vcombine.high %v1784, %v1792
        %v1812 = vunpack.c.l.s4 1934713408
        %v1813 = vunpack.c.0.s8 %v1812
        %v1814 = vlaneseq
        %v1815 = vshrl.u32 %v1814, 7
        %v1816 = vsub.s32 %v1813, %v1815
        %v1817 = vrot.slane %v1809, %v1816
        %v1819 = vunpack.c.l.s4 1934713408
        %v1820 = vunpack.c.0.s8 %v1819
        %v1821 = vlaneseq
        %v1822 = vshrl.u32 %v1821, 7
        %v1823 = vsub.s32 %v1820, %v1822
        %v1824 = vrot.slane %v1810, %v1823
        %v1825 = vcombine.low %v1801, %v1817
        %v1826 = vcombine.high %v1801, %v1817
        %v1827 = vcombine.low %v1808, %v1824
        %v1828 = vcombine.high %v1808, %v1824
        %v1829 = vcombine.low %v1217, %v1224
        %v1831 = vunpack.c.l.s4 1983009808
        %v1832 = vunpack.c.0.s8 %v1831
        %v1833 = vlaneseq
        %v1834 = vshrl.u32 %v1833, 7
        %v1835 = vsub.s32 %v1832, %v1834
        %v1836 = vrot.slane %v1829, %v1835
        %v1837 = vcombine.low %v1241, %v1242
        %v1839 = vunpack.c.l.s4 1983009808
        %v1840 = vunpack.c.0.s8 %v1839
        %v1841 = vlaneseq
        %v1842 = vshrl.u32 %v1841, 7
        %v1843 = vsub.s32 %v1840, %v1842
        %v1844 = vrot.slane %v1837, %v1843
        %v1845 = vcombine.low %v1233, %v1240
        %v1847 = vunpack.c.l.s4 1983009808
        %v1848 = vunpack.c.0.s8 %v1847
        %v1849 = vlaneseq
        %v1850 = vshrl.u32 %v1849, 7
        %v1851 = vsub.s32 %v1848, %v1850
        %v1852 = vrot.slane %v1845, %v1851
        %v1853 = vcombine.low %v1243, %v1244
        %v1855 = vunpack.c.l.s4 1983009808
        %v1856 = vunpack.c.0.s8 %v1855
        %v1857 = vlaneseq
        %v1858 = vshrl.u32 %v1857, 7
        %v1859 = vsub.s32 %v1856, %v1858
        %v1860 = vrot.slane %v1853, %v1859
        %v1861 = vcombine.low %v1836, %v1844
        %v1862 = vcombine.high %v1836, %v1844
        %v1864 = vunpack.c.l.s4 1934713408
        %v1865 = vunpack.c.0.s8 %v1864
        %v1866 = vlaneseq
        %v1867 = vshrl.u32 %v1866, 7
        %v1868 = vsub.s32 %v1865, %v1867
        %v1869 = vrot.slane %v1861, %v1868
        %v1871 = vunpack.c.l.s4 1934713408
        %v1872 = vunpack.c.0.s8 %v1871
        %v1873 = vlaneseq
        %v1874 = vshrl.u32 %v1873, 7
        %v1875 = vsub.s32 %v1872, %v1874
        %v1876 = vrot.slane %v1862, %v1875
        %v1877 = vcombine.low %v1852, %v1860
        %v1878 = vcombine.high %v1852, %v1860
        %v1880 = vunpack.c.l.s4 1934713408
        %v1881 = vunpack.c.0.s8 %v1880
        %v1882 = vlaneseq
        %v1883 = vshrl.u32 %v1882, 7
        %v1884 = vsub.s32 %v1881, %v1883
        %v1885 = vrot.slane %v1877, %v1884
        %v1887 = vunpack.c.l.s4 1934713408
        %v1888 = vunpack.c.0.s8 %v1887
        %v1889 = vlaneseq
        %v1890 = vshrl.u32 %v1889, 7
        %v1891 = vsub.s32 %v1888, %v1890
        %v1892 = vrot.slane %v1878, %v1891
        %v1893 = vcombine.low %v1869, %v1885
        %v1894 = vcombine.high %v1869, %v1885
        %v1895 = vcombine.low %v1876, %v1892
        %v1896 = vcombine.high %v1876, %v1892
        %v1897 = vcombine.low %v1461, %v1468
        %v1899 = vunpack.c.l.s4 1983009808
        %v1900 = vunpack.c.0.s8 %v1899
        %v1901 = vlaneseq
        %v1902 = vshrl.u32 %v1901, 7
        %v1903 = vsub.s32 %v1900, %v1902
        %v1904 = vrot.slane %v1897, %v1903
        %v1905 = vcombine.low %v1485, %v1486
        %v1907 = vunpack.c.l.s4 1983009808
        %v1908 = vunpack.c.0.s8 %v1907
        %v1909 = vlaneseq
        %v1910 = vshrl.u32 %v1909, 7
        %v1911 = vsub.s32 %v1908, %v1910
        %v1912 = vrot.slane %v1905, %v1911
        %v1913 = vcombine.low %v1477, %v1484
        %v1915 = vunpack.c.l.s4 1983009808
        %v1916 = vunpack.c.0.s8 %v1915
        %v1917 = vlaneseq
        %v1918 = vshrl.u32 %v1917, 7
        %v1919 = vsub.s32 %v1916, %v1918
        %v1920 = vrot.slane %v1913, %v1919
        %v1921 = vcombine.low %v1487, %v1488
        %v1923 = vunpack.c.l.s4 1983009808
        %v1924 = vunpack.c.0.s8 %v1923
        %v1925 = vlaneseq
        %v1926 = vshrl.u32 %v1925, 7
        %v1927 = vsub.s32 %v1924, %v1926
        %v1928 = vrot.slane %v1921, %v1927
        %v1929 = vcombine.low %v1904, %v1912
        %v1930 = vcombine.high %v1904, %v1912
        %v1932 = vunpack.c.l.s4 1934713408
        %v1933 = vunpack.c.0.s8 %v1932
        %v1934 = vlaneseq
        %v1935 = vshrl.u32 %v1934, 7
        %v1936 = vsub.s32 %v1933, %v1935
        %v1937 = vrot.slane %v1929, %v1936
        %v1939 = vunpack.c.l.s4 1934713408
        %v1940 = vunpack.c.0.s8 %v1939
        %v1941 = vlaneseq
        %v1942 = vshrl.u32 %v1941, 7
        %v1943 = vsub.s32 %v1940, %v1942
        %v1944 = vrot.slane %v1930, %v1943
        %v1945 = vcombine.low %v1920, %v1928
        %v1946 = vcombine.high %v1920, %v1928
        %v1948 = vunpack.c.l.s4 1934713408
        %v1949 = vunpack.c.0.s8 %v1948
        %v1950 = vlaneseq
        %v1951 = vshrl.u32 %v1950, 7
        %v1952 = vsub.s32 %v1949, %v1951
        %v1953 = vrot.slane %v1945, %v1952
        %v1955 = vunpack.c.l.s4 1934713408
        %v1956 = vunpack.c.0.s8 %v1955
        %v1957 = vlaneseq
        %v1958 = vshrl.u32 %v1957, 7
        %v1959 = vsub.s32 %v1956, %v1958
        %v1960 = vrot.slane %v1946, %v1959
        %v1961 = vcombine.low %v1937, %v1953
        %v1962 = vcombine.high %v1937, %v1953
        %v1963 = vcombine.low %v1944, %v1960
        %v1964 = vcombine.high %v1944, %v1960
        %v1965 = vcombine.low %v1529, %v1536
        %v1967 = vunpack.c.l.s4 1983009808
        %v1968 = vunpack.c.0.s8 %v1967
        %v1969 = vlaneseq
        %v1970 = vshrl.u32 %v1969, 7
        %v1971 = vsub.s32 %v1968, %v1970
        %v1972 = vrot.slane %v1965, %v1971
        %v1973 = vcombine.low %v1553, %v1554
        %v1975 = vunpack.c.l.s4 1983009808
        %v1976 = vunpack.c.0.s8 %v1975
        %v1977 = vlaneseq
        %v1978 = vshrl.u32 %v1977, 7
        %v1979 = vsub.s32 %v1976, %v1978
        %v1980 = vrot.slane %v1973, %v1979
        %v1981 = vcombine.low %v1545, %v1552
        %v1983 = vunpack.c.l.s4 1983009808
        %v1984 = vunpack.c.0.s8 %v1983
        %v1985 = vlaneseq
        %v1986 = vshrl.u32 %v1985, 7
        %v1987 = vsub.s32 %v1984, %v1986
        %v1988 = vrot.slane %v1981, %v1987
        %v1989 = vcombine.low %v1555, %v1556
        %v1991 = vunpack.c.l.s4 1983009808
        %v1992 = vunpack.c.0.s8 %v1991
        %v1993 = vlaneseq
        %v1994 = vshrl.u32 %v1993, 7
        %v1995 = vsub.s32 %v1992, %v1994
        %v1996 = vrot.slane %v1989, %v1995
        %v1997 = vcombine.low %v1972, %v1980
        %v1998 = vcombine.high %v1972, %v1980
        %v2000 = vunpack.c.l.s4 1934713408
        %v2001 = vunpack.c.0.s8 %v2000
        %v2002 = vlaneseq
        %v2003 = vshrl.u32 %v2002, 7
        %v2004 = vsub.s32 %v2001, %v2003
        %v2005 = vrot.slane %v1997, %v2004
        %v2007 = vunpack.c.l.s4 1934713408
        %v2008 = vunpack.c.0.s8 %v2007
        %v2009 = vlaneseq
        %v2010 = vshrl.u32 %v2009, 7
        %v2011 = vsub.s32 %v2008, %v2010
        %v2012 = vrot.slane %v1998, %v2011
        %v2013 = vcombine.low %v1988, %v1996
        %v2014 = vcombine.high %v1988, %v1996
        %v2016 = vunpack.c.l.s4 1934713408
        %v2017 = vunpack.c.0.s8 %v2016
        %v2018 = vlaneseq
        %v2019 = vshrl.u32 %v2018, 7
        %v2020 = vsub.s32 %v2017, %v2019
        %v2021 = vrot.slane %v2013, %v2020
        %v2023 = vunpack.c.l.s4 1934713408
        %v2024 = vunpack.c.0.s8 %v2023
        %v2025 = vlaneseq
        %v2026 = vshrl.u32 %v2025, 7
        %v2027 = vsub.s32 %v2024, %v2026
        %v2028 = vrot.slane %v2014, %v2027
        %v2029 = vcombine.low %v2005, %v2021
        %v2030 = vcombine.high %v2005, %v2021
        %v2031 = vcombine.low %v2012, %v2028
        %v2032 = vcombine.high %v2012, %v2028
        %v2033 = vld [vmem:[%s589] sm:$0x1]
        %v2035 = vlaneseq
        %v2036 = vshrl.u32 %v2035, 7
        %v2037 = vsub.s32 0, %v2036
        %v2038 = vrot.slane %v2033, %v2037
        %vm2040 = vcmask 64512
        %v2042 = vsel %vm2040, %v1757, 0
        %v2045 = vsel %vm2040, %v1825, 0
        %v2048 = vsel %vm2040, %v1893, 0
        %2050 = vmatprep.subr.mxu0 0.0
        %2051 = vmatpush1.xpose.msra.mxu0 0.0
        %2052 = vmatprep.subr.mxu0 0.0
        %2053 = vmatpush1.xpose.msra.mxu0 0.0
        %2054 = vmatprep.subr.mxu0 0.0
        %2055 = vmatpush1.xpose.msra.mxu0 0.0
        %2056 = vmatprep.subr.mxu0 0.0
        %2057 = vmatpush1.xpose.msra.mxu0 0.0
        %2058 = vmatprep.subr.mxu0 0.0
        %2059 = vmatpush1.xpose.msra.mxu0 0.0
        %2060 = vmatprep.subr.mxu0 0.0
        %2061 = vmatpush1.xpose.msra.mxu0 0.0
        %2062 = vmatprep.subr.mxu0 0.0
        %2063 = vmatpush1.xpose.msra.mxu0 0.0
        %2064 = vmatprep.subr.mxu0 0.0
        %2065 = vmatpush1.xpose.msra.mxu0 0.0
        %2066 = vmatprep.subr.mxu0 0.0
        %2067 = vmatpush1.xpose.msra.mxu0 0.0
        %2068 = vmatprep.subr.mxu0 0.0
        %2069 = vmatpush1.xpose.msra.mxu0 0.0
        %2070 = vmatprep.subr.mxu0 0.0
        %2071 = vmatpush1.xpose.msra.mxu0 0.0
        %2072 = vmatprep.subr.mxu0 0.0
        %2073 = vmatpush1.xpose.msra.mxu0 0.0
        %2074 = vmatprep.subr.mxu0 0.0
        %2075 = vmatpush1.xpose.msra.mxu0 0.0
        %2076 = vmatprep.subr.mxu0 0.0
        %2077 = vmatpush1.xpose.msra.mxu0 0.0
        %2078 = vmatprep.subr.mxu0 0.0
        %2079 = vmatpush1.xpose.msra.mxu0 %v2048
        %2080 = vmatprep.subr.mxu0 0.0
        %2081 = vmatpush1.xpose.msra.mxu0 %v2045
        %2082 = vmatprep.subr.mxu0 0.0
        %2083 = vmatpush2.xpose.msra.mxu0 0.0
        %2084 = vmatprep.subr.mxu0 0.0
        %2085 = vmatpush2.xpose.msra.mxu0 0.0
        %2086 = vmatprep.subr.mxu0 0.0
        %2087 = vmatpush2.xpose.msra.mxu0 0.0
        %2088 = vmatprep.subr.mxu0 0.0
        %2089 = vmatpush2.xpose.msra.mxu0 0.0
        %2090 = vmatprep.subr.mxu0 0.0
        %2091 = vmatpush2.xpose.msra.mxu0 0.0
        %2092 = vmatprep.subr.mxu0 0.0
        %2093 = vmatpush2.xpose.msra.mxu0 0.0
        %2094 = vmatprep.subr.mxu0 0.0
        %2095 = vmatpush2.xpose.msra.mxu0 0.0
        %2096 = vmatprep.subr.mxu0 0.0
        %2097 = vmatpush2.xpose.msra.mxu0 0.0
        %2098 = vmatprep.subr.mxu0 0.0
        %2099 = vmatpush2.xpose.msra.mxu0 0.0
        %2100 = vmatprep.subr.mxu0 0.0
        %2101 = vmatpush2.xpose.msra.mxu0 0.0
        %2102 = vmatprep.subr.mxu0 0.0
        %2103 = vmatpush2.xpose.msra.mxu0 0.0
        %2104 = vmatprep.subr.mxu0 0.0
        %2105 = vmatpush2.xpose.msra.mxu0 0.0
        %2106 = vmatprep.subr.mxu0 0.0
        %2107 = vmatpush2.xpose.msra.mxu0 0.0
        %2108 = vmatprep.subr.mxu0 0.0
        %2109 = vmatpush2.xpose.msra.mxu0 0.0
        %2110 = vmatprep.subr.mxu0 0.0
        %2111 = vmatpush2.xpose.msra.mxu0 0.0
        %2112 = vmatprep.subr.mxu0 0.0
        %2113 = vmatpush2.xpose.msra.mxu0 0.0
        %2114 = vmatprep.mubr.f32.mxu0 0.0
        %2115 = vmatmul.mubr.f32.gmra.mxu0 %v2042
        %v2116 = vpop.f32.mrf.mxu0
        %v2117 = vadd.f32 %v2038, %v2116
        %v2118 = vpop.f32.mrf.mxu0
        %2119 = vdwg.mxu0
        %v2121 = vsel %vm2040, %v1758, 0
        %v2124 = vsel %vm2040, %v1826, 0
        %v2127 = vsel %vm2040, %v1894, 0
        %2129 = vmatprep.subr.mxu0 0.0
        %2130 = vmatpush1.xpose.msra.mxu0 0.0
        %2131 = vmatprep.subr.mxu0 0.0
        %2132 = vmatpush1.xpose.msra.mxu0 0.0
        %2133 = vmatprep.subr.mxu0 0.0
        %2134 = vmatpush1.xpose.msra.mxu0 0.0
        %2135 = vmatprep.subr.mxu0 0.0
        %2136 = vmatpush1.xpose.msra.mxu0 0.0
        %2137 = vmatprep.subr.mxu0 0.0
        %2138 = vmatpush1.xpose.msra.mxu0 0.0
        %2139 = vmatprep.subr.mxu0 0.0
        %2140 = vmatpush1.xpose.msra.mxu0 0.0
        %2141 = vmatprep.subr.mxu0 0.0
        %2142 = vmatpush1.xpose.msra.mxu0 0.0
        %2143 = vmatprep.subr.mxu0 0.0
        %2144 = vmatpush1.xpose.msra.mxu0 0.0
        %2145 = vmatprep.subr.mxu0 0.0
        %2146 = vmatpush1.xpose.msra.mxu0 0.0
        %2147 = vmatprep.subr.mxu0 0.0
        %2148 = vmatpush1.xpose.msra.mxu0 0.0
        %2149 = vmatprep.subr.mxu0 0.0
        %2150 = vmatpush1.xpose.msra.mxu0 0.0
        %2151 = vmatprep.subr.mxu0 0.0
        %2152 = vmatpush1.xpose.msra.mxu0 0.0
        %2153 = vmatprep.subr.mxu0 0.0
        %2154 = vmatpush1.xpose.msra.mxu0 0.0
        %2155 = vmatprep.subr.mxu0 0.0
        %2156 = vmatpush1.xpose.msra.mxu0 0.0
        %2157 = vmatprep.subr.mxu0 0.0
        %2158 = vmatpush1.xpose.msra.mxu0 %v2127
        %2159 = vmatprep.subr.mxu0 0.0
        %2160 = vmatpush1.xpose.msra.mxu0 %v2124
        %2161 = vmatprep.subr.mxu0 0.0
        %2162 = vmatpush2.xpose.msra.mxu0 0.0
        %2163 = vmatprep.subr.mxu0 0.0
        %2164 = vmatpush2.xpose.msra.mxu0 0.0
        %2165 = vmatprep.subr.mxu0 0.0
        %2166 = vmatpush2.xpose.msra.mxu0 0.0
        %2167 = vmatprep.subr.mxu0 0.0
        %2168 = vmatpush2.xpose.msra.mxu0 0.0
        %2169 = vmatprep.subr.mxu0 0.0
        %2170 = vmatpush2.xpose.msra.mxu0 0.0
        %2171 = vmatprep.subr.mxu0 0.0
        %2172 = vmatpush2.xpose.msra.mxu0 0.0
        %2173 = vmatprep.subr.mxu0 0.0
        %2174 = vmatpush2.xpose.msra.mxu0 0.0
        %2175 = vmatprep.subr.mxu0 0.0
        %2176 = vmatpush2.xpose.msra.mxu0 0.0
        %2177 = vmatprep.subr.mxu0 0.0
        %2178 = vmatpush2.xpose.msra.mxu0 0.0
        %2179 = vmatprep.subr.mxu0 0.0
        %2180 = vmatpush2.xpose.msra.mxu0 0.0
        %2181 = vmatprep.subr.mxu0 0.0
        %2182 = vmatpush2.xpose.msra.mxu0 0.0
        %2183 = vmatprep.subr.mxu0 0.0
        %2184 = vmatpush2.xpose.msra.mxu0 0.0
        %2185 = vmatprep.subr.mxu0 0.0
        %2186 = vmatpush2.xpose.msra.mxu0 0.0
        %2187 = vmatprep.subr.mxu0 0.0
        %2188 = vmatpush2.xpose.msra.mxu0 0.0
        %2189 = vmatprep.subr.mxu0 0.0
        %2190 = vmatpush2.xpose.msra.mxu0 0.0
        %2191 = vmatprep.subr.mxu0 0.0
        %2192 = vmatpush2.xpose.msra.mxu0 0.0
        %2193 = vmatprep.mubr.f32.mxu0 0.0
        %2194 = vmatmul.mubr.f32.gmra.mxu0 %v2121
        %v2195 = vpop.f32.mrf.mxu0
        %v2196 = vadd.f32 %v2038, %v2195
        %v2197 = vpop.f32.mrf.mxu0
        %2198 = vdwg.mxu0
        %v2200 = vsel %vm2040, %v1759, 0
        %v2203 = vsel %vm2040, %v1827, 0
        %v2206 = vsel %vm2040, %v1895, 0
        %2208 = vmatprep.subr.mxu0 0.0
        %2209 = vmatpush1.xpose.msra.mxu0 0.0
        %2210 = vmatprep.subr.mxu0 0.0
        %2211 = vmatpush1.xpose.msra.mxu0 0.0
        %2212 = vmatprep.subr.mxu0 0.0
        %2213 = vmatpush1.xpose.msra.mxu0 0.0
        %2214 = vmatprep.subr.mxu0 0.0
        %2215 = vmatpush1.xpose.msra.mxu0 0.0
        %2216 = vmatprep.subr.mxu0 0.0
        %2217 = vmatpush1.xpose.msra.mxu0 0.0
        %2218 = vmatprep.subr.mxu0 0.0
        %2219 = vmatpush1.xpose.msra.mxu0 0.0
        %2220 = vmatprep.subr.mxu0 0.0
        %2221 = vmatpush1.xpose.msra.mxu0 0.0
        %2222 = vmatprep.subr.mxu0 0.0
        %2223 = vmatpush1.xpose.msra.mxu0 0.0
        %2224 = vmatprep.subr.mxu0 0.0
        %2225 = vmatpush1.xpose.msra.mxu0 0.0
        %2226 = vmatprep.subr.mxu0 0.0
        %2227 = vmatpush1.xpose.msra.mxu0 0.0
        %2228 = vmatprep.subr.mxu0 0.0
        %2229 = vmatpush1.xpose.msra.mxu0 0.0
        %2230 = vmatprep.subr.mxu0 0.0
        %2231 = vmatpush1.xpose.msra.mxu0 0.0
        %2232 = vmatprep.subr.mxu0 0.0
        %2233 = vmatpush1.xpose.msra.mxu0 0.0
        %2234 = vmatprep.subr.mxu0 0.0
        %2235 = vmatpush1.xpose.msra.mxu0 0.0
        %2236 = vmatprep.subr.mxu0 0.0
        %2237 = vmatpush1.xpose.msra.mxu0 %v2206
        %2238 = vmatprep.subr.mxu0 0.0
        %2239 = vmatpush1.xpose.msra.mxu0 %v2203
        %2240 = vmatprep.subr.mxu0 0.0
        %2241 = vmatpush2.xpose.msra.mxu0 0.0
        %2242 = vmatprep.subr.mxu0 0.0
        %2243 = vmatpush2.xpose.msra.mxu0 0.0
        %2244 = vmatprep.subr.mxu0 0.0
        %2245 = vmatpush2.xpose.msra.mxu0 0.0
        %2246 = vmatprep.subr.mxu0 0.0
        %2247 = vmatpush2.xpose.msra.mxu0 0.0
        %2248 = vmatprep.subr.mxu0 0.0
        %2249 = vmatpush2.xpose.msra.mxu0 0.0
        %2250 = vmatprep.subr.mxu0 0.0
        %2251 = vmatpush2.xpose.msra.mxu0 0.0
        %2252 = vmatprep.subr.mxu0 0.0
        %2253 = vmatpush2.xpose.msra.mxu0 0.0
        %2254 = vmatprep.subr.mxu0 0.0
        %2255 = vmatpush2.xpose.msra.mxu0 0.0
        %2256 = vmatprep.subr.mxu0 0.0
        %2257 = vmatpush2.xpose.msra.mxu0 0.0
        %2258 = vmatprep.subr.mxu0 0.0
        %2259 = vmatpush2.xpose.msra.mxu0 0.0
        %2260 = vmatprep.subr.mxu0 0.0
        %2261 = vmatpush2.xpose.msra.mxu0 0.0
        %2262 = vmatprep.subr.mxu0 0.0
        %2263 = vmatpush2.xpose.msra.mxu0 0.0
        %2264 = vmatprep.subr.mxu0 0.0
        %2265 = vmatpush2.xpose.msra.mxu0 0.0
        %2266 = vmatprep.subr.mxu0 0.0
        %2267 = vmatpush2.xpose.msra.mxu0 0.0
        %2268 = vmatprep.subr.mxu0 0.0
        %2269 = vmatpush2.xpose.msra.mxu0 0.0
        %2270 = vmatprep.subr.mxu0 0.0
        %2271 = vmatpush2.xpose.msra.mxu0 0.0
        %2272 = vmatprep.mubr.f32.mxu0 0.0
        %2273 = vmatmul.mubr.f32.gmra.mxu0 %v2200
        %v2274 = vpop.f32.mrf.mxu0
        %v2275 = vadd.f32 %v2038, %v2274
        %v2276 = vpop.f32.mrf.mxu0
        %2277 = vdwg.mxu0
        %v2279 = vsel %vm2040, %v1760, 0
        %v2282 = vsel %vm2040, %v1828, 0
        %v2285 = vsel %vm2040, %v1896, 0
        %2287 = vmatprep.subr.mxu0 0.0
        %2288 = vmatpush1.xpose.msra.mxu0 0.0
        %2289 = vmatprep.subr.mxu0 0.0
        %2290 = vmatpush1.xpose.msra.mxu0 0.0
        %2291 = vmatprep.subr.mxu0 0.0
        %2292 = vmatpush1.xpose.msra.mxu0 0.0
        %2293 = vmatprep.subr.mxu0 0.0
        %2294 = vmatpush1.xpose.msra.mxu0 0.0
        %2295 = vmatprep.subr.mxu0 0.0
        %2296 = vmatpush1.xpose.msra.mxu0 0.0
        %2297 = vmatprep.subr.mxu0 0.0
        %2298 = vmatpush1.xpose.msra.mxu0 0.0
        %2299 = vmatprep.subr.mxu0 0.0
        %2300 = vmatpush1.xpose.msra.mxu0 0.0
        %2301 = vmatprep.subr.mxu0 0.0
        %2302 = vmatpush1.xpose.msra.mxu0 0.0
        %2303 = vmatprep.subr.mxu0 0.0
        %2304 = vmatpush1.xpose.msra.mxu0 0.0
        %2305 = vmatprep.subr.mxu0 0.0
        %2306 = vmatpush1.xpose.msra.mxu0 0.0
        %2307 = vmatprep.subr.mxu0 0.0
        %2308 = vmatpush1.xpose.msra.mxu0 0.0
        %2309 = vmatprep.subr.mxu0 0.0
        %2310 = vmatpush1.xpose.msra.mxu0 0.0
        %2311 = vmatprep.subr.mxu0 0.0
        %2312 = vmatpush1.xpose.msra.mxu0 0.0
        %2313 = vmatprep.subr.mxu0 0.0
        %2314 = vmatpush1.xpose.msra.mxu0 0.0
        %2315 = vmatprep.subr.mxu0 0.0
        %2316 = vmatpush1.xpose.msra.mxu0 %v2285
        %2317 = vmatprep.subr.mxu0 0.0
        %2318 = vmatpush1.xpose.msra.mxu0 %v2282
        %2319 = vmatprep.subr.mxu0 0.0
        %2320 = vmatpush2.xpose.msra.mxu0 0.0
        %2321 = vmatprep.subr.mxu0 0.0
        %2322 = vmatpush2.xpose.msra.mxu0 0.0
        %2323 = vmatprep.subr.mxu0 0.0
        %2324 = vmatpush2.xpose.msra.mxu0 0.0
        %2325 = vmatprep.subr.mxu0 0.0
        %2326 = vmatpush2.xpose.msra.mxu0 0.0
        %2327 = vmatprep.subr.mxu0 0.0
        %2328 = vmatpush2.xpose.msra.mxu0 0.0
        %2329 = vmatprep.subr.mxu0 0.0
        %2330 = vmatpush2.xpose.msra.mxu0 0.0
        %2331 = vmatprep.subr.mxu0 0.0
        %2332 = vmatpush2.xpose.msra.mxu0 0.0
        %2333 = vmatprep.subr.mxu0 0.0
        %2334 = vmatpush2.xpose.msra.mxu0 0.0
        %2335 = vmatprep.subr.mxu0 0.0
        %2336 = vmatpush2.xpose.msra.mxu0 0.0
        %2337 = vmatprep.subr.mxu0 0.0
        %2338 = vmatpush2.xpose.msra.mxu0 0.0
        %2339 = vmatprep.subr.mxu0 0.0
        %2340 = vmatpush2.xpose.msra.mxu0 0.0
        %2341 = vmatprep.subr.mxu0 0.0
        %2342 = vmatpush2.xpose.msra.mxu0 0.0
        %2343 = vmatprep.subr.mxu0 0.0
        %2344 = vmatpush2.xpose.msra.mxu0 0.0
        %2345 = vmatprep.subr.mxu0 0.0
        %2346 = vmatpush2.xpose.msra.mxu0 0.0
        %2347 = vmatprep.subr.mxu0 0.0
        %2348 = vmatpush2.xpose.msra.mxu0 0.0
        %2349 = vmatprep.subr.mxu0 0.0
        %2350 = vmatpush2.xpose.msra.mxu0 0.0
        %2351 = vmatprep.mubr.f32.mxu0 0.0
        %2352 = vmatmul.mubr.f32.gmra.mxu0 %v2279
        %v2353 = vpop.f32.mrf.mxu0
        %v2354 = vadd.f32 %v2038, %v2353
        %v2355 = vpop.f32.mrf.mxu0
        %2356 = vdwg.mxu0
        %vm2357 = vcmask 130048
        %v2358 = vsel %vm2357, %v2117, -inf
        %2359 = vmax.xlane.f32.xlu0 %v2358
        %v2360 = vpop.xlane.xlu0 %2359
        %v2361 = vsel %vm2357, %v2196, -inf
        %2362 = vmax.xlane.f32.xlu0 %v2361
        %v2363 = vpop.xlane.xlu0 %2362
        %v2364 = vsel %vm2357, %v2275, -inf
        %2365 = vmax.xlane.f32.xlu0 %v2364
        %v2366 = vpop.xlane.xlu0 %2365
        %v2367 = vsel %vm2357, %v2354, -inf
        %2368 = vmax.xlane.f32.xlu0 %v2367
        %v2369 = vpop.xlane.xlu0 %2368
        %v2370 = vsub.f32 %v2117, %v2360
        %v2371 = vsub.f32 %v2196, %v2363
        %v2372 = vsub.f32 %v2275, %v2366
        %v2373 = vsub.f32 %v2354, %v2369
        %v2374 = vmul.f32 %v2370, 1.442695
        %v2375 = vpow.pop %v2374
        %v2376 = vmul.f32 %v2371, 1.442695
        %v2377 = vpow.pop %v2376
        %v2378 = vmul.f32 %v2372, 1.442695
        %v2379 = vpow.pop %v2378
        %v2380 = vmul.f32 %v2373, 1.442695
        %v2381 = vpow.pop %v2380
        %v2382 = vsel %vm2357, %v2375, 0.0
        %2383 = vadd.xlane.f32.xlu0 %v2382
        %v2384 = vpop.xlane.xlu0 %2383
        %v2385 = vsel %vm2357, %v2377, 0.0
        %2386 = vadd.xlane.f32.xlu0 %v2385
        %v2387 = vpop.xlane.xlu0 %2386
        %v2388 = vsel %vm2357, %v2379, 0.0
        %2389 = vadd.xlane.f32.xlu0 %v2388
        %v2390 = vpop.xlane.xlu0 %2389
        %v2391 = vsel %vm2357, %v2381, 0.0
        %2392 = vadd.xlane.f32.xlu0 %v2391
        %v2393 = vpop.xlane.xlu0 %2392
        %v2394 = vrcp.pop %v2384
        %v2395 = vmul.f32 %v2375, %v2394
        %v2396 = vrcp.pop %v2387
        %v2397 = vmul.f32 %v2377, %v2396
        %v2398 = vrcp.pop %v2390
        %v2399 = vmul.f32 %v2379, %v2398
        %v2400 = vrcp.pop %v2393
        %v2401 = vmul.f32 %v2381, %v2400
        %v2403 = vsel %vm2357, %v2395, 0
        %2405 = vmatprep.subr.mxu0 0.0
        %2406 = vmatpush1.msra.mxu0 0.0
        %2407 = vmatprep.subr.mxu0 0.0
        %2408 = vmatpush1.msra.mxu0 0.0
        %2409 = vmatprep.subr.mxu0 0.0
        %2410 = vmatpush1.msra.mxu0 0.0
        %2411 = vmatprep.subr.mxu0 0.0
        %2412 = vmatpush1.msra.mxu0 0.0
        %2413 = vmatprep.subr.mxu0 0.0
        %2414 = vmatpush1.msra.mxu0 0.0
        %2415 = vmatprep.subr.mxu0 0.0
        %2416 = vmatpush1.msra.mxu0 0.0
        %2417 = vmatprep.subr.mxu0 0.0
        %2418 = vmatpush1.msra.mxu0 0.0
        %2419 = vmatprep.subr.mxu0 0.0
        %2420 = vmatpush1.msra.mxu0 0.0
        %2421 = vmatprep.subr.mxu0 0.0
        %2422 = vmatpush1.msra.mxu0 0.0
        %2423 = vmatprep.subr.mxu0 0.0
        %2424 = vmatpush1.msra.mxu0 0.0
        %2425 = vmatprep.subr.mxu0 0.0
        %2426 = vmatpush1.msra.mxu0 0.0
        %2427 = vmatprep.subr.mxu0 0.0
        %2428 = vmatpush1.msra.mxu0 0.0
        %2429 = vmatprep.subr.mxu0 0.0
        %2430 = vmatpush1.msra.mxu0 0.0
        %2431 = vmatprep.subr.mxu0 0.0
        %2432 = vmatpush1.msra.mxu0 0.0
        %2433 = vmatprep.subr.mxu0 0.0
        %2434 = vmatpush1.msra.mxu0 %v2029
        %2435 = vmatprep.subr.mxu0 0.0
        %2436 = vmatpush1.msra.mxu0 %v1961
        %2437 = vmatprep.subr.mxu0 0.0
        %2438 = vmatpush2.msra.mxu0 0.0
        %2439 = vmatprep.subr.mxu0 0.0
        %2440 = vmatpush2.msra.mxu0 0.0
        %2441 = vmatprep.subr.mxu0 0.0
        %2442 = vmatpush2.msra.mxu0 0.0
        %2443 = vmatprep.subr.mxu0 0.0
        %2444 = vmatpush2.msra.mxu0 0.0
        %2445 = vmatprep.subr.mxu0 0.0
        %2446 = vmatpush2.msra.mxu0 0.0
        %2447 = vmatprep.subr.mxu0 0.0
        %2448 = vmatpush2.msra.mxu0 0.0
        %2449 = vmatprep.subr.mxu0 0.0
        %2450 = vmatpush2.msra.mxu0 0.0
        %2451 = vmatprep.subr.mxu0 0.0
        %2452 = vmatpush2.msra.mxu0 0.0
        %2453 = vmatprep.subr.mxu0 0.0
        %2454 = vmatpush2.msra.mxu0 0.0
        %2455 = vmatprep.subr.mxu0 0.0
        %2456 = vmatpush2.msra.mxu0 0.0
        %2457 = vmatprep.subr.mxu0 0.0
        %2458 = vmatpush2.msra.mxu0 0.0
        %2459 = vmatprep.subr.mxu0 0.0
        %2460 = vmatpush2.msra.mxu0 0.0
        %2461 = vmatprep.subr.mxu0 0.0
        %2462 = vmatpush2.msra.mxu0 0.0
        %2463 = vmatprep.subr.mxu0 0.0
        %2464 = vmatpush2.msra.mxu0 0.0
        %2465 = vmatprep.subr.mxu0 0.0
        %2466 = vmatpush2.msra.mxu0 0.0
        %2467 = vmatprep.subr.mxu0 0.0
        %2468 = vmatpush2.msra.mxu0 0.0
        %2469 = vmatprep.mubr.f32.mxu0 0.0
        %2470 = vmatmul.mubr.f32.gmra.mxu0 %v2403
        %v2471 = vpop.f32.mrf.mxu0
        %v2472 = vadd.f32 0.0, %v2471
        %v2473 = vpop.f32.mrf.mxu0
        %2474 = vdwg.mxu0
        %v2476 = vsel %vm2357, %v2397, 0
        %2478 = vmatprep.subr.mxu0 0.0
        %2479 = vmatpush1.msra.mxu0 0.0
        %2480 = vmatprep.subr.mxu0 0.0
        %2481 = vmatpush1.msra.mxu0 0.0
        %2482 = vmatprep.subr.mxu0 0.0
        %2483 = vmatpush1.msra.mxu0 0.0
        %2484 = vmatprep.subr.mxu0 0.0
        %2485 = vmatpush1.msra.mxu0 0.0
        %2486 = vmatprep.subr.mxu0 0.0
        %2487 = vmatpush1.msra.mxu0 0.0
        %2488 = vmatprep.subr.mxu0 0.0
        %2489 = vmatpush1.msra.mxu0 0.0
        %2490 = vmatprep.subr.mxu0 0.0
        %2491 = vmatpush1.msra.mxu0 0.0
        %2492 = vmatprep.subr.mxu0 0.0
        %2493 = vmatpush1.msra.mxu0 0.0
        %2494 = vmatprep.subr.mxu0 0.0
        %2495 = vmatpush1.msra.mxu0 0.0
        %2496 = vmatprep.subr.mxu0 0.0
        %2497 = vmatpush1.msra.mxu0 0.0
        %2498 = vmatprep.subr.mxu0 0.0
        %2499 = vmatpush1.msra.mxu0 0.0
        %2500 = vmatprep.subr.mxu0 0.0
        %2501 = vmatpush1.msra.mxu0 0.0
        %2502 = vmatprep.subr.mxu0 0.0
        %2503 = vmatpush1.msra.mxu0 0.0
        %2504 = vmatprep.subr.mxu0 0.0
        %2505 = vmatpush1.msra.mxu0 0.0
        %2506 = vmatprep.subr.mxu0 0.0
        %2507 = vmatpush1.msra.mxu0 %v2030
        %2508 = vmatprep.subr.mxu0 0.0
        %2509 = vmatpush1.msra.mxu0 %v1962
        %2510 = vmatprep.subr.mxu0 0.0
        %2511 = vmatpush2.msra.mxu0 0.0
        %2512 = vmatprep.subr.mxu0 0.0
        %2513 = vmatpush2.msra.mxu0 0.0
        %2514 = vmatprep.subr.mxu0 0.0
        %2515 = vmatpush2.msra.mxu0 0.0
        %2516 = vmatprep.subr.mxu0 0.0
        %2517 = vmatpush2.msra.mxu0 0.0
        %2518 = vmatprep.subr.mxu0 0.0
        %2519 = vmatpush2.msra.mxu0 0.0
        %2520 = vmatprep.subr.mxu0 0.0
        %2521 = vmatpush2.msra.mxu0 0.0
        %2522 = vmatprep.subr.mxu0 0.0
        %2523 = vmatpush2.msra.mxu0 0.0
        %2524 = vmatprep.subr.mxu0 0.0
        %2525 = vmatpush2.msra.mxu0 0.0
        %2526 = vmatprep.subr.mxu0 0.0
        %2527 = vmatpush2.msra.mxu0 0.0
        %2528 = vmatprep.subr.mxu0 0.0
        %2529 = vmatpush2.msra.mxu0 0.0
        %2530 = vmatprep.subr.mxu0 0.0
        %2531 = vmatpush2.msra.mxu0 0.0
        %2532 = vmatprep.subr.mxu0 0.0
        %2533 = vmatpush2.msra.mxu0 0.0
        %2534 = vmatprep.subr.mxu0 0.0
        %2535 = vmatpush2.msra.mxu0 0.0
        %2536 = vmatprep.subr.mxu0 0.0
        %2537 = vmatpush2.msra.mxu0 0.0
        %2538 = vmatprep.subr.mxu0 0.0
        %2539 = vmatpush2.msra.mxu0 0.0
        %2540 = vmatprep.subr.mxu0 0.0
        %2541 = vmatpush2.msra.mxu0 0.0
        %2542 = vmatprep.mubr.f32.mxu0 0.0
        %2543 = vmatmul.mubr.f32.gmra.mxu0 %v2476
        %v2544 = vpop.f32.mrf.mxu0
        %v2545 = vadd.f32 0.0, %v2544
        %v2546 = vpop.f32.mrf.mxu0
        %2547 = vdwg.mxu0
        %v2549 = vsel %vm2357, %v2399, 0
        %2551 = vmatprep.subr.mxu0 0.0
        %2552 = vmatpush1.msra.mxu0 0.0
        %2553 = vmatprep.subr.mxu0 0.0
        %2554 = vmatpush1.msra.mxu0 0.0
        %2555 = vmatprep.subr.mxu0 0.0
        %2556 = vmatpush1.msra.mxu0 0.0
        %2557 = vmatprep.subr.mxu0 0.0
        %2558 = vmatpush1.msra.mxu0 0.0
        %2559 = vmatprep.subr.mxu0 0.0
        %2560 = vmatpush1.msra.mxu0 0.0
        %2561 = vmatprep.subr.mxu0 0.0
        %2562 = vmatpush1.msra.mxu0 0.0
        %2563 = vmatprep.subr.mxu0 0.0
        %2564 = vmatpush1.msra.mxu0 0.0
        %2565 = vmatprep.subr.mxu0 0.0
        %2566 = vmatpush1.msra.mxu0 0.0
        %2567 = vmatprep.subr.mxu0 0.0
        %2568 = vmatpush1.msra.mxu0 0.0
        %2569 = vmatprep.subr.mxu0 0.0
        %2570 = vmatpush1.msra.mxu0 0.0
        %2571 = vmatprep.subr.mxu0 0.0
        %2572 = vmatpush1.msra.mxu0 0.0
        %2573 = vmatprep.subr.mxu0 0.0
        %2574 = vmatpush1.msra.mxu0 0.0
        %2575 = vmatprep.subr.mxu0 0.0
        %2576 = vmatpush1.msra.mxu0 0.0
        %2577 = vmatprep.subr.mxu0 0.0
        %2578 = vmatpush1.msra.mxu0 0.0
        %2579 = vmatprep.subr.mxu0 0.0
        %2580 = vmatpush1.msra.mxu0 %v2031
        %2581 = vmatprep.subr.mxu0 0.0
        %2582 = vmatpush1.msra.mxu0 %v1963
        %2583 = vmatprep.subr.mxu0 0.0
        %2584 = vmatpush2.msra.mxu0 0.0
        %2585 = vmatprep.subr.mxu0 0.0
        %2586 = vmatpush2.msra.mxu0 0.0
        %2587 = vmatprep.subr.mxu0 0.0
        %2588 = vmatpush2.msra.mxu0 0.0
        %2589 = vmatprep.subr.mxu0 0.0
        %2590 = vmatpush2.msra.mxu0 0.0
        %2591 = vmatprep.subr.mxu0 0.0
        %2592 = vmatpush2.msra.mxu0 0.0
        %2593 = vmatprep.subr.mxu0 0.0
        %2594 = vmatpush2.msra.mxu0 0.0
        %2595 = vmatprep.subr.mxu0 0.0
        %2596 = vmatpush2.msra.mxu0 0.0
        %2597 = vmatprep.subr.mxu0 0.0
        %2598 = vmatpush2.msra.mxu0 0.0
        %2599 = vmatprep.subr.mxu0 0.0
        %2600 = vmatpush2.msra.mxu0 0.0
        %2601 = vmatprep.subr.mxu0 0.0
        %2602 = vmatpush2.msra.mxu0 0.0
        %2603 = vmatprep.subr.mxu0 0.0
        %2604 = vmatpush2.msra.mxu0 0.0
        %2605 = vmatprep.subr.mxu0 0.0
        %2606 = vmatpush2.msra.mxu0 0.0
        %2607 = vmatprep.subr.mxu0 0.0
        %2608 = vmatpush2.msra.mxu0 0.0
        %2609 = vmatprep.subr.mxu0 0.0
        %2610 = vmatpush2.msra.mxu0 0.0
        %2611 = vmatprep.subr.mxu0 0.0
        %2612 = vmatpush2.msra.mxu0 0.0
        %2613 = vmatprep.subr.mxu0 0.0
        %2614 = vmatpush2.msra.mxu0 0.0
        %2615 = vmatprep.mubr.f32.mxu0 0.0
        %2616 = vmatmul.mubr.f32.gmra.mxu0 %v2549
        %v2617 = vpop.f32.mrf.mxu0
        %v2618 = vadd.f32 0.0, %v2617
        %v2619 = vpop.f32.mrf.mxu0
        %2620 = vdwg.mxu0
        %v2622 = vsel %vm2357, %v2401, 0
        %2624 = vmatprep.subr.mxu0 0.0
        %2625 = vmatpush1.msra.mxu0 0.0
        %2626 = vmatprep.subr.mxu0 0.0
        %2627 = vmatpush1.msra.mxu0 0.0
        %2628 = vmatprep.subr.mxu0 0.0
        %2629 = vmatpush1.msra.mxu0 0.0
        %2630 = vmatprep.subr.mxu0 0.0
        %2631 = vmatpush1.msra.mxu0 0.0
        %2632 = vmatprep.subr.mxu0 0.0
        %2633 = vmatpush1.msra.mxu0 0.0
        %2634 = vmatprep.subr.mxu0 0.0
        %2635 = vmatpush1.msra.mxu0 0.0
        %2636 = vmatprep.subr.mxu0 0.0
        %2637 = vmatpush1.msra.mxu0 0.0
        %2638 = vmatprep.subr.mxu0 0.0
        %2639 = vmatpush1.msra.mxu0 0.0
        %2640 = vmatprep.subr.mxu0 0.0
        %2641 = vmatpush1.msra.mxu0 0.0
        %2642 = vmatprep.subr.mxu0 0.0
        %2643 = vmatpush1.msra.mxu0 0.0
        %2644 = vmatprep.subr.mxu0 0.0
        %2645 = vmatpush1.msra.mxu0 0.0
        %2646 = vmatprep.subr.mxu0 0.0
        %2647 = vmatpush1.msra.mxu0 0.0
        %2648 = vmatprep.subr.mxu0 0.0
        %2649 = vmatpush1.msra.mxu0 0.0
        %2650 = vmatprep.subr.mxu0 0.0
        %2651 = vmatpush1.msra.mxu0 0.0
        %2652 = vmatprep.subr.mxu0 0.0
        %2653 = vmatpush1.msra.mxu0 %v2032
        %2654 = vmatprep.subr.mxu0 0.0
        %2655 = vmatpush1.msra.mxu0 %v1964
        %2656 = vmatprep.subr.mxu0 0.0
        %2657 = vmatpush2.msra.mxu0 0.0
        %2658 = vmatprep.subr.mxu0 0.0
        %2659 = vmatpush2.msra.mxu0 0.0
        %2660 = vmatprep.subr.mxu0 0.0
        %2661 = vmatpush2.msra.mxu0 0.0
        %2662 = vmatprep.subr.mxu0 0.0
        %2663 = vmatpush2.msra.mxu0 0.0
        %2664 = vmatprep.subr.mxu0 0.0
        %2665 = vmatpush2.msra.mxu0 0.0
        %2666 = vmatprep.subr.mxu0 0.0
        %2667 = vmatpush2.msra.mxu0 0.0
        %2668 = vmatprep.subr.mxu0 0.0
        %2669 = vmatpush2.msra.mxu0 0.0
        %2670 = vmatprep.subr.mxu0 0.0
        %2671 = vmatpush2.msra.mxu0 0.0
        %2672 = vmatprep.subr.mxu0 0.0
        %2673 = vmatpush2.msra.mxu0 0.0
        %2674 = vmatprep.subr.mxu0 0.0
        %2675 = vmatpush2.msra.mxu0 0.0
        %2676 = vmatprep.subr.mxu0 0.0
        %2677 = vmatpush2.msra.mxu0 0.0
        %2678 = vmatprep.subr.mxu0 0.0
        %2679 = vmatpush2.msra.mxu0 0.0
        %2680 = vmatprep.subr.mxu0 0.0
        %2681 = vmatpush2.msra.mxu0 0.0
        %2682 = vmatprep.subr.mxu0 0.0
        %2683 = vmatpush2.msra.mxu0 0.0
        %2684 = vmatprep.subr.mxu0 0.0
        %2685 = vmatpush2.msra.mxu0 0.0
        %2686 = vmatprep.subr.mxu0 0.0
        %2687 = vmatpush2.msra.mxu0 0.0
        %2688 = vmatprep.mubr.f32.mxu0 0.0
        %2689 = vmatmul.mubr.f32.gmra.mxu0 %v2622
        %v2690 = vpop.f32.mrf.mxu0
        %v2691 = vadd.f32 0.0, %v2690
        %v2692 = vpop.f32.mrf.mxu0
        %2693 = vdwg.mxu0
        %v2694 = vcombine.low %v2472, %v2618
        %v2695 = vcombine.high %v2472, %v2618
        %v2697 = vunpack.c.l.s4 1983009808
        %v2698 = vunpack.c.0.s8 %v2697
        %v2699 = vlaneseq
        %v2700 = vshrl.u32 %v2699, 7
        %v2701 = vsub.s32 %v2698, %v2700
        %v2702 = vrot.slane %v2694, %v2701
        %v2704 = vunpack.c.l.s4 1983009808
        %v2705 = vunpack.c.0.s8 %v2704
        %v2706 = vlaneseq
        %v2707 = vshrl.u32 %v2706, 7
        %v2708 = vsub.s32 %v2705, %v2707
        %v2709 = vrot.slane %v2695, %v2708
        %v2710 = vcombine.low %v2545, %v2691
        %v2711 = vcombine.high %v2545, %v2691
        %v2713 = vunpack.c.l.s4 1983009808
        %v2714 = vunpack.c.0.s8 %v2713
        %v2715 = vlaneseq
        %v2716 = vshrl.u32 %v2715, 7
        %v2717 = vsub.s32 %v2714, %v2716
        %v2718 = vrot.slane %v2710, %v2717
        %v2720 = vunpack.c.l.s4 1983009808
        %v2721 = vunpack.c.0.s8 %v2720
        %v2722 = vlaneseq
        %v2723 = vshrl.u32 %v2722, 7
        %v2724 = vsub.s32 %v2721, %v2723
        %v2725 = vrot.slane %v2711, %v2724
        %v2726 = vcombine.low %v2702, %v2718
        %v2727 = vcombine.high %v2702, %v2718
        %v2729 = vunpack.c.l.s4 1934713408
        %v2730 = vunpack.c.0.s8 %v2729
        %v2731 = vlaneseq
        %v2732 = vshrl.u32 %v2731, 7
        %v2733 = vsub.s32 %v2730, %v2732
        %v2734 = vrot.slane %v2726, %v2733
        %v2736 = vunpack.c.l.s4 1934713408
        %v2737 = vunpack.c.0.s8 %v2736
        %v2738 = vlaneseq
        %v2739 = vshrl.u32 %v2738, 7
        %v2740 = vsub.s32 %v2737, %v2739
        %v2741 = vrot.slane %v2727, %v2740
        %v2742 = vcombine.low %v2709, %v2725
        %v2743 = vcombine.high %v2709, %v2725
        %v2745 = vunpack.c.l.s4 1934713408
        %v2746 = vunpack.c.0.s8 %v2745
        %v2747 = vlaneseq
        %v2748 = vshrl.u32 %v2747, 7
        %v2749 = vsub.s32 %v2746, %v2748
        %v2750 = vrot.slane %v2742, %v2749
        %v2752 = vunpack.c.l.s4 1934713408
        %v2753 = vunpack.c.0.s8 %v2752
        %v2754 = vlaneseq
        %v2755 = vshrl.u32 %v2754, 7
        %v2756 = vsub.s32 %v2753, %v2755
        %v2757 = vrot.slane %v2743, %v2756
        %v2758 = vcombine.high %v2734, 0.0
        %v2759 = vcombine.high %v2741, 0.0
        %v2760 = vcombine.high %v2750, 0.0
        %v2761 = vcombine.high %v2757, 0.0
        %v2762 = vcombine.low %v2734, %v2741
        %v2764 = vunpack.c.l.s4 1983009808
        %v2765 = vunpack.c.0.s8 %v2764
        %v2766 = vlaneseq
        %v2767 = vshrl.u32 %v2766, 7
        %v2768 = vsub.s32 %v2765, %v2767
        %v2769 = vrot.slane %v2762, %v2768
        %v2770 = vcombine.low %v2758, %v2759
        %v2772 = vunpack.c.l.s4 1983009808
        %v2773 = vunpack.c.0.s8 %v2772
        %v2774 = vlaneseq
        %v2775 = vshrl.u32 %v2774, 7
        %v2776 = vsub.s32 %v2773, %v2775
        %v2777 = vrot.slane %v2770, %v2776
        %v2778 = vcombine.low %v2750, %v2757
        %v2780 = vunpack.c.l.s4 1983009808
        %v2781 = vunpack.c.0.s8 %v2780
        %v2782 = vlaneseq
        %v2783 = vshrl.u32 %v2782, 7
        %v2784 = vsub.s32 %v2781, %v2783
        %v2785 = vrot.slane %v2778, %v2784
        %v2786 = vcombine.low %v2760, %v2761
        %v2788 = vunpack.c.l.s4 1983009808
        %v2789 = vunpack.c.0.s8 %v2788
        %v2790 = vlaneseq
        %v2791 = vshrl.u32 %v2790, 7
        %v2792 = vsub.s32 %v2789, %v2791
        %v2793 = vrot.slane %v2786, %v2792
        %v2794 = vcombine.low %v2769, %v2777
        %v2795 = vcombine.high %v2769, %v2777
        %v2797 = vunpack.c.l.s4 1934713408
        %v2798 = vunpack.c.0.s8 %v2797
        %v2799 = vlaneseq
        %v2800 = vshrl.u32 %v2799, 7
        %v2801 = vsub.s32 %v2798, %v2800
        %v2802 = vrot.slane %v2794, %v2801
        %v2804 = vunpack.c.l.s4 1934713408
        %v2805 = vunpack.c.0.s8 %v2804
        %v2806 = vlaneseq
        %v2807 = vshrl.u32 %v2806, 7
        %v2808 = vsub.s32 %v2805, %v2807
        %v2809 = vrot.slane %v2795, %v2808
        %v2810 = vcombine.low %v2785, %v2793
        %v2811 = vcombine.high %v2785, %v2793
        %v2813 = vunpack.c.l.s4 1934713408
        %v2814 = vunpack.c.0.s8 %v2813
        %v2815 = vlaneseq
        %v2816 = vshrl.u32 %v2815, 7
        %v2817 = vsub.s32 %v2814, %v2816
        %v2818 = vrot.slane %v2810, %v2817
        %v2820 = vunpack.c.l.s4 1934713408
        %v2821 = vunpack.c.0.s8 %v2820
        %v2822 = vlaneseq
        %v2823 = vshrl.u32 %v2822, 7
        %v2824 = vsub.s32 %v2821, %v2823
        %v2825 = vrot.slane %v2811, %v2824
        %v2826 = vcombine.low %v2802, %v2818
        %v2827 = vcombine.high %v2802, %v2818
        %v2828 = vcombine.low %v2809, %v2825
        %v2829 = vcombine.high %v2809, %v2825
        %2831 = vrot.lane.b32.xlu0 %v2827, 8
        %v2832 = vpop.permute.xlu0 %2831
        %2835 = vrot.lane.b32.xlu0 %v2828, 16
        %v2836 = vpop.permute.xlu0 %2835
        %2839 = vrot.lane.b32.xlu0 %v2829, 24
        %v2840 = vpop.permute.xlu0 %2839
        %v2842 = vsel %vm2040, %v2826, %v2832
        %v2843 = vsel %vm2357, %v2842, %v2836
        %vm2844 = vcmask 195584
        %v2845 = vsel %vm2844, %v2843, %v2840
        %2846 = vst.msk [vmem:[#allocation2] sm:$0xff] %vm613, %v2845
        %v2847 = vcombine.low %v1041, %v1048
        %v2849 = vunpack.c.l.s4 1983009808
        %v2850 = vunpack.c.0.s8 %v2849
        %v2851 = vlaneseq
        %v2852 = vshrl.u32 %v2851, 7
        %v2853 = vsub.s32 %v2850, %v2852
        %v2854 = vrot.slane %v2847, %v2853
        %v2855 = vcombine.low %v1065, %v1066
        %v2857 = vunpack.c.l.s4 1983009808
        %v2858 = vunpack.c.0.s8 %v2857
        %v2859 = vlaneseq
        %v2860 = vshrl.u32 %v2859, 7
        %v2861 = vsub.s32 %v2858, %v2860
        %v2862 = vrot.slane %v2855, %v2861
        %v2863 = vcombine.low %v1057, %v1064
        %v2865 = vunpack.c.l.s4 1983009808
        %v2866 = vunpack.c.0.s8 %v2865
        %v2867 = vlaneseq
        %v2868 = vshrl.u32 %v2867, 7
        %v2869 = vsub.s32 %v2866, %v2868
        %v2870 = vrot.slane %v2863, %v2869
        %v2871 = vcombine.low %v1067, %v1068
        %v2873 = vunpack.c.l.s4 1983009808
        %v2874 = vunpack.c.0.s8 %v2873
        %v2875 = vlaneseq
        %v2876 = vshrl.u32 %v2875, 7
        %v2877 = vsub.s32 %v2874, %v2876
        %v2878 = vrot.slane %v2871, %v2877
        %v2879 = vcombine.low %v2854, %v2862
        %v2880 = vcombine.high %v2854, %v2862
        %v2882 = vunpack.c.l.s4 1934713408
        %v2883 = vunpack.c.0.s8 %v2882
        %v2884 = vlaneseq
        %v2885 = vshrl.u32 %v2884, 7
        %v2886 = vsub.s32 %v2883, %v2885
        %v2887 = vrot.slane %v2879, %v2886
        %v2889 = vunpack.c.l.s4 1934713408
        %v2890 = vunpack.c.0.s8 %v2889
        %v2891 = vlaneseq
        %v2892 = vshrl.u32 %v2891, 7
        %v2893 = vsub.s32 %v2890, %v2892
        %v2894 = vrot.slane %v2880, %v2893
        %v2895 = vcombine.low %v2870, %v2878
        %v2896 = vcombine.high %v2870, %v2878
        %v2898 = vunpack.c.l.s4 1934713408
        %v2899 = vunpack.c.0.s8 %v2898
        %v2900 = vlaneseq
        %v2901 = vshrl.u32 %v2900, 7
        %v2902 = vsub.s32 %v2899, %v2901
        %v2903 = vrot.slane %v2895, %v2902
        %v2905 = vunpack.c.l.s4 1934713408
        %v2906 = vunpack.c.0.s8 %v2905
        %v2907 = vlaneseq
        %v2908 = vshrl.u32 %v2907, 7
        %v2909 = vsub.s32 %v2906, %v2908
        %v2910 = vrot.slane %v2896, %v2909
        %v2911 = vcombine.low %v2887, %v2903
        %v2912 = vcombine.high %v2887, %v2903
        %v2913 = vcombine.low %v2894, %v2910
        %v2914 = vcombine.high %v2894, %v2910
        %v2915 = vcombine.low %v1285, %v1292
        %v2917 = vunpack.c.l.s4 1983009808
        %v2918 = vunpack.c.0.s8 %v2917
        %v2919 = vlaneseq
        %v2920 = vshrl.u32 %v2919, 7
        %v2921 = vsub.s32 %v2918, %v2920
        %v2922 = vrot.slane %v2915, %v2921
        %v2923 = vcombine.low %v1309, %v1310
        %v2925 = vunpack.c.l.s4 1983009808
        %v2926 = vunpack.c.0.s8 %v2925
        %v2927 = vlaneseq
        %v2928 = vshrl.u32 %v2927, 7
        %v2929 = vsub.s32 %v2926, %v2928
        %v2930 = vrot.slane %v2923, %v2929
        %v2931 = vcombine.low %v1301, %v1308
        %v2933 = vunpack.c.l.s4 1983009808
        %v2934 = vunpack.c.0.s8 %v2933
        %v2935 = vlaneseq
        %v2936 = vshrl.u32 %v2935, 7
        %v2937 = vsub.s32 %v2934, %v2936
        %v2938 = vrot.slane %v2931, %v2937
        %v2939 = vcombine.low %v1311, %v1312
        %v2941 = vunpack.c.l.s4 1983009808
        %v2942 = vunpack.c.0.s8 %v2941
        %v2943 = vlaneseq
        %v2944 = vshrl.u32 %v2943, 7
        %v2945 = vsub.s32 %v2942, %v2944
        %v2946 = vrot.slane %v2939, %v2945
        %v2947 = vcombine.low %v2922, %v2930
        %v2948 = vcombine.high %v2922, %v2930
        %v2950 = vunpack.c.l.s4 1934713408
        %v2951 = vunpack.c.0.s8 %v2950
        %v2952 = vlaneseq
        %v2953 = vshrl.u32 %v2952, 7
        %v2954 = vsub.s32 %v2951, %v2953
        %v2955 = vrot.slane %v2947, %v2954
        %v2957 = vunpack.c.l.s4 1934713408
        %v2958 = vunpack.c.0.s8 %v2957
        %v2959 = vlaneseq
        %v2960 = vshrl.u32 %v2959, 7
        %v2961 = vsub.s32 %v2958, %v2960
        %v2962 = vrot.slane %v2948, %v2961
        %v2963 = vcombine.low %v2938, %v2946
        %v2964 = vcombine.high %v2938, %v2946
        %v2966 = vunpack.c.l.s4 1934713408
        %v2967 = vunpack.c.0.s8 %v2966
        %v2968 = vlaneseq
        %v2969 = vshrl.u32 %v2968, 7
        %v2970 = vsub.s32 %v2967, %v2969
        %v2971 = vrot.slane %v2963, %v2970
        %v2973 = vunpack.c.l.s4 1934713408
        %v2974 = vunpack.c.0.s8 %v2973
        %v2975 = vlaneseq
        %v2976 = vshrl.u32 %v2975, 7
        %v2977 = vsub.s32 %v2974, %v2976
        %v2978 = vrot.slane %v2964, %v2977
        %v2979 = vcombine.low %v2955, %v2971
        %v2980 = vcombine.high %v2955, %v2971
        %v2981 = vcombine.low %v2962, %v2978
        %v2982 = vcombine.high %v2962, %v2978
        %v2983 = vcombine.low %v1353, %v1360
        %v2985 = vunpack.c.l.s4 1983009808
        %v2986 = vunpack.c.0.s8 %v2985
        %v2987 = vlaneseq
        %v2988 = vshrl.u32 %v2987, 7
        %v2989 = vsub.s32 %v2986, %v2988
        %v2990 = vrot.slane %v2983, %v2989
        %v2991 = vcombine.low %v1377, %v1378
        %v2993 = vunpack.c.l.s4 1983009808
        %v2994 = vunpack.c.0.s8 %v2993
        %v2995 = vlaneseq
        %v2996 = vshrl.u32 %v2995, 7
        %v2997 = vsub.s32 %v2994, %v2996
        %v2998 = vrot.slane %v2991, %v2997
        %v2999 = vcombine.low %v1369, %v1376
        %v3001 = vunpack.c.l.s4 1983009808
        %v3002 = vunpack.c.0.s8 %v3001
        %v3003 = vlaneseq
        %v3004 = vshrl.u32 %v3003, 7
        %v3005 = vsub.s32 %v3002, %v3004
        %v3006 = vrot.slane %v2999, %v3005
        %v3007 = vcombine.low %v1379, %v1380
        %v3009 = vunpack.c.l.s4 1983009808
        %v3010 = vunpack.c.0.s8 %v3009
        %v3011 = vlaneseq
        %v3012 = vshrl.u32 %v3011, 7
        %v3013 = vsub.s32 %v3010, %v3012
        %v3014 = vrot.slane %v3007, %v3013
        %v3015 = vcombine.low %v2990, %v2998
        %v3016 = vcombine.high %v2990, %v2998
        %v3018 = vunpack.c.l.s4 1934713408
        %v3019 = vunpack.c.0.s8 %v3018
        %v3020 = vlaneseq
        %v3021 = vshrl.u32 %v3020, 7
        %v3022 = vsub.s32 %v3019, %v3021
        %v3023 = vrot.slane %v3015, %v3022
        %v3025 = vunpack.c.l.s4 1934713408
        %v3026 = vunpack.c.0.s8 %v3025
        %v3027 = vlaneseq
        %v3028 = vshrl.u32 %v3027, 7
        %v3029 = vsub.s32 %v3026, %v3028
        %v3030 = vrot.slane %v3016, %v3029
        %v3031 = vcombine.low %v3006, %v3014
        %v3032 = vcombine.high %v3006, %v3014
        %v3034 = vunpack.c.l.s4 1934713408
        %v3035 = vunpack.c.0.s8 %v3034
        %v3036 = vlaneseq
        %v3037 = vshrl.u32 %v3036, 7
        %v3038 = vsub.s32 %v3035, %v3037
        %v3039 = vrot.slane %v3031, %v3038
        %v3041 = vunpack.c.l.s4 1934713408
        %v3042 = vunpack.c.0.s8 %v3041
        %v3043 = vlaneseq
        %v3044 = vshrl.u32 %v3043, 7
        %v3045 = vsub.s32 %v3042, %v3044
        %v3046 = vrot.slane %v3032, %v3045
        %v3047 = vcombine.low %v3023, %v3039
        %v3048 = vcombine.high %v3023, %v3039
        %v3049 = vcombine.low %v3030, %v3046
        %v3050 = vcombine.high %v3030, %v3046
        %v3051 = vcombine.low %v1597, %v1604
        %v3053 = vunpack.c.l.s4 1983009808
        %v3054 = vunpack.c.0.s8 %v3053
        %v3055 = vlaneseq
        %v3056 = vshrl.u32 %v3055, 7
        %v3057 = vsub.s32 %v3054, %v3056
        %v3058 = vrot.slane %v3051, %v3057
        %v3059 = vcombine.low %v1621, %v1622
        %v3061 = vunpack.c.l.s4 1983009808
        %v3062 = vunpack.c.0.s8 %v3061
        %v3063 = vlaneseq
        %v3064 = vshrl.u32 %v3063, 7
        %v3065 = vsub.s32 %v3062, %v3064
        %v3066 = vrot.slane %v3059, %v3065
        %v3067 = vcombine.low %v1613, %v1620
        %v3069 = vunpack.c.l.s4 1983009808
        %v3070 = vunpack.c.0.s8 %v3069
        %v3071 = vlaneseq
        %v3072 = vshrl.u32 %v3071, 7
        %v3073 = vsub.s32 %v3070, %v3072
        %v3074 = vrot.slane %v3067, %v3073
        %v3075 = vcombine.low %v1623, %v1624
        %v3077 = vunpack.c.l.s4 1983009808
        %v3078 = vunpack.c.0.s8 %v3077
        %v3079 = vlaneseq
        %v3080 = vshrl.u32 %v3079, 7
        %v3081 = vsub.s32 %v3078, %v3080
        %v3082 = vrot.slane %v3075, %v3081
        %v3083 = vcombine.low %v3058, %v3066
        %v3084 = vcombine.high %v3058, %v3066
        %v3086 = vunpack.c.l.s4 1934713408
        %v3087 = vunpack.c.0.s8 %v3086
        %v3088 = vlaneseq
        %v3089 = vshrl.u32 %v3088, 7
        %v3090 = vsub.s32 %v3087, %v3089
        %v3091 = vrot.slane %v3083, %v3090
        %v3093 = vunpack.c.l.s4 1934713408
        %v3094 = vunpack.c.0.s8 %v3093
        %v3095 = vlaneseq
        %v3096 = vshrl.u32 %v3095, 7
        %v3097 = vsub.s32 %v3094, %v3096
        %v3098 = vrot.slane %v3084, %v3097
        %v3099 = vcombine.low %v3074, %v3082
        %v3100 = vcombine.high %v3074, %v3082
        %v3102 = vunpack.c.l.s4 1934713408
        %v3103 = vunpack.c.0.s8 %v3102
        %v3104 = vlaneseq
        %v3105 = vshrl.u32 %v3104, 7
        %v3106 = vsub.s32 %v3103, %v3105
        %v3107 = vrot.slane %v3099, %v3106
        %v3109 = vunpack.c.l.s4 1934713408
        %v3110 = vunpack.c.0.s8 %v3109
        %v3111 = vlaneseq
        %v3112 = vshrl.u32 %v3111, 7
        %v3113 = vsub.s32 %v3110, %v3112
        %v3114 = vrot.slane %v3100, %v3113
        %v3115 = vcombine.low %v3091, %v3107
        %v3116 = vcombine.high %v3091, %v3107
        %v3117 = vcombine.low %v3098, %v3114
        %v3118 = vcombine.high %v3098, %v3114
        %v3119 = vcombine.low %v1665, %v1672
        %v3121 = vunpack.c.l.s4 1983009808
        %v3122 = vunpack.c.0.s8 %v3121
        %v3123 = vlaneseq
        %v3124 = vshrl.u32 %v3123, 7
        %v3125 = vsub.s32 %v3122, %v3124
        %v3126 = vrot.slane %v3119, %v3125
        %v3127 = vcombine.low %v1689, %v1690
        %v3129 = vunpack.c.l.s4 1983009808
        %v3130 = vunpack.c.0.s8 %v3129
        %v3131 = vlaneseq
        %v3132 = vshrl.u32 %v3131, 7
        %v3133 = vsub.s32 %v3130, %v3132
        %v3134 = vrot.slane %v3127, %v3133
        %v3135 = vcombine.low %v1681, %v1688
        %v3137 = vunpack.c.l.s4 1983009808
        %v3138 = vunpack.c.0.s8 %v3137
        %v3139 = vlaneseq
        %v3140 = vshrl.u32 %v3139, 7
        %v3141 = vsub.s32 %v3138, %v3140
        %v3142 = vrot.slane %v3135, %v3141
        %v3143 = vcombine.low %v1691, %v1692
        %v3145 = vunpack.c.l.s4 1983009808
        %v3146 = vunpack.c.0.s8 %v3145
        %v3147 = vlaneseq
        %v3148 = vshrl.u32 %v3147, 7
        %v3149 = vsub.s32 %v3146, %v3148
        %v3150 = vrot.slane %v3143, %v3149
        %v3151 = vcombine.low %v3126, %v3134
        %v3152 = vcombine.high %v3126, %v3134
        %v3154 = vunpack.c.l.s4 1934713408
        %v3155 = vunpack.c.0.s8 %v3154
        %v3156 = vlaneseq
        %v3157 = vshrl.u32 %v3156, 7
        %v3158 = vsub.s32 %v3155, %v3157
        %v3159 = vrot.slane %v3151, %v3158
        %v3161 = vunpack.c.l.s4 1934713408
        %v3162 = vunpack.c.0.s8 %v3161
        %v3163 = vlaneseq
        %v3164 = vshrl.u32 %v3163, 7
        %v3165 = vsub.s32 %v3162, %v3164
        %v3166 = vrot.slane %v3152, %v3165
        %v3167 = vcombine.low %v3142, %v3150
        %v3168 = vcombine.high %v3142, %v3150
        %v3170 = vunpack.c.l.s4 1934713408
        %v3171 = vunpack.c.0.s8 %v3170
        %v3172 = vlaneseq
        %v3173 = vshrl.u32 %v3172, 7
        %v3174 = vsub.s32 %v3171, %v3173
        %v3175 = vrot.slane %v3167, %v3174
        %v3177 = vunpack.c.l.s4 1934713408
        %v3178 = vunpack.c.0.s8 %v3177
        %v3179 = vlaneseq
        %v3180 = vshrl.u32 %v3179, 7
        %v3181 = vsub.s32 %v3178, %v3180
        %v3182 = vrot.slane %v3168, %v3181
        %v3183 = vcombine.low %v3159, %v3175
        %v3184 = vcombine.high %v3159, %v3175
        %v3185 = vcombine.low %v3166, %v3182
        %v3186 = vcombine.high %v3166, %v3182
        %s3187 = scalar_lea.vmem %s589, 1
        %v3188 = vld [vmem:[%s3187] sm:$0x1]
        %v3190 = vlaneseq
        %v3191 = vshrl.u32 %v3190, 7
        %v3192 = vsub.s32 0, %v3191
        %v3193 = vrot.slane %v3188, %v3192
        %v3196 = vsel %vm2040, %v2911, 0
        %v3199 = vsel %vm2040, %v2979, 0
        %v3202 = vsel %vm2040, %v3047, 0
        %3204 = vmatprep.subr.mxu0 0.0
        %3205 = vmatpush1.xpose.msra.mxu0 0.0
        %3206 = vmatprep.subr.mxu0 0.0
        %3207 = vmatpush1.xpose.msra.mxu0 0.0
        %3208 = vmatprep.subr.mxu0 0.0
        %3209 = vmatpush1.xpose.msra.mxu0 0.0
        %3210 = vmatprep.subr.mxu0 0.0
        %3211 = vmatpush1.xpose.msra.mxu0 0.0
        %3212 = vmatprep.subr.mxu0 0.0
        %3213 = vmatpush1.xpose.msra.mxu0 0.0
        %3214 = vmatprep.subr.mxu0 0.0
        %3215 = vmatpush1.xpose.msra.mxu0 0.0
        %3216 = vmatprep.subr.mxu0 0.0
        %3217 = vmatpush1.xpose.msra.mxu0 0.0
        %3218 = vmatprep.subr.mxu0 0.0
        %3219 = vmatpush1.xpose.msra.mxu0 0.0
        %3220 = vmatprep.subr.mxu0 0.0
        %3221 = vmatpush1.xpose.msra.mxu0 0.0
        %3222 = vmatprep.subr.mxu0 0.0
        %3223 = vmatpush1.xpose.msra.mxu0 0.0
        %3224 = vmatprep.subr.mxu0 0.0
        %3225 = vmatpush1.xpose.msra.mxu0 0.0
        %3226 = vmatprep.subr.mxu0 0.0
        %3227 = vmatpush1.xpose.msra.mxu0 0.0
        %3228 = vmatprep.subr.mxu0 0.0
        %3229 = vmatpush1.xpose.msra.mxu0 0.0
        %3230 = vmatprep.subr.mxu0 0.0
        %3231 = vmatpush1.xpose.msra.mxu0 0.0
        %3232 = vmatprep.subr.mxu0 0.0
        %3233 = vmatpush1.xpose.msra.mxu0 %v3202
        %3234 = vmatprep.subr.mxu0 0.0
        %3235 = vmatpush1.xpose.msra.mxu0 %v3199
        %3236 = vmatprep.subr.mxu0 0.0
        %3237 = vmatpush2.xpose.msra.mxu0 0.0
        %3238 = vmatprep.subr.mxu0 0.0
        %3239 = vmatpush2.xpose.msra.mxu0 0.0
        %3240 = vmatprep.subr.mxu0 0.0
        %3241 = vmatpush2.xpose.msra.mxu0 0.0
        %3242 = vmatprep.subr.mxu0 0.0
        %3243 = vmatpush2.xpose.msra.mxu0 0.0
        %3244 = vmatprep.subr.mxu0 0.0
        %3245 = vmatpush2.xpose.msra.mxu0 0.0
        %3246 = vmatprep.subr.mxu0 0.0
        %3247 = vmatpush2.xpose.msra.mxu0 0.0
        %3248 = vmatprep.subr.mxu0 0.0
        %3249 = vmatpush2.xpose.msra.mxu0 0.0
        %3250 = vmatprep.subr.mxu0 0.0
        %3251 = vmatpush2.xpose.msra.mxu0 0.0
        %3252 = vmatprep.subr.mxu0 0.0
        %3253 = vmatpush2.xpose.msra.mxu0 0.0
        %3254 = vmatprep.subr.mxu0 0.0
        %3255 = vmatpush2.xpose.msra.mxu0 0.0
        %3256 = vmatprep.subr.mxu0 0.0
        %3257 = vmatpush2.xpose.msra.mxu0 0.0
        %3258 = vmatprep.subr.mxu0 0.0
        %3259 = vmatpush2.xpose.msra.mxu0 0.0
        %3260 = vmatprep.subr.mxu0 0.0
        %3261 = vmatpush2.xpose.msra.mxu0 0.0
        %3262 = vmatprep.subr.mxu0 0.0
        %3263 = vmatpush2.xpose.msra.mxu0 0.0
        %3264 = vmatprep.subr.mxu0 0.0
        %3265 = vmatpush2.xpose.msra.mxu0 0.0
        %3266 = vmatprep.subr.mxu0 0.0
        %3267 = vmatpush2.xpose.msra.mxu0 0.0
        %3268 = vmatprep.mubr.f32.mxu0 0.0
        %3269 = vmatmul.mubr.f32.gmra.mxu0 %v3196
        %v3270 = vpop.f32.mrf.mxu0
        %v3271 = vadd.f32 %v3193, %v3270
        %v3272 = vpop.f32.mrf.mxu0
        %3273 = vdwg.mxu0
        %v3275 = vsel %vm2040, %v2912, 0
        %v3278 = vsel %vm2040, %v2980, 0
        %v3281 = vsel %vm2040, %v3048, 0
        %3283 = vmatprep.subr.mxu0 0.0
        %3284 = vmatpush1.xpose.msra.mxu0 0.0
        %3285 = vmatprep.subr.mxu0 0.0
        %3286 = vmatpush1.xpose.msra.mxu0 0.0
        %3287 = vmatprep.subr.mxu0 0.0
        %3288 = vmatpush1.xpose.msra.mxu0 0.0
        %3289 = vmatprep.subr.mxu0 0.0
        %3290 = vmatpush1.xpose.msra.mxu0 0.0
        %3291 = vmatprep.subr.mxu0 0.0
        %3292 = vmatpush1.xpose.msra.mxu0 0.0
        %3293 = vmatprep.subr.mxu0 0.0
        %3294 = vmatpush1.xpose.msra.mxu0 0.0
        %3295 = vmatprep.subr.mxu0 0.0
        %3296 = vmatpush1.xpose.msra.mxu0 0.0
        %3297 = vmatprep.subr.mxu0 0.0
        %3298 = vmatpush1.xpose.msra.mxu0 0.0
        %3299 = vmatprep.subr.mxu0 0.0
        %3300 = vmatpush1.xpose.msra.mxu0 0.0
        %3301 = vmatprep.subr.mxu0 0.0
        %3302 = vmatpush1.xpose.msra.mxu0 0.0
        %3303 = vmatprep.subr.mxu0 0.0
        %3304 = vmatpush1.xpose.msra.mxu0 0.0
        %3305 = vmatprep.subr.mxu0 0.0
        %3306 = vmatpush1.xpose.msra.mxu0 0.0
        %3307 = vmatprep.subr.mxu0 0.0
        %3308 = vmatpush1.xpose.msra.mxu0 0.0
        %3309 = vmatprep.subr.mxu0 0.0
        %3310 = vmatpush1.xpose.msra.mxu0 0.0
        %3311 = vmatprep.subr.mxu0 0.0
        %3312 = vmatpush1.xpose.msra.mxu0 %v3281
        %3313 = vmatprep.subr.mxu0 0.0
        %3314 = vmatpush1.xpose.msra.mxu0 %v3278
        %3315 = vmatprep.subr.mxu0 0.0
        %3316 = vmatpush2.xpose.msra.mxu0 0.0
        %3317 = vmatprep.subr.mxu0 0.0
        %3318 = vmatpush2.xpose.msra.mxu0 0.0
        %3319 = vmatprep.subr.mxu0 0.0
        %3320 = vmatpush2.xpose.msra.mxu0 0.0
        %3321 = vmatprep.subr.mxu0 0.0
        %3322 = vmatpush2.xpose.msra.mxu0 0.0
        %3323 = vmatprep.subr.mxu0 0.0
        %3324 = vmatpush2.xpose.msra.mxu0 0.0
        %3325 = vmatprep.subr.mxu0 0.0
        %3326 = vmatpush2.xpose.msra.mxu0 0.0
        %3327 = vmatprep.subr.mxu0 0.0
        %3328 = vmatpush2.xpose.msra.mxu0 0.0
        %3329 = vmatprep.subr.mxu0 0.0
        %3330 = vmatpush2.xpose.msra.mxu0 0.0
        %3331 = vmatprep.subr.mxu0 0.0
        %3332 = vmatpush2.xpose.msra.mxu0 0.0
        %3333 = vmatprep.subr.mxu0 0.0
        %3334 = vmatpush2.xpose.msra.mxu0 0.0
        %3335 = vmatprep.subr.mxu0 0.0
        %3336 = vmatpush2.xpose.msra.mxu0 0.0
        %3337 = vmatprep.subr.mxu0 0.0
        %3338 = vmatpush2.xpose.msra.mxu0 0.0
        %3339 = vmatprep.subr.mxu0 0.0
        %3340 = vmatpush2.xpose.msra.mxu0 0.0
        %3341 = vmatprep.subr.mxu0 0.0
        %3342 = vmatpush2.xpose.msra.mxu0 0.0
        %3343 = vmatprep.subr.mxu0 0.0
        %3344 = vmatpush2.xpose.msra.mxu0 0.0
        %3345 = vmatprep.subr.mxu0 0.0
        %3346 = vmatpush2.xpose.msra.mxu0 0.0
        %3347 = vmatprep.mubr.f32.mxu0 0.0
        %3348 = vmatmul.mubr.f32.gmra.mxu0 %v3275
        %v3349 = vpop.f32.mrf.mxu0
        %v3350 = vadd.f32 %v3193, %v3349
        %v3351 = vpop.f32.mrf.mxu0
        %3352 = vdwg.mxu0
        %v3354 = vsel %vm2040, %v2913, 0
        %v3357 = vsel %vm2040, %v2981, 0
        %v3360 = vsel %vm2040, %v3049, 0
        %3362 = vmatprep.subr.mxu0 0.0
        %3363 = vmatpush1.xpose.msra.mxu0 0.0
        %3364 = vmatprep.subr.mxu0 0.0
        %3365 = vmatpush1.xpose.msra.mxu0 0.0
        %3366 = vmatprep.subr.mxu0 0.0
        %3367 = vmatpush1.xpose.msra.mxu0 0.0
        %3368 = vmatprep.subr.mxu0 0.0
        %3369 = vmatpush1.xpose.msra.mxu0 0.0
        %3370 = vmatprep.subr.mxu0 0.0
        %3371 = vmatpush1.xpose.msra.mxu0 0.0
        %3372 = vmatprep.subr.mxu0 0.0
        %3373 = vmatpush1.xpose.msra.mxu0 0.0
        %3374 = vmatprep.subr.mxu0 0.0
        %3375 = vmatpush1.xpose.msra.mxu0 0.0
        %3376 = vmatprep.subr.mxu0 0.0
        %3377 = vmatpush1.xpose.msra.mxu0 0.0
        %3378 = vmatprep.subr.mxu0 0.0
        %3379 = vmatpush1.xpose.msra.mxu0 0.0
        %3380 = vmatprep.subr.mxu0 0.0
        %3381 = vmatpush1.xpose.msra.mxu0 0.0
        %3382 = vmatprep.subr.mxu0 0.0
        %3383 = vmatpush1.xpose.msra.mxu0 0.0
        %3384 = vmatprep.subr.mxu0 0.0
        %3385 = vmatpush1.xpose.msra.mxu0 0.0
        %3386 = vmatprep.subr.mxu0 0.0
        %3387 = vmatpush1.xpose.msra.mxu0 0.0
        %3388 = vmatprep.subr.mxu0 0.0
        %3389 = vmatpush1.xpose.msra.mxu0 0.0
        %3390 = vmatprep.subr.mxu0 0.0
        %3391 = vmatpush1.xpose.msra.mxu0 %v3360
        %3392 = vmatprep.subr.mxu0 0.0
        %3393 = vmatpush1.xpose.msra.mxu0 %v3357
        %3394 = vmatprep.subr.mxu0 0.0
        %3395 = vmatpush2.xpose.msra.mxu0 0.0
        %3396 = vmatprep.subr.mxu0 0.0
        %3397 = vmatpush2.xpose.msra.mxu0 0.0
        %3398 = vmatprep.subr.mxu0 0.0
        %3399 = vmatpush2.xpose.msra.mxu0 0.0
        %3400 = vmatprep.subr.mxu0 0.0
        %3401 = vmatpush2.xpose.msra.mxu0 0.0
        %3402 = vmatprep.subr.mxu0 0.0
        %3403 = vmatpush2.xpose.msra.mxu0 0.0
        %3404 = vmatprep.subr.mxu0 0.0
        %3405 = vmatpush2.xpose.msra.mxu0 0.0
        %3406 = vmatprep.subr.mxu0 0.0
        %3407 = vmatpush2.xpose.msra.mxu0 0.0
        %3408 = vmatprep.subr.mxu0 0.0
        %3409 = vmatpush2.xpose.msra.mxu0 0.0
        %3410 = vmatprep.subr.mxu0 0.0
        %3411 = vmatpush2.xpose.msra.mxu0 0.0
        %3412 = vmatprep.subr.mxu0 0.0
        %3413 = vmatpush2.xpose.msra.mxu0 0.0
        %3414 = vmatprep.subr.mxu0 0.0
        %3415 = vmatpush2.xpose.msra.mxu0 0.0
        %3416 = vmatprep.subr.mxu0 0.0
        %3417 = vmatpush2.xpose.msra.mxu0 0.0
        %3418 = vmatprep.subr.mxu0 0.0
        %3419 = vmatpush2.xpose.msra.mxu0 0.0
        %3420 = vmatprep.subr.mxu0 0.0
        %3421 = vmatpush2.xpose.msra.mxu0 0.0
        %3422 = vmatprep.subr.mxu0 0.0
        %3423 = vmatpush2.xpose.msra.mxu0 0.0
        %3424 = vmatprep.subr.mxu0 0.0
        %3425 = vmatpush2.xpose.msra.mxu0 0.0
        %3426 = vmatprep.mubr.f32.mxu0 0.0
        %3427 = vmatmul.mubr.f32.gmra.mxu0 %v3354
        %v3428 = vpop.f32.mrf.mxu0
        %v3429 = vadd.f32 %v3193, %v3428
        %v3430 = vpop.f32.mrf.mxu0
        %3431 = vdwg.mxu0
        %v3433 = vsel %vm2040, %v2914, 0
        %v3436 = vsel %vm2040, %v2982, 0
        %v3439 = vsel %vm2040, %v3050, 0
        %3441 = vmatprep.subr.mxu0 0.0
        %3442 = vmatpush1.xpose.msra.mxu0 0.0
        %3443 = vmatprep.subr.mxu0 0.0
        %3444 = vmatpush1.xpose.msra.mxu0 0.0
        %3445 = vmatprep.subr.mxu0 0.0
        %3446 = vmatpush1.xpose.msra.mxu0 0.0
        %3447 = vmatprep.subr.mxu0 0.0
        %3448 = vmatpush1.xpose.msra.mxu0 0.0
        %3449 = vmatprep.subr.mxu0 0.0
        %3450 = vmatpush1.xpose.msra.mxu0 0.0
        %3451 = vmatprep.subr.mxu0 0.0
        %3452 = vmatpush1.xpose.msra.mxu0 0.0
        %3453 = vmatprep.subr.mxu0 0.0
        %3454 = vmatpush1.xpose.msra.mxu0 0.0
        %3455 = vmatprep.subr.mxu0 0.0
        %3456 = vmatpush1.xpose.msra.mxu0 0.0
        %3457 = vmatprep.subr.mxu0 0.0
        %3458 = vmatpush1.xpose.msra.mxu0 0.0
        %3459 = vmatprep.subr.mxu0 0.0
        %3460 = vmatpush1.xpose.msra.mxu0 0.0
        %3461 = vmatprep.subr.mxu0 0.0
        %3462 = vmatpush1.xpose.msra.mxu0 0.0
        %3463 = vmatprep.subr.mxu0 0.0
        %3464 = vmatpush1.xpose.msra.mxu0 0.0
        %3465 = vmatprep.subr.mxu0 0.0
        %3466 = vmatpush1.xpose.msra.mxu0 0.0
        %3467 = vmatprep.subr.mxu0 0.0
        %3468 = vmatpush1.xpose.msra.mxu0 0.0
        %3469 = vmatprep.subr.mxu0 0.0
        %3470 = vmatpush1.xpose.msra.mxu0 %v3439
        %3471 = vmatprep.subr.mxu0 0.0
        %3472 = vmatpush1.xpose.msra.mxu0 %v3436
        %3473 = vmatprep.subr.mxu0 0.0
        %3474 = vmatpush2.xpose.msra.mxu0 0.0
        %3475 = vmatprep.subr.mxu0 0.0
        %3476 = vmatpush2.xpose.msra.mxu0 0.0
        %3477 = vmatprep.subr.mxu0 0.0
        %3478 = vmatpush2.xpose.msra.mxu0 0.0
        %3479 = vmatprep.subr.mxu0 0.0
        %3480 = vmatpush2.xpose.msra.mxu0 0.0
        %3481 = vmatprep.subr.mxu0 0.0
        %3482 = vmatpush2.xpose.msra.mxu0 0.0
        %3483 = vmatprep.subr.mxu0 0.0
        %3484 = vmatpush2.xpose.msra.mxu0 0.0
        %3485 = vmatprep.subr.mxu0 0.0
        %3486 = vmatpush2.xpose.msra.mxu0 0.0
        %3487 = vmatprep.subr.mxu0 0.0
        %3488 = vmatpush2.xpose.msra.mxu0 0.0
        %3489 = vmatprep.subr.mxu0 0.0
        %3490 = vmatpush2.xpose.msra.mxu0 0.0
        %3491 = vmatprep.subr.mxu0 0.0
        %3492 = vmatpush2.xpose.msra.mxu0 0.0
        %3493 = vmatprep.subr.mxu0 0.0
        %3494 = vmatpush2.xpose.msra.mxu0 0.0
        %3495 = vmatprep.subr.mxu0 0.0
        %3496 = vmatpush2.xpose.msra.mxu0 0.0
        %3497 = vmatprep.subr.mxu0 0.0
        %3498 = vmatpush2.xpose.msra.mxu0 0.0
        %3499 = vmatprep.subr.mxu0 0.0
        %3500 = vmatpush2.xpose.msra.mxu0 0.0
        %3501 = vmatprep.subr.mxu0 0.0
        %3502 = vmatpush2.xpose.msra.mxu0 0.0
        %3503 = vmatprep.subr.mxu0 0.0
        %3504 = vmatpush2.xpose.msra.mxu0 0.0
        %3505 = vmatprep.mubr.f32.mxu0 0.0
        %3506 = vmatmul.mubr.f32.gmra.mxu0 %v3433
        %v3507 = vpop.f32.mrf.mxu0
        %v3508 = vadd.f32 %v3193, %v3507
        %v3509 = vpop.f32.mrf.mxu0
        %3510 = vdwg.mxu0
        %v3511 = vsel %vm2357, %v3271, -inf
        %3512 = vmax.xlane.f32.xlu0 %v3511
        %v3513 = vpop.xlane.xlu0 %3512
        %v3514 = vsel %vm2357, %v3350, -inf
        %3515 = vmax.xlane.f32.xlu0 %v3514
        %v3516 = vpop.xlane.xlu0 %3515
        %v3517 = vsel %vm2357, %v3429, -inf
        %3518 = vmax.xlane.f32.xlu0 %v3517
        %v3519 = vpop.xlane.xlu0 %3518
        %v3520 = vsel %vm2357, %v3508, -inf
        %3521 = vmax.xlane.f32.xlu0 %v3520
        %v3522 = vpop.xlane.xlu0 %3521
        %v3523 = vsub.f32 %v3271, %v3513
        %v3524 = vsub.f32 %v3350, %v3516
        %v3525 = vsub.f32 %v3429, %v3519
        %v3526 = vsub.f32 %v3508, %v3522
        %v3527 = vmul.f32 %v3523, 1.442695
        %v3528 = vpow.pop %v3527
        %v3529 = vmul.f32 %v3524, 1.442695
        %v3530 = vpow.pop %v3529
        %v3531 = vmul.f32 %v3525, 1.442695
        %v3532 = vpow.pop %v3531
        %v3533 = vmul.f32 %v3526, 1.442695
        %v3534 = vpow.pop %v3533
        %v3535 = vsel %vm2357, %v3528, 0.0
        %3536 = vadd.xlane.f32.xlu0 %v3535
        %v3537 = vpop.xlane.xlu0 %3536
        %v3538 = vsel %vm2357, %v3530, 0.0
        %3539 = vadd.xlane.f32.xlu0 %v3538
        %v3540 = vpop.xlane.xlu0 %3539
        %v3541 = vsel %vm2357, %v3532, 0.0
        %3542 = vadd.xlane.f32.xlu0 %v3541
        %v3543 = vpop.xlane.xlu0 %3542
        %v3544 = vsel %vm2357, %v3534, 0.0
        %3545 = vadd.xlane.f32.xlu0 %v3544
        %v3546 = vpop.xlane.xlu0 %3545
        %v3547 = vrcp.pop %v3537
        %v3548 = vmul.f32 %v3528, %v3547
        %v3549 = vrcp.pop %v3540
        %v3550 = vmul.f32 %v3530, %v3549
        %v3551 = vrcp.pop %v3543
        %v3552 = vmul.f32 %v3532, %v3551
        %v3553 = vrcp.pop %v3546
        %v3554 = vmul.f32 %v3534, %v3553
        %v3556 = vsel %vm2357, %v3548, 0
        %3558 = vmatprep.subr.mxu0 0.0
        %3559 = vmatpush1.msra.mxu0 0.0
        %3560 = vmatprep.subr.mxu0 0.0
        %3561 = vmatpush1.msra.mxu0 0.0
        %3562 = vmatprep.subr.mxu0 0.0
        %3563 = vmatpush1.msra.mxu0 0.0
        %3564 = vmatprep.subr.mxu0 0.0
        %3565 = vmatpush1.msra.mxu0 0.0
        %3566 = vmatprep.subr.mxu0 0.0
        %3567 = vmatpush1.msra.mxu0 0.0
        %3568 = vmatprep.subr.mxu0 0.0
        %3569 = vmatpush1.msra.mxu0 0.0
        %3570 = vmatprep.subr.mxu0 0.0
        %3571 = vmatpush1.msra.mxu0 0.0
        %3572 = vmatprep.subr.mxu0 0.0
        %3573 = vmatpush1.msra.mxu0 0.0
        %3574 = vmatprep.subr.mxu0 0.0
        %3575 = vmatpush1.msra.mxu0 0.0
        %3576 = vmatprep.subr.mxu0 0.0
        %3577 = vmatpush1.msra.mxu0 0.0
        %3578 = vmatprep.subr.mxu0 0.0
        %3579 = vmatpush1.msra.mxu0 0.0
        %3580 = vmatprep.subr.mxu0 0.0
        %3581 = vmatpush1.msra.mxu0 0.0
        %3582 = vmatprep.subr.mxu0 0.0
        %3583 = vmatpush1.msra.mxu0 0.0
        %3584 = vmatprep.subr.mxu0 0.0
        %3585 = vmatpush1.msra.mxu0 0.0
        %3586 = vmatprep.subr.mxu0 0.0
        %3587 = vmatpush1.msra.mxu0 %v3183
        %3588 = vmatprep.subr.mxu0 0.0
        %3589 = vmatpush1.msra.mxu0 %v3115
        %3590 = vmatprep.subr.mxu0 0.0
        %3591 = vmatpush2.msra.mxu0 0.0
        %3592 = vmatprep.subr.mxu0 0.0
        %3593 = vmatpush2.msra.mxu0 0.0
        %3594 = vmatprep.subr.mxu0 0.0
        %3595 = vmatpush2.msra.mxu0 0.0
        %3596 = vmatprep.subr.mxu0 0.0
        %3597 = vmatpush2.msra.mxu0 0.0
        %3598 = vmatprep.subr.mxu0 0.0
        %3599 = vmatpush2.msra.mxu0 0.0
        %3600 = vmatprep.subr.mxu0 0.0
        %3601 = vmatpush2.msra.mxu0 0.0
        %3602 = vmatprep.subr.mxu0 0.0
        %3603 = vmatpush2.msra.mxu0 0.0
        %3604 = vmatprep.subr.mxu0 0.0
        %3605 = vmatpush2.msra.mxu0 0.0
        %3606 = vmatprep.subr.mxu0 0.0
        %3607 = vmatpush2.msra.mxu0 0.0
        %3608 = vmatprep.subr.mxu0 0.0
        %3609 = vmatpush2.msra.mxu0 0.0
        %3610 = vmatprep.subr.mxu0 0.0
        %3611 = vmatpush2.msra.mxu0 0.0
        %3612 = vmatprep.subr.mxu0 0.0
        %3613 = vmatpush2.msra.mxu0 0.0
        %3614 = vmatprep.subr.mxu0 0.0
        %3615 = vmatpush2.msra.mxu0 0.0
        %3616 = vmatprep.subr.mxu0 0.0
        %3617 = vmatpush2.msra.mxu0 0.0
        %3618 = vmatprep.subr.mxu0 0.0
        %3619 = vmatpush2.msra.mxu0 0.0
        %3620 = vmatprep.subr.mxu0 0.0
        %3621 = vmatpush2.msra.mxu0 0.0
        %3622 = vmatprep.mubr.f32.mxu0 0.0
        %3623 = vmatmul.mubr.f32.gmra.mxu0 %v3556
        %v3624 = vpop.f32.mrf.mxu0
        %v3625 = vadd.f32 0.0, %v3624
        %v3626 = vpop.f32.mrf.mxu0
        %3627 = vdwg.mxu0
        %v3629 = vsel %vm2357, %v3550, 0
        %3631 = vmatprep.subr.mxu0 0.0
        %3632 = vmatpush1.msra.mxu0 0.0
        %3633 = vmatprep.subr.mxu0 0.0
        %3634 = vmatpush1.msra.mxu0 0.0
        %3635 = vmatprep.subr.mxu0 0.0
        %3636 = vmatpush1.msra.mxu0 0.0
        %3637 = vmatprep.subr.mxu0 0.0
        %3638 = vmatpush1.msra.mxu0 0.0
        %3639 = vmatprep.subr.mxu0 0.0
        %3640 = vmatpush1.msra.mxu0 0.0
        %3641 = vmatprep.subr.mxu0 0.0
        %3642 = vmatpush1.msra.mxu0 0.0
        %3643 = vmatprep.subr.mxu0 0.0
        %3644 = vmatpush1.msra.mxu0 0.0
        %3645 = vmatprep.subr.mxu0 0.0
        %3646 = vmatpush1.msra.mxu0 0.0
        %3647 = vmatprep.subr.mxu0 0.0
        %3648 = vmatpush1.msra.mxu0 0.0
        %3649 = vmatprep.subr.mxu0 0.0
        %3650 = vmatpush1.msra.mxu0 0.0
        %3651 = vmatprep.subr.mxu0 0.0
        %3652 = vmatpush1.msra.mxu0 0.0
        %3653 = vmatprep.subr.mxu0 0.0
        %3654 = vmatpush1.msra.mxu0 0.0
        %3655 = vmatprep.subr.mxu0 0.0
        %3656 = vmatpush1.msra.mxu0 0.0
        %3657 = vmatprep.subr.mxu0 0.0
        %3658 = vmatpush1.msra.mxu0 0.0
        %3659 = vmatprep.subr.mxu0 0.0
        %3660 = vmatpush1.msra.mxu0 %v3184
        %3661 = vmatprep.subr.mxu0 0.0
        %3662 = vmatpush1.msra.mxu0 %v3116
        %3663 = vmatprep.subr.mxu0 0.0
        %3664 = vmatpush2.msra.mxu0 0.0
        %3665 = vmatprep.subr.mxu0 0.0
        %3666 = vmatpush2.msra.mxu0 0.0
        %3667 = vmatprep.subr.mxu0 0.0
        %3668 = vmatpush2.msra.mxu0 0.0
        %3669 = vmatprep.subr.mxu0 0.0
        %3670 = vmatpush2.msra.mxu0 0.0
        %3671 = vmatprep.subr.mxu0 0.0
        %3672 = vmatpush2.msra.mxu0 0.0
        %3673 = vmatprep.subr.mxu0 0.0
        %3674 = vmatpush2.msra.mxu0 0.0
        %3675 = vmatprep.subr.mxu0 0.0
        %3676 = vmatpush2.msra.mxu0 0.0
        %3677 = vmatprep.subr.mxu0 0.0
        %3678 = vmatpush2.msra.mxu0 0.0
        %3679 = vmatprep.subr.mxu0 0.0
        %3680 = vmatpush2.msra.mxu0 0.0
        %3681 = vmatprep.subr.mxu0 0.0
        %3682 = vmatpush2.msra.mxu0 0.0
        %3683 = vmatprep.subr.mxu0 0.0
        %3684 = vmatpush2.msra.mxu0 0.0
        %3685 = vmatprep.subr.mxu0 0.0
        %3686 = vmatpush2.msra.mxu0 0.0
        %3687 = vmatprep.subr.mxu0 0.0
        %3688 = vmatpush2.msra.mxu0 0.0
        %3689 = vmatprep.subr.mxu0 0.0
        %3690 = vmatpush2.msra.mxu0 0.0
        %3691 = vmatprep.subr.mxu0 0.0
        %3692 = vmatpush2.msra.mxu0 0.0
        %3693 = vmatprep.subr.mxu0 0.0
        %3694 = vmatpush2.msra.mxu0 0.0
        %3695 = vmatprep.mubr.f32.mxu0 0.0
        %3696 = vmatmul.mubr.f32.gmra.mxu0 %v3629
        %v3697 = vpop.f32.mrf.mxu0
        %v3698 = vadd.f32 0.0, %v3697
        %v3699 = vpop.f32.mrf.mxu0
        %3700 = vdwg.mxu0
        %v3702 = vsel %vm2357, %v3552, 0
        %3704 = vmatprep.subr.mxu0 0.0
        %3705 = vmatpush1.msra.mxu0 0.0
        %3706 = vmatprep.subr.mxu0 0.0
        %3707 = vmatpush1.msra.mxu0 0.0
        %3708 = vmatprep.subr.mxu0 0.0
        %3709 = vmatpush1.msra.mxu0 0.0
        %3710 = vmatprep.subr.mxu0 0.0
        %3711 = vmatpush1.msra.mxu0 0.0
        %3712 = vmatprep.subr.mxu0 0.0
        %3713 = vmatpush1.msra.mxu0 0.0
        %3714 = vmatprep.subr.mxu0 0.0
        %3715 = vmatpush1.msra.mxu0 0.0
        %3716 = vmatprep.subr.mxu0 0.0
        %3717 = vmatpush1.msra.mxu0 0.0
        %3718 = vmatprep.subr.mxu0 0.0
        %3719 = vmatpush1.msra.mxu0 0.0
        %3720 = vmatprep.subr.mxu0 0.0
        %3721 = vmatpush1.msra.mxu0 0.0
        %3722 = vmatprep.subr.mxu0 0.0
        %3723 = vmatpush1.msra.mxu0 0.0
        %3724 = vmatprep.subr.mxu0 0.0
        %3725 = vmatpush1.msra.mxu0 0.0
        %3726 = vmatprep.subr.mxu0 0.0
        %3727 = vmatpush1.msra.mxu0 0.0
        %3728 = vmatprep.subr.mxu0 0.0
        %3729 = vmatpush1.msra.mxu0 0.0
        %3730 = vmatprep.subr.mxu0 0.0
        %3731 = vmatpush1.msra.mxu0 0.0
        %3732 = vmatprep.subr.mxu0 0.0
        %3733 = vmatpush1.msra.mxu0 %v3185
        %3734 = vmatprep.subr.mxu0 0.0
        %3735 = vmatpush1.msra.mxu0 %v3117
        %3736 = vmatprep.subr.mxu0 0.0
        %3737 = vmatpush2.msra.mxu0 0.0
        %3738 = vmatprep.subr.mxu0 0.0
        %3739 = vmatpush2.msra.mxu0 0.0
        %3740 = vmatprep.subr.mxu0 0.0
        %3741 = vmatpush2.msra.mxu0 0.0
        %3742 = vmatprep.subr.mxu0 0.0
        %3743 = vmatpush2.msra.mxu0 0.0
        %3744 = vmatprep.subr.mxu0 0.0
        %3745 = vmatpush2.msra.mxu0 0.0
        %3746 = vmatprep.subr.mxu0 0.0
        %3747 = vmatpush2.msra.mxu0 0.0
        %3748 = vmatprep.subr.mxu0 0.0
        %3749 = vmatpush2.msra.mxu0 0.0
        %3750 = vmatprep.subr.mxu0 0.0
        %3751 = vmatpush2.msra.mxu0 0.0
        %3752 = vmatprep.subr.mxu0 0.0
        %3753 = vmatpush2.msra.mxu0 0.0
        %3754 = vmatprep.subr.mxu0 0.0
        %3755 = vmatpush2.msra.mxu0 0.0
        %3756 = vmatprep.subr.mxu0 0.0
        %3757 = vmatpush2.msra.mxu0 0.0
        %3758 = vmatprep.subr.mxu0 0.0
        %3759 = vmatpush2.msra.mxu0 0.0
        %3760 = vmatprep.subr.mxu0 0.0
        %3761 = vmatpush2.msra.mxu0 0.0
        %3762 = vmatprep.subr.mxu0 0.0
        %3763 = vmatpush2.msra.mxu0 0.0
        %3764 = vmatprep.subr.mxu0 0.0
        %3765 = vmatpush2.msra.mxu0 0.0
        %3766 = vmatprep.subr.mxu0 0.0
        %3767 = vmatpush2.msra.mxu0 0.0
        %3768 = vmatprep.mubr.f32.mxu0 0.0
        %3769 = vmatmul.mubr.f32.gmra.mxu0 %v3702
        %v3770 = vpop.f32.mrf.mxu0
        %v3771 = vadd.f32 0.0, %v3770
        %v3772 = vpop.f32.mrf.mxu0
        %3773 = vdwg.mxu0
        %v3775 = vsel %vm2357, %v3554, 0
        %3777 = vmatprep.subr.mxu0 0.0
        %3778 = vmatpush1.msra.mxu0 0.0
        %3779 = vmatprep.subr.mxu0 0.0
        %3780 = vmatpush1.msra.mxu0 0.0
        %3781 = vmatprep.subr.mxu0 0.0
        %3782 = vmatpush1.msra.mxu0 0.0
        %3783 = vmatprep.subr.mxu0 0.0
        %3784 = vmatpush1.msra.mxu0 0.0
        %3785 = vmatprep.subr.mxu0 0.0
        %3786 = vmatpush1.msra.mxu0 0.0
        %3787 = vmatprep.subr.mxu0 0.0
        %3788 = vmatpush1.msra.mxu0 0.0
        %3789 = vmatprep.subr.mxu0 0.0
        %3790 = vmatpush1.msra.mxu0 0.0
        %3791 = vmatprep.subr.mxu0 0.0
        %3792 = vmatpush1.msra.mxu0 0.0
        %3793 = vmatprep.subr.mxu0 0.0
        %3794 = vmatpush1.msra.mxu0 0.0
        %3795 = vmatprep.subr.mxu0 0.0
        %3796 = vmatpush1.msra.mxu0 0.0
        %3797 = vmatprep.subr.mxu0 0.0
        %3798 = vmatpush1.msra.mxu0 0.0
        %3799 = vmatprep.subr.mxu0 0.0
        %3800 = vmatpush1.msra.mxu0 0.0
        %3801 = vmatprep.subr.mxu0 0.0
        %3802 = vmatpush1.msra.mxu0 0.0
        %3803 = vmatprep.subr.mxu0 0.0
        %3804 = vmatpush1.msra.mxu0 0.0
        %3805 = vmatprep.subr.mxu0 0.0
        %3806 = vmatpush1.msra.mxu0 %v3186
        %3807 = vmatprep.subr.mxu0 0.0
        %3808 = vmatpush1.msra.mxu0 %v3118
        %3809 = vmatprep.subr.mxu0 0.0
        %3810 = vmatpush2.msra.mxu0 0.0
        %3811 = vmatprep.subr.mxu0 0.0
        %3812 = vmatpush2.msra.mxu0 0.0
        %3813 = vmatprep.subr.mxu0 0.0
        %3814 = vmatpush2.msra.mxu0 0.0
        %3815 = vmatprep.subr.mxu0 0.0
        %3816 = vmatpush2.msra.mxu0 0.0
        %3817 = vmatprep.subr.mxu0 0.0
        %3818 = vmatpush2.msra.mxu0 0.0
        %3819 = vmatprep.subr.mxu0 0.0
        %3820 = vmatpush2.msra.mxu0 0.0
        %3821 = vmatprep.subr.mxu0 0.0
        %3822 = vmatpush2.msra.mxu0 0.0
        %3823 = vmatprep.subr.mxu0 0.0
        %3824 = vmatpush2.msra.mxu0 0.0
        %3825 = vmatprep.subr.mxu0 0.0
        %3826 = vmatpush2.msra.mxu0 0.0
        %3827 = vmatprep.subr.mxu0 0.0
        %3828 = vmatpush2.msra.mxu0 0.0
        %3829 = vmatprep.subr.mxu0 0.0
        %3830 = vmatpush2.msra.mxu0 0.0
        %3831 = vmatprep.subr.mxu0 0.0
        %3832 = vmatpush2.msra.mxu0 0.0
        %3833 = vmatprep.subr.mxu0 0.0
        %3834 = vmatpush2.msra.mxu0 0.0
        %3835 = vmatprep.subr.mxu0 0.0
        %3836 = vmatpush2.msra.mxu0 0.0
        %3837 = vmatprep.subr.mxu0 0.0
        %3838 = vmatpush2.msra.mxu0 0.0
        %3839 = vmatprep.subr.mxu0 0.0
        %3840 = vmatpush2.msra.mxu0 0.0
        %3841 = vmatprep.mubr.f32.mxu0 0.0
        %3842 = vmatmul.mubr.f32.gmra.mxu0 %v3775
        %v3843 = vpop.f32.mrf.mxu0
        %v3844 = vadd.f32 0.0, %v3843
        %v3845 = vpop.f32.mrf.mxu0
        %3846 = vdwg.mxu0
        %v3847 = vcombine.low %v3625, %v3771
        %v3848 = vcombine.high %v3625, %v3771
        %v3850 = vunpack.c.l.s4 1983009808
        %v3851 = vunpack.c.0.s8 %v3850
        %v3852 = vlaneseq
        %v3853 = vshrl.u32 %v3852, 7
        %v3854 = vsub.s32 %v3851, %v3853
        %v3855 = vrot.slane %v3847, %v3854
        %v3857 = vunpack.c.l.s4 1983009808
        %v3858 = vunpack.c.0.s8 %v3857
        %v3859 = vlaneseq
        %v3860 = vshrl.u32 %v3859, 7
        %v3861 = vsub.s32 %v3858, %v3860
        %v3862 = vrot.slane %v3848, %v3861
        %v3863 = vcombine.low %v3698, %v3844
        %v3864 = vcombine.high %v3698, %v3844
        %v3866 = vunpack.c.l.s4 1983009808
        %v3867 = vunpack.c.0.s8 %v3866
        %v3868 = vlaneseq
        %v3869 = vshrl.u32 %v3868, 7
        %v3870 = vsub.s32 %v3867, %v3869
        %v3871 = vrot.slane %v3863, %v3870
        %v3873 = vunpack.c.l.s4 1983009808
        %v3874 = vunpack.c.0.s8 %v3873
        %v3875 = vlaneseq
        %v3876 = vshrl.u32 %v3875, 7
        %v3877 = vsub.s32 %v3874, %v3876
        %v3878 = vrot.slane %v3864, %v3877
        %v3879 = vcombine.low %v3855, %v3871
        %v3880 = vcombine.high %v3855, %v3871
        %v3882 = vunpack.c.l.s4 1934713408
        %v3883 = vunpack.c.0.s8 %v3882
        %v3884 = vlaneseq
        %v3885 = vshrl.u32 %v3884, 7
        %v3886 = vsub.s32 %v3883, %v3885
        %v3887 = vrot.slane %v3879, %v3886
        %v3889 = vunpack.c.l.s4 1934713408
        %v3890 = vunpack.c.0.s8 %v3889
        %v3891 = vlaneseq
        %v3892 = vshrl.u32 %v3891, 7
        %v3893 = vsub.s32 %v3890, %v3892
        %v3894 = vrot.slane %v3880, %v3893
        %v3895 = vcombine.low %v3862, %v3878
        %v3896 = vcombine.high %v3862, %v3878
        %v3898 = vunpack.c.l.s4 1934713408
        %v3899 = vunpack.c.0.s8 %v3898
        %v3900 = vlaneseq
        %v3901 = vshrl.u32 %v3900, 7
        %v3902 = vsub.s32 %v3899, %v3901
        %v3903 = vrot.slane %v3895, %v3902
        %v3905 = vunpack.c.l.s4 1934713408
        %v3906 = vunpack.c.0.s8 %v3905
        %v3907 = vlaneseq
        %v3908 = vshrl.u32 %v3907, 7
        %v3909 = vsub.s32 %v3906, %v3908
        %v3910 = vrot.slane %v3896, %v3909
        %v3911 = vcombine.high %v3887, 0.0
        %v3912 = vcombine.high %v3894, 0.0
        %v3913 = vcombine.high %v3903, 0.0
        %v3914 = vcombine.high %v3910, 0.0
        %v3915 = vcombine.low %v3887, %v3894
        %v3917 = vunpack.c.l.s4 1983009808
        %v3918 = vunpack.c.0.s8 %v3917
        %v3919 = vlaneseq
        %v3920 = vshrl.u32 %v3919, 7
        %v3921 = vsub.s32 %v3918, %v3920
        %v3922 = vrot.slane %v3915, %v3921
        %v3923 = vcombine.low %v3911, %v3912
        %v3925 = vunpack.c.l.s4 1983009808
        %v3926 = vunpack.c.0.s8 %v3925
        %v3927 = vlaneseq
        %v3928 = vshrl.u32 %v3927, 7
        %v3929 = vsub.s32 %v3926, %v3928
        %v3930 = vrot.slane %v3923, %v3929
        %v3931 = vcombine.low %v3903, %v3910
        %v3933 = vunpack.c.l.s4 1983009808
        %v3934 = vunpack.c.0.s8 %v3933
        %v3935 = vlaneseq
        %v3936 = vshrl.u32 %v3935, 7
        %v3937 = vsub.s32 %v3934, %v3936
        %v3938 = vrot.slane %v3931, %v3937
        %v3939 = vcombine.low %v3913, %v3914
        %v3941 = vunpack.c.l.s4 1983009808
        %v3942 = vunpack.c.0.s8 %v3941
        %v3943 = vlaneseq
        %v3944 = vshrl.u32 %v3943, 7
        %v3945 = vsub.s32 %v3942, %v3944
        %v3946 = vrot.slane %v3939, %v3945
        %v3947 = vcombine.low %v3922, %v3930
        %v3948 = vcombine.high %v3922, %v3930
        %v3950 = vunpack.c.l.s4 1934713408
        %v3951 = vunpack.c.0.s8 %v3950
        %v3952 = vlaneseq
        %v3953 = vshrl.u32 %v3952, 7
        %v3954 = vsub.s32 %v3951, %v3953
        %v3955 = vrot.slane %v3947, %v3954
        %v3957 = vunpack.c.l.s4 1934713408
        %v3958 = vunpack.c.0.s8 %v3957
        %v3959 = vlaneseq
        %v3960 = vshrl.u32 %v3959, 7
        %v3961 = vsub.s32 %v3958, %v3960
        %v3962 = vrot.slane %v3948, %v3961
        %v3963 = vcombine.low %v3938, %v3946
        %v3964 = vcombine.high %v3938, %v3946
        %v3966 = vunpack.c.l.s4 1934713408
        %v3967 = vunpack.c.0.s8 %v3966
        %v3968 = vlaneseq
        %v3969 = vshrl.u32 %v3968, 7
        %v3970 = vsub.s32 %v3967, %v3969
        %v3971 = vrot.slane %v3963, %v3970
        %v3973 = vunpack.c.l.s4 1934713408
        %v3974 = vunpack.c.0.s8 %v3973
        %v3975 = vlaneseq
        %v3976 = vshrl.u32 %v3975, 7
        %v3977 = vsub.s32 %v3974, %v3976
        %v3978 = vrot.slane %v3964, %v3977
        %v3979 = vcombine.low %v3955, %v3971
        %v3980 = vcombine.high %v3955, %v3971
        %v3981 = vcombine.low %v3962, %v3978
        %v3982 = vcombine.high %v3962, %v3978
        %3984 = vrot.lane.b32.xlu0 %v3980, 8
        %v3985 = vpop.permute.xlu0 %3984
        %3988 = vrot.lane.b32.xlu0 %v3981, 16
        %v3989 = vpop.permute.xlu0 %3988
        %3992 = vrot.lane.b32.xlu0 %v3982, 24
        %v3993 = vpop.permute.xlu0 %3992
        %v3995 = vsel %vm2040, %v3979, %v3985
        %v3996 = vsel %vm2357, %v3995, %v3989
        %v3997 = vsel %vm2844, %v3996, %v3993
        %3998 = vst.msk [vmem:[#allocation2 + $0x8] sm:$0xff] %vm613, %v3997
        %v3999 = vld [vmem:[#allocation2] sm:$0xff]
        %v4000 = vld [vmem:[#allocation2 + $0x8] sm:$0xff]
        %v4001 = vld [vmem:[#allocation14] sm:$0xff]
        %v4002 = vld [vmem:[#allocation14 + $0x8] sm:$0xff]
        %v4003 = vld [vmem:[#allocation14 + $0x10] sm:$0xff]
        %v4004 = vld [vmem:[#allocation14 + $0x18] sm:$0xff]
        %v4005 = vld [vmem:[%s11] sm:$0x1]
        %v4007 = vlaneseq
        %v4008 = vshrl.u32 %v4007, 7
        %v4009 = vsub.s32 0, %v4008
        %v4010 = vrot.slane %v4005, %v4009
        %v4013 = vsel %vm613, %v3999, 0
        %v4016 = vsel %vm613, %v4000, 0
        %4018 = vmatprep.subr.mxu0 0.0
        %4019 = vmatpush1.msra.mxu0 0.0
        %4020 = vmatprep.subr.mxu0 0.0
        %4021 = vmatpush1.msra.mxu0 0.0
        %4022 = vmatprep.subr.mxu0 0.0
        %4023 = vmatpush1.msra.mxu0 0.0
        %4024 = vmatprep.subr.mxu0 0.0
        %4025 = vmatpush1.msra.mxu0 0.0
        %4026 = vmatprep.subr.mxu0 0.0
        %4027 = vmatpush1.msra.mxu0 0.0
        %4028 = vmatprep.subr.mxu0 0.0
        %4029 = vmatpush1.msra.mxu0 0.0
        %4030 = vmatprep.subr.mxu0 0.0
        %4031 = vmatpush1.msra.mxu0 0.0
        %4032 = vmatprep.subr.mxu0 0.0
        %4033 = vmatpush1.msra.mxu0 0.0
        %4034 = vmatprep.subr.mxu0 0.0
        %4035 = vmatpush1.msra.mxu0 0.0
        %4036 = vmatprep.subr.mxu0 0.0
        %4037 = vmatpush1.msra.mxu0 0.0
        %4038 = vmatprep.subr.mxu0 0.0
        %4039 = vmatpush1.msra.mxu0 0.0
        %4040 = vmatprep.subr.mxu0 0.0
        %4041 = vmatpush1.msra.mxu0 0.0
        %4042 = vmatprep.subr.mxu0 0.0
        %4043 = vmatpush1.msra.mxu0 %v4004
        %4044 = vmatprep.subr.mxu0 0.0
        %4045 = vmatpush1.msra.mxu0 %v4003
        %4046 = vmatprep.subr.mxu0 0.0
        %4047 = vmatpush1.msra.mxu0 %v4002
        %4048 = vmatprep.subr.mxu0 0.0
        %4049 = vmatpush1.msra.mxu0 %v4001
        %4050 = vmatprep.subr.mxu0 0.0
        %4051 = vmatpush2.msra.mxu0 0.0
        %4052 = vmatprep.subr.mxu0 0.0
        %4053 = vmatpush2.msra.mxu0 0.0
        %4054 = vmatprep.subr.mxu0 0.0
        %4055 = vmatpush2.msra.mxu0 0.0
        %4056 = vmatprep.subr.mxu0 0.0
        %4057 = vmatpush2.msra.mxu0 0.0
        %4058 = vmatprep.subr.mxu0 0.0
        %4059 = vmatpush2.msra.mxu0 0.0
        %4060 = vmatprep.subr.mxu0 0.0
        %4061 = vmatpush2.msra.mxu0 0.0
        %4062 = vmatprep.subr.mxu0 0.0
        %4063 = vmatpush2.msra.mxu0 0.0
        %4064 = vmatprep.subr.mxu0 0.0
        %4065 = vmatpush2.msra.mxu0 0.0
        %4066 = vmatprep.subr.mxu0 0.0
        %4067 = vmatpush2.msra.mxu0 0.0
        %4068 = vmatprep.subr.mxu0 0.0
        %4069 = vmatpush2.msra.mxu0 0.0
        %4070 = vmatprep.subr.mxu0 0.0
        %4071 = vmatpush2.msra.mxu0 0.0
        %4072 = vmatprep.subr.mxu0 0.0
        %4073 = vmatpush2.msra.mxu0 0.0
        %4074 = vmatprep.subr.mxu0 0.0
        %4075 = vmatpush2.msra.mxu0 0.0
        %4076 = vmatprep.subr.mxu0 0.0
        %4077 = vmatpush2.msra.mxu0 0.0
        %4078 = vmatprep.subr.mxu0 0.0
        %4079 = vmatpush2.msra.mxu0 0.0
        %4080 = vmatprep.subr.mxu0 0.0
        %4081 = vmatpush2.msra.mxu0 0.0
        %4082 = vmatprep.mubr.f32.mxu0 0.0
        %4083 = vmatmul.mubr.f32.gmra.mxu0 %v4013
        %v4084 = vpop.f32.mrf.mxu0
        %v4085 = vadd.f32 %v4010, %v4084
        %v4086 = vpop.f32.mrf.mxu0
        %4087 = vmatprep.mubr.f32.mxu0 0.0
        %4088 = vmatmul.mubr.f32.gmra.mxu0 %v4016
        %v4089 = vpop.f32.mrf.mxu0
        %v4090 = vadd.f32 %v4010, %v4089
        %v4091 = vpop.f32.mrf.mxu0
        %4092 = vdwg.mxu0
        %4093 = vst.msk [vmem:[%s582] sm:$0xff] %vm613, %v4085
        %4094 = vst.msk [vmem:[%s582 + $0x8] sm:$0xff] %vm613, %v4090
        %s4095 = sand.u32 %s314, 1
        %s4096 = scalar_lea.sflag [#allocation5], %s4095
        %s4097 = sand.u32 %s314, 1
        %s4098 = smul.addr %s4097, 16
        %s4099 = scalar_lea.vmem [#allocation15], %s4098
        // Predicated region
        $region97: #{tpu_custom_call.1} parent=67 // pred_check
          %p4100 = pneg %p324
        $region98: #{tpu_custom_call.1} parent=67 // pred_check_branch
          %4102 = sbr.rel (%p4100) target = $region100
        $region99: #{tpu_custom_call.1} parent=67 // pred_region
          %s4103 = smul.u32 2, %s34
          %s4105 = ssub.s32 256, 256
          %4106 = vsyncadd %s4096, %s4105
          %s4107 = smul.addr %s4103, 128
          %s4108 = scalar_lea.hbm %s12, %s4107
          %s4109 = sshll.u32 %s4099, 4
          %s4110 = int_to_ptr.vmem [resolvable:$true] %s4109
          %4115 = dma.vmem_to_hbm [thread:$0]  %s4110, 256, %s4108, %s4096, 128, 128, 8
        $region100: #{tpu_custom_call.1} parent=67 // pred_fallthru
          _
      $region68: #{tpu_custom_call.1} parent=5 // pred_fallthru
        _
      %p4116 = scmp.le.s32.totalorder 2, %s29
      // Predicated region
      $region101: #{tpu_custom_call.1} parent=5 // pred_check
        %p4117 = pneg %p4116
      $region102: #{tpu_custom_call.1} parent=5 // pred_check_branch
        %4119 = sbr.rel (%p4117) target = $region104
      $region103: #{tpu_custom_call.1} parent=5 // pred_region
        %s4120 = ssub.s32 %s29, 2
        // Predicated region
        $region105: #{tpu_custom_call.1} parent=103 // pred_check
          %p4121 = pneg %p330
        $region106: #{tpu_custom_call.1} parent=103 // pred_check_branch
          %4123 = sbr.rel (%p4121) target = $region108
        $region107: #{tpu_custom_call.1} parent=103 // pred_region
          %s4124 = sand.u32 %s315, 1
          %s4125 = scalar_lea.sflag [#allocation5], %s4124
          %s4126 = sand.u32 %s315, 1
          %s4127 = smul.addr %s4126, 16
          %s4128 = scalar_lea.vmem [#allocation15], %s4127
          %4129 = dma.done %s4125, 256
        $region108: #{tpu_custom_call.1} parent=103 // pred_fallthru
          _
      $region104: #{tpu_custom_call.1} parent=5 // pred_fallthru
        _
    $region6: #{tpu_custom_call.1} parent=1 // loop_footer
      %s33 = sadd.s32 1, %s29
    $region7: #{tpu_custom_call.1} parent=1 // loop_footer_branch
      %28 = sbr.rel target = $region3
    $region8: #{tpu_custom_call.1} parent=1 // loop_exit
      _
    %4130 = vsyncpa [#allocation4], 1
    %s4131 = scalar_lea.sflag [#allocation4], 1
    %4132 = vsyncpa %s4131, 1
    %4133 = vsyncpa [#allocation7], 1
    %s4134 = scalar_lea.sflag [#allocation7], 1
    %4135 = vsyncpa %s4134, 1
    %4136 = vsyncpa [#allocation10], 1
    %4137 = vsyncpa [#allocation13], 1
    %4138 = vsyncpa [#allocation5], 1
    %s4139 = scalar_lea.sflag [#allocation5], 1
    %4140 = vsyncpa %s4139, 1

</llo_original>
